<compile_context>
chip_gen: v6e
topology: v6e:2x2x1
jax: 0.10.0
libtpu: 0.0.40
codegen_flags: <defaults>
</compile_context>

<pallas_src>
import functools

import jax
import jax.numpy as jnp
from jax import lax
from jax.experimental import pallas as pl
from jax.experimental.pallas import tpu as pltpu

# Model constants (from the PyTorch module)
FC1_DIM = 150
FC2_DIM = 200
FC3_DIM = 100
FC_OUT_1 = 35
HIDDEN_DIM = 25
IN_DIM = 12

# Lane-padded dims used inside the kernel
D1P = 256          # fc1 out 150  -> 256
D2P = 256          # fc2 out 200  -> 256
D3P = 128          # fc3 out 100  -> 128
HID_PAD = 32       # hidden  25   -> 32  (per gate)
GATE_PAD = 4 * HID_PAD   # fused i|f|g|o gates -> 128 lanes
D4P = 128          # head1 out 35 -> 128


def _tracker_kernel(x_ref, mx_ref, my_ref, mz_ref,
                    w1, b1, w2, b2, w3, b3,
                    wih, whh, bg,
                    w4, b4, w5, b5,
                    out_ref,
                    gx_scr, lstm_scr,
                    *, T, BP, HP):
    relu = lambda v: jnp.maximum(v, 0.0)
    f32 = jnp.float32

    # ---- MLP trunk (dropout = identity at inference), lane-padded weights ----
    x = x_ref[...]                                                  # (T*BP, 12)
    h1 = relu(jnp.dot(x, w1[...], preferred_element_type=f32) + b1[...])
    h2 = relu(jnp.dot(h1, w2[...], preferred_element_type=f32) + b2[...])
    h3 = relu(jnp.dot(h2, w3[...], preferred_element_type=f32) + b3[...])

    # ---- hoisted LSTM input projection for ALL timesteps (one MXU call) ----
    # gates_x = x3 @ Wih_fused + (bih + bhh), shape (T*BP, 128)
    gx_scr[...] = jnp.dot(h3, wih[...], preferred_element_type=f32) + bg[...]

    # ---- LSTM recurrence: one fused (BP,32)x(32,128) matmul per step ----
    # Padded gate columns have zero weights/bias -> sigmoid(0)=0.5, tanh(0)=0,
    # so padded hidden/cell lanes stay exactly zero given zero initial state.
    whh_m = whh[...]                                                # (32, 128)

    def step(t, carry):
        h, c = carry
        row = pl.multiple_of(t * BP, BP)
        gates = gx_scr[pl.ds(row, BP), :] + jnp.dot(
            h, whh_m, preferred_element_type=f32)                   # (BP, 128)
        i_g = jax.nn.sigmoid(gates[:, 0 * HP:1 * HP])
        f_g = jax.nn.sigmoid(gates[:, 1 * HP:2 * HP])
        g_g = jnp.tanh(gates[:, 2 * HP:3 * HP])
        o_g = jax.nn.sigmoid(gates[:, 3 * HP:4 * HP])
        c_new = f_g * c + i_g * g_g
        h_new = o_g * jnp.tanh(c_new)
        lstm_scr[pl.ds(row, BP), :] = h_new
        return h_new, c_new

    zeros = jnp.zeros((BP, HP), f32)
    lax.fori_loop(0, T, step, (zeros, zeros), unroll=True)

    # ---- Output head + quaternion normalization (rsqrt -> EUP) ----
    lo = lstm_scr[...]                                              # (T*BP, 32)
    h4 = relu(jnp.dot(lo, w4[...], preferred_element_type=f32) + b4[...])
    q = jnp.dot(h4, w5[...], preferred_element_type=f32) + b5[...]  # (T*BP, 4)
    q = q * lax.rsqrt(jnp.sum(q * q, axis=1, keepdims=True))
    out_ref[:, 0:4] = q

    # ---- qrot vectorized across the 4 markers (lane axis = marker index) ----
    qw, qx, qy, qz = q[:, 0:1], q[:, 1:2], q[:, 2:3], q[:, 3:4]
    vx, vy, vz = mx_ref[...], my_ref[...], mz_ref[...]              # (T*BP, 4)
    uvx = qy * vz - qz * vy
    uvy = qz * vx - qx * vz
    uvz = qx * vy - qy * vx
    uuvx = qy * uvz - qz * uvy
    uuvy = qz * uvx - qx * uvz
    uuvz = qx * uvy - qy * uvx
    out_ref[:, 4:8] = vx + 2.0 * (qw * uvx + uuvx)
    out_ref[:, 8:12] = vy + 2.0 * (qw * uvy + uuvy)
    out_ref[:, 12:16] = vz + 2.0 * (qw * uvz + uuvz)


def pack_params(params):
    """Pre-transpose / pad / fuse all weights ONCE (outside the hot call path)."""
    H, HP = HIDDEN_DIM, HID_PAD
    W1, b1 = params["fc1"]
    W2, b2 = params["fc2"]
    W3, b3 = params["fc3"]
    W4, b4 = params["hidden2quat1"]
    W5, b5 = params["hidden2quat2"]
    Wih, Whh, bih, bhh = params["lstm"]

    def pad2(a, shape):
        return jnp.zeros(shape, jnp.float32).at[:a.shape[0], :a.shape[1]].set(a)

    def padrow(v, n):
        return jnp.zeros((1, n), jnp.float32).at[0, :v.shape[0]].set(v)

    w1p = pad2(W1.T, (IN_DIM, D1P)); b1p = padrow(b1, D1P)
    w2p = pad2(W2.T, (D1P, D2P));    b2p = padrow(b2, D2P)
    w3p = pad2(W3.T, (D2P, D3P));    b3p = padrow(b3, D3P)

    wih_p = jnp.zeros((D3P, GATE_PAD), jnp.float32)
    whh_p = jnp.zeros((HID_PAD, GATE_PAD), jnp.float32)
    bg_p = jnp.zeros((1, GATE_PAD), jnp.float32)
    for k in range(4):  # PyTorch gate order: i, f, g, o
        wih_k = Wih[k * H:(k + 1) * H, :].T                         # (100, 25)
        whh_k = Whh[k * H:(k + 1) * H, :].T                         # (25, 25)
        b_k = bih[k * H:(k + 1) * H] + bhh[k * H:(k + 1) * H]       # (25,)
        wih_p = wih_p.at[:FC3_DIM, k * HP:k * HP + H].set(wih_k)
        whh_p = whh_p.at[:H, k * HP:k * HP + H].set(whh_k)
        bg_p = bg_p.at[0, k * HP:k * HP + H].set(b_k)

    w4p = pad2(W4.T, (HID_PAD, D4P)); b4p = padrow(b4, D4P)
    w5p = pad2(W5.T, (D4P, 4));       b5p = b5.reshape(1, 4)

    return (w1p, b1p, w2p, b2p, w3p, b3p,
            wih_p, whh_p, bg_p,
            w4p, b4p, w5p, b5p)


def lstm_tracker_forward(detections, packed, markers):
    """detections: (T, B, 12); markers: list of 4 arrays (T, B, 3)."""
    T, B, _ = detections.shape
    BP = max(8, ((B + 7) // 8) * 8)       # sublane-aligned batch
    TBP = T * BP

    def pad_rows(a):                       # (T, B, X) -> (T*BP, X), zero pad
        return jnp.pad(a, ((0, 0), (0, BP - B), (0, 0))).reshape(TBP, a.shape[-1])

    x_p = pad_rows(detections)                                      # (T*BP, 12)
    mk = jnp.stack(markers, axis=-1)                                # (T, B, 3, 4)
    mx = pad_rows(mk[:, :, 0, :])                                   # (T*BP, 4)
    my = pad_rows(mk[:, :, 1, :])
    mz = pad_rows(mk[:, :, 2, :])

    args = (x_p, mx, my, mz) + tuple(packed)
    n_in = len(args)

    out = pl.pallas_call(
        functools.partial(_tracker_kernel, T=T, BP=BP, HP=HID_PAD),
        out_shape=jax.ShapeDtypeStruct((TBP, 16), jnp.float32),
        in_specs=[pl.BlockSpec(memory_space=pltpu.MemorySpace.VMEM)] * n_in,
        out_specs=pl.BlockSpec(memory_space=pltpu.MemorySpace.VMEM),
        scratch_shapes=[pltpu.VMEM((TBP, GATE_PAD), jnp.float32),   # gates_x
                        pltpu.VMEM((TBP, HID_PAD), jnp.float32)],   # lstm out
        compiler_params=pltpu.CompilerParams(
            vmem_limit_bytes=32 * 1024 * 1024),
    )(*args)

    out = out.reshape(T, BP, 16)[:, :B, :]
    quat = out[..., 0:4]
    # (T, B, 4 markers, 3 comps) -> (T, B, 12) in [m1x,m1y,m1z, m2x, ...] order
    rot = jnp.stack([out[..., 4:8], out[..., 8:12], out[..., 12:16]], axis=-1)
    rot = rot.reshape(T, B, 12)
    return quat, rot


def reference_forward(detections, params, markers):
    """Pure-JAX reference reproducing the PyTorch forward (eval mode)."""
    relu = lambda v: jnp.maximum(v, 0.0)
    W1, b1 = params["fc1"]
    W2, b2 = params["fc2"]
    W3, b3 = params["fc3"]
    W4, b4 = params["hidden2quat1"]
    W5, b5 = params["hidden2quat2"]
    Wih, Whh, bih, bhh = params["lstm"]
    H = HIDDEN_DIM

    x = relu(detections @ W1.T + b1)
    x = relu(x @ W2.T + b2)
    x = relu(x @ W3.T + b3)

    def step(carry, xt):
        h, c = carry
        gates = xt @ Wih.T + bih + h @ Whh.T + bhh
        i = jax.nn.sigmoid(gates[:, 0:H])
        f = jax.nn.sigmoid(gates[:, H:2 * H])
        g = jnp.tanh(gates[:, 2 * H:3 * H])
        o = jax.nn.sigmoid(gates[:, 3 * H:4 * H])
        c = f * c + i * g
        h = o * jnp.tanh(c)
        return (h, c), h

    B = detections.shape[1]
    init = (jnp.zeros((B, H), jnp.float32), jnp.zeros((B, H), jnp.float32))
    _, lstm_out = lax.scan(step, init, x)

    x = relu(lstm_out @ W4.T + b4)
    q = x @ W5.T + b5
    q = q / jnp.sqrt(jnp.sum(q ** 2, axis=2, keepdims=True))

    def qrot(q, v):
        qvec = q[..., 1:]
        uv = jnp.cross(qvec, v)
        uuv = jnp.cross(qvec, uv)
        return v + 2.0 * (q[..., :1] * uv + uuv)

    rot = jnp.concatenate([qrot(q, mk) for mk in markers], axis=2)
    return q, rot


if __name__ == "__main__":
    key = jax.random.PRNGKey(0)
    T, B = 8, 2  # small shapes; module implies (seq_len, batch, 12) input
    keys = jax.random.split(key, 16)

    def linear_init(kw, kb, fan_in, fan_out):
        bound = float(fan_in) ** -0.5
        W = jax.random.uniform(kw, (fan_out, fan_in), jnp.float32, -bound, bound)
        b = jax.random.uniform(kb, (fan_out,), jnp.float32, -bound, bound)
        return W, b

    params = {
        "fc1": linear_init(keys[0], keys[1], IN_DIM, FC1_DIM),
        "fc2": linear_init(keys[2], keys[3], FC1_DIM, FC2_DIM),
        "fc3": linear_init(keys[4], keys[5], FC2_DIM, FC3_DIM),
        "hidden2quat1": linear_init(keys[6], keys[7], HIDDEN_DIM, FC_OUT_1),
        "hidden2quat2": linear_init(keys[8], keys[9], FC_OUT_1, 4),
    }
    lbound = float(HIDDEN_DIM) ** -0.5
    lk = jax.random.split(keys[10], 4)
    params["lstm"] = (
        jax.random.uniform(lk[0], (4 * HIDDEN_DIM, FC3_DIM), jnp.float32, -lbound, lbound),
        jax.random.uniform(lk[1], (4 * HIDDEN_DIM, HIDDEN_DIM), jnp.float32, -lbound, lbound),
        jax.random.uniform(lk[2], (4 * HIDDEN_DIM,), jnp.float32, -lbound, lbound),
        jax.random.uniform(lk[3], (4 * HIDDEN_DIM,), jnp.float32, -lbound, lbound),
    )

    detections = jax.random.normal(keys[11], (T, B, IN_DIM), jnp.float32)
    # stacked_marker1..4: fixed marker positions broadcast to (T, B, 3)
    markers = [jax.random.normal(keys[12 + i], (T, B, 3), jnp.float32)
               for i in range(4)]

    packed = pack_params(params)                       # one-time weight packing
    quat, rot = lstm_tracker_forward(detections, packed, markers)
    quat, rot = jax.block_until_ready((quat, rot))

    q_ref, r_ref = reference_forward(detections, params, markers)
    assert quat.shape == (T, B, 4) and rot.shape == (T, B, 12)
    assert jnp.allclose(quat, q_ref, atol=1e-4, rtol=1e-4)
    assert jnp.allclose(rot, r_ref, atol=1e-4, rtol=1e-4)
    print("KERNEL_OK")
</pallas_src>

<mosaic_0001>
module attributes {stable_mosaic.version = 11 : i64} {
  func.func @_tracker_kernel(%arg0: memref<64x12xf32, #tpu.memory_space<vmem>>, %arg1: memref<64x4xf32, #tpu.memory_space<vmem>>, %arg2: memref<64x4xf32, #tpu.memory_space<vmem>>, %arg3: memref<64x4xf32, #tpu.memory_space<vmem>>, %arg4: memref<12x256xf32, #tpu.memory_space<vmem>>, %arg5: memref<1x256xf32, #tpu.memory_space<vmem>>, %arg6: memref<256x256xf32, #tpu.memory_space<vmem>>, %arg7: memref<1x256xf32, #tpu.memory_space<vmem>>, %arg8: memref<256x128xf32, #tpu.memory_space<vmem>>, %arg9: memref<1x128xf32, #tpu.memory_space<vmem>>, %arg10: memref<128x128xf32, #tpu.memory_space<vmem>>, %arg11: memref<32x128xf32, #tpu.memory_space<vmem>>, %arg12: memref<1x128xf32, #tpu.memory_space<vmem>>, %arg13: memref<32x128xf32, #tpu.memory_space<vmem>>, %arg14: memref<1x128xf32, #tpu.memory_space<vmem>>, %arg15: memref<128x4xf32, #tpu.memory_space<vmem>>, %arg16: memref<1x4xf32, #tpu.memory_space<vmem>>, %arg17: memref<64x16xf32, #tpu.memory_space<vmem>>, %arg18: memref<64x128xf32, #tpu.memory_space<vmem>>, %arg19: memref<64x32xf32, #tpu.memory_space<vmem>>) attributes {dimension_semantics = [], scalar_prefetch = 0 : i64, scratch_operands = 2 : i64, tpu.core_type = #tpu.core_type<tc>} {
    %c0 = arith.constant 0 : index
    %c0_0 = arith.constant 0 : index
    %0 = vector.load %arg0[%c0, %c0_0] : memref<64x12xf32, #tpu.memory_space<vmem>>, vector<64x12xf32>
    %c0_1 = arith.constant 0 : index
    %c0_2 = arith.constant 0 : index
    %1 = vector.load %arg4[%c0_1, %c0_2] : memref<12x256xf32, #tpu.memory_space<vmem>>, vector<12x256xf32>
    %cst = arith.constant dense<0.000000e+00> : vector<64x256xf32>
    %2 = tpu.matmul %0, %1, %cst {dimension_numbers = #tpu.dot_dimension_numbers<[1], [0], [0], [1], [0, 0, 1, 1], [], []>} : vector<64x12xf32>, vector<12x256xf32>, vector<64x256xf32> -> vector<64x256xf32>
    %c0_3 = arith.constant 0 : index
    %c0_4 = arith.constant 0 : index
    %3 = vector.load %arg5[%c0_3, %c0_4] : memref<1x256xf32, #tpu.memory_space<vmem>>, vector<1x256xf32>
    %4 = vector.broadcast %3 : vector<1x256xf32> to vector<64x256xf32>
    %5 = arith.addf %2, %4 : vector<64x256xf32>
    %cst_5 = arith.constant 0.000000e+00 : f32
    %6 = vector.broadcast %cst_5 : f32 to vector<64x256xf32>
    %7 = arith.maximumf %5, %6 : vector<64x256xf32>
    %c0_6 = arith.constant 0 : index
    %c0_7 = arith.constant 0 : index
    %8 = vector.load %arg6[%c0_6, %c0_7] : memref<256x256xf32, #tpu.memory_space<vmem>>, vector<256x256xf32>
    %cst_8 = arith.constant dense<0.000000e+00> : vector<64x256xf32>
    %9 = tpu.matmul %7, %8, %cst_8 {dimension_numbers = #tpu.dot_dimension_numbers<[1], [0], [0], [1], [0, 0, 1, 1], [], []>} : vector<64x256xf32>, vector<256x256xf32>, vector<64x256xf32> -> vector<64x256xf32>
    %c0_9 = arith.constant 0 : index
    %c0_10 = arith.constant 0 : index
    %10 = vector.load %arg7[%c0_9, %c0_10] : memref<1x256xf32, #tpu.memory_space<vmem>>, vector<1x256xf32>
    %11 = vector.broadcast %10 : vector<1x256xf32> to vector<64x256xf32>
    %12 = arith.addf %9, %11 : vector<64x256xf32>
    %cst_11 = arith.constant 0.000000e+00 : f32
    %13 = vector.broadcast %cst_11 : f32 to vector<64x256xf32>
    %14 = arith.maximumf %12, %13 : vector<64x256xf32>
    %c0_12 = arith.constant 0 : index
    %c0_13 = arith.constant 0 : index
    %15 = vector.load %arg8[%c0_12, %c0_13] : memref<256x128xf32, #tpu.memory_space<vmem>>, vector<256x128xf32>
    %cst_14 = arith.constant dense<0.000000e+00> : vector<64x128xf32>
    %16 = tpu.matmul %14, %15, %cst_14 {dimension_numbers = #tpu.dot_dimension_numbers<[1], [0], [0], [1], [0, 0, 1, 1], [], []>} : vector<64x256xf32>, vector<256x128xf32>, vector<64x128xf32> -> vector<64x128xf32>
    %c0_15 = arith.constant 0 : index
    %c0_16 = arith.constant 0 : index
    %17 = vector.load %arg9[%c0_15, %c0_16] : memref<1x128xf32, #tpu.memory_space<vmem>>, vector<1x128xf32>
    %18 = vector.broadcast %17 : vector<1x128xf32> to vector<64x128xf32>
    %19 = arith.addf %16, %18 : vector<64x128xf32>
    %cst_17 = arith.constant 0.000000e+00 : f32
    %20 = vector.broadcast %cst_17 : f32 to vector<64x128xf32>
    %21 = arith.maximumf %19, %20 : vector<64x128xf32>
    %c0_18 = arith.constant 0 : index
    %c0_19 = arith.constant 0 : index
    %22 = vector.load %arg10[%c0_18, %c0_19] : memref<128x128xf32, #tpu.memory_space<vmem>>, vector<128x128xf32>
    %cst_20 = arith.constant dense<0.000000e+00> : vector<64x128xf32>
    %23 = tpu.matmul %21, %22, %cst_20 {dimension_numbers = #tpu.dot_dimension_numbers<[1], [0], [0], [1], [0, 0, 1, 1], [], []>} : vector<64x128xf32>, vector<128x128xf32>, vector<64x128xf32> -> vector<64x128xf32>
    %c0_21 = arith.constant 0 : index
    %c0_22 = arith.constant 0 : index
    %24 = vector.load %arg12[%c0_21, %c0_22] : memref<1x128xf32, #tpu.memory_space<vmem>>, vector<1x128xf32>
    %25 = vector.broadcast %24 : vector<1x128xf32> to vector<64x128xf32>
    %26 = arith.addf %23, %25 : vector<64x128xf32>
    %c0_23 = arith.constant 0 : index
    %c0_24 = arith.constant 0 : index
    %27 = vector.load %arg18[%c0_23, %c0_24] : memref<64x128xf32, #tpu.memory_space<vmem>>, vector<64x128xf32>
    tpu.vector_store %arg18[%c0_23, %c0_24], %26 {strides = array<i32>} : memref<64x128xf32, #tpu.memory_space<vmem>>, vector<64x128xf32>,
    %c0_25 = arith.constant 0 : index
    %c0_26 = arith.constant 0 : index
    %28 = vector.load %arg11[%c0_25, %c0_26] : memref<32x128xf32, #tpu.memory_space<vmem>>, vector<32x128xf32>
    %cst_27 = arith.constant 0.000000e+00 : f32
    %29 = vector.broadcast %cst_27 : f32 to vector<8x32xf32>
    %c0_i32 = arith.constant 0 : i32
    %c8_i32 = arith.constant 8 : i32
    %30 = arith.muli %c0_i32, %c8_i32 : i32
    %31 = tpu.assume_multiple %30, 8 : i32
    %32 = arith.index_cast %31 : i32 to index
    %c0_28 = arith.constant 0 : index
    %33 = vector.load %arg18[%32, %c0_28] : memref<64x128xf32, #tpu.memory_space<vmem>>, vector<8x128xf32>
    %cst_29 = arith.constant dense<0.000000e+00> : vector<8x128xf32>
    %34 = tpu.matmul %29, %28, %cst_29 {dimension_numbers = #tpu.dot_dimension_numbers<[1], [0], [0], [1], [0, 0, 1, 1], [], []>} : vector<8x32xf32>, vector<32x128xf32>, vector<8x128xf32> -> vector<8x128xf32>
    %35 = arith.addf %33, %34 : vector<8x128xf32>
    %36 = vector.extract_strided_slice %35 {offsets = [0, 0], sizes = [8, 32], strides = [1, 1]} : vector<8x128xf32> to vector<8x32xf32>
    %37 = arith.negf %36 : vector<8x32xf32>
    %38 = math.exp %37 : vector<8x32xf32>
    %cst_30 = arith.constant 1.000000e+00 : f32
    %39 = vector.broadcast %cst_30 : f32 to vector<8x32xf32>
    %40 = arith.addf %39, %38 : vector<8x32xf32>
    %41 = arith.divf %39, %40 : vector<8x32xf32>
    %42 = vector.extract_strided_slice %35 {offsets = [0, 32], sizes = [8, 32], strides = [1, 1]} : vector<8x128xf32> to vector<8x32xf32>
    %43 = arith.negf %42 : vector<8x32xf32>
    %44 = math.exp %43 : vector<8x32xf32>
    %cst_31 = arith.constant 1.000000e+00 : f32
    %45 = vector.broadcast %cst_31 : f32 to vector<8x32xf32>
    %46 = arith.addf %45, %44 : vector<8x32xf32>
    %47 = arith.divf %45, %46 : vector<8x32xf32>
    %48 = vector.extract_strided_slice %35 {offsets = [0, 64], sizes = [8, 32], strides = [1, 1]} : vector<8x128xf32> to vector<8x32xf32>
    %49 = math.tanh %48 : vector<8x32xf32>
    %50 = vector.extract_strided_slice %35 {offsets = [0, 96], sizes = [8, 32], strides = [1, 1]} : vector<8x128xf32> to vector<8x32xf32>
    %51 = arith.negf %50 : vector<8x32xf32>
    %52 = math.exp %51 : vector<8x32xf32>
    %cst_32 = arith.constant 1.000000e+00 : f32
    %53 = vector.broadcast %cst_32 : f32 to vector<8x32xf32>
    %54 = arith.addf %53, %52 : vector<8x32xf32>
    %55 = arith.divf %53, %54 : vector<8x32xf32>
    %56 = arith.mulf %47, %29 : vector<8x32xf32>
    %57 = arith.mulf %41, %49 : vector<8x32xf32>
    %58 = arith.addf %56, %57 : vector<8x32xf32>
    %59 = math.tanh %58 : vector<8x32xf32>
    %60 = arith.mulf %55, %59 : vector<8x32xf32>
    %61 = arith.index_cast %31 : i32 to index
    %c0_33 = arith.constant 0 : index
    %62 = vector.load %arg19[%61, %c0_33] : memref<64x32xf32, #tpu.memory_space<vmem>>, vector<8x32xf32>
    tpu.vector_store %arg19[%61, %c0_33], %60 {strides = array<i32>} : memref<64x32xf32, #tpu.memory_space<vmem>>, vector<8x32xf32>,
    %c1_i32 = arith.constant 1 : i32
    %c8_i32_34 = arith.constant 8 : i32
    %63 = arith.muli %c1_i32, %c8_i32_34 : i32
    %64 = tpu.assume_multiple %63, 8 : i32
    %65 = arith.index_cast %64 : i32 to index
    %c0_35 = arith.constant 0 : index
    %66 = vector.load %arg18[%65, %c0_35] : memref<64x128xf32, #tpu.memory_space<vmem>>, vector<8x128xf32>
    %cst_36 = arith.constant dense<0.000000e+00> : vector<8x128xf32>
    %67 = tpu.matmul %60, %28, %cst_36 {dimension_numbers = #tpu.dot_dimension_numbers<[1], [0], [0], [1], [0, 0, 1, 1], [], []>} : vector<8x32xf32>, vector<32x128xf32>, vector<8x128xf32> -> vector<8x128xf32>
    %68 = arith.addf %66, %67 : vector<8x128xf32>
    %69 = vector.extract_strided_slice %68 {offsets = [0, 0], sizes = [8, 32], strides = [1, 1]} : vector<8x128xf32> to vector<8x32xf32>
    %70 = arith.negf %69 : vector<8x32xf32>
    %71 = math.exp %70 : vector<8x32xf32>
    %cst_37 = arith.constant 1.000000e+00 : f32
    %72 = vector.broadcast %cst_37 : f32 to vector<8x32xf32>
    %73 = arith.addf %72, %71 : vector<8x32xf32>
    %74 = arith.divf %72, %73 : vector<8x32xf32>
    %75 = vector.extract_strided_slice %68 {offsets = [0, 32], sizes = [8, 32], strides = [1, 1]} : vector<8x128xf32> to vector<8x32xf32>
    %76 = arith.negf %75 : vector<8x32xf32>
    %77 = math.exp %76 : vector<8x32xf32>
    %cst_38 = arith.constant 1.000000e+00 : f32
    %78 = vector.broadcast %cst_38 : f32 to vector<8x32xf32>
    %79 = arith.addf %78, %77 : vector<8x32xf32>
    %80 = arith.divf %78, %79 : vector<8x32xf32>
    %81 = vector.extract_strided_slice %68 {offsets = [0, 64], sizes = [8, 32], strides = [1, 1]} : vector<8x128xf32> to vector<8x32xf32>
    %82 = math.tanh %81 : vector<8x32xf32>
    %83 = vector.extract_strided_slice %68 {offsets = [0, 96], sizes = [8, 32], strides = [1, 1]} : vector<8x128xf32> to vector<8x32xf32>
    %84 = arith.negf %83 : vector<8x32xf32>
    %85 = math.exp %84 : vector<8x32xf32>
    %cst_39 = arith.constant 1.000000e+00 : f32
    %86 = vector.broadcast %cst_39 : f32 to vector<8x32xf32>
    %87 = arith.addf %86, %85 : vector<8x32xf32>
    %88 = arith.divf %86, %87 : vector<8x32xf32>
    %89 = arith.mulf %80, %58 : vector<8x32xf32>
    %90 = arith.mulf %74, %82 : vector<8x32xf32>
    %91 = arith.addf %89, %90 : vector<8x32xf32>
    %92 = math.tanh %91 : vector<8x32xf32>
    %93 = arith.mulf %88, %92 : vector<8x32xf32>
    %94 = arith.index_cast %64 : i32 to index
    %c0_40 = arith.constant 0 : index
    %95 = vector.load %arg19[%94, %c0_40] : memref<64x32xf32, #tpu.memory_space<vmem>>, vector<8x32xf32>
    tpu.vector_store %arg19[%94, %c0_40], %93 {strides = array<i32>} : memref<64x32xf32, #tpu.memory_space<vmem>>, vector<8x32xf32>,
    %c2_i32 = arith.constant 2 : i32
    %c8_i32_41 = arith.constant 8 : i32
    %96 = arith.muli %c2_i32, %c8_i32_41 : i32
    %97 = tpu.assume_multiple %96, 8 : i32
    %98 = arith.index_cast %97 : i32 to index
    %c0_42 = arith.constant 0 : index
    %99 = vector.load %arg18[%98, %c0_42] : memref<64x128xf32, #tpu.memory_space<vmem>>, vector<8x128xf32>
    %cst_43 = arith.constant dense<0.000000e+00> : vector<8x128xf32>
    %100 = tpu.matmul %93, %28, %cst_43 {dimension_numbers = #tpu.dot_dimension_numbers<[1], [0], [0], [1], [0, 0, 1, 1], [], []>} : vector<8x32xf32>, vector<32x128xf32>, vector<8x128xf32> -> vector<8x128xf32>
    %101 = arith.addf %99, %100 : vector<8x128xf32>
    %102 = vector.extract_strided_slice %101 {offsets = [0, 0], sizes = [8, 32], strides = [1, 1]} : vector<8x128xf32> to vector<8x32xf32>
    %103 = arith.negf %102 : vector<8x32xf32>
    %104 = math.exp %103 : vector<8x32xf32>
    %cst_44 = arith.constant 1.000000e+00 : f32
    %105 = vector.broadcast %cst_44 : f32 to vector<8x32xf32>
    %106 = arith.addf %105, %104 : vector<8x32xf32>
    %107 = arith.divf %105, %106 : vector<8x32xf32>
    %108 = vector.extract_strided_slice %101 {offsets = [0, 32], sizes = [8, 32], strides = [1, 1]} : vector<8x128xf32> to vector<8x32xf32>
    %109 = arith.negf %108 : vector<8x32xf32>
    %110 = math.exp %109 : vector<8x32xf32>
    %cst_45 = arith.constant 1.000000e+00 : f32
    %111 = vector.broadcast %cst_45 : f32 to vector<8x32xf32>
    %112 = arith.addf %111, %110 : vector<8x32xf32>
    %113 = arith.divf %111, %112 : vector<8x32xf32>
    %114 = vector.extract_strided_slice %101 {offsets = [0, 64], sizes = [8, 32], strides = [1, 1]} : vector<8x128xf32> to vector<8x32xf32>
    %115 = math.tanh %114 : vector<8x32xf32>
    %116 = vector.extract_strided_slice %101 {offsets = [0, 96], sizes = [8, 32], strides = [1, 1]} : vector<8x128xf32> to vector<8x32xf32>
    %117 = arith.negf %116 : vector<8x32xf32>
    %118 = math.exp %117 : vector<8x32xf32>
    %cst_46 = arith.constant 1.000000e+00 : f32
    %119 = vector.broadcast %cst_46 : f32 to vector<8x32xf32>
    %120 = arith.addf %119, %118 : vector<8x32xf32>
    %121 = arith.divf %119, %120 : vector<8x32xf32>
    %122 = arith.mulf %113, %91 : vector<8x32xf32>
    %123 = arith.mulf %107, %115 : vector<8x32xf32>
    %124 = arith.addf %122, %123 : vector<8x32xf32>
    %125 = math.tanh %124 : vector<8x32xf32>
    %126 = arith.mulf %121, %125 : vector<8x32xf32>
    %127 = arith.index_cast %97 : i32 to index
    %c0_47 = arith.constant 0 : index
    %128 = vector.load %arg19[%127, %c0_47] : memref<64x32xf32, #tpu.memory_space<vmem>>, vector<8x32xf32>
    tpu.vector_store %arg19[%127, %c0_47], %126 {strides = array<i32>} : memref<64x32xf32, #tpu.memory_space<vmem>>, vector<8x32xf32>,
    %c3_i32 = arith.constant 3 : i32
    %c8_i32_48 = arith.constant 8 : i32
    %129 = arith.muli %c3_i32, %c8_i32_48 : i32
    %130 = tpu.assume_multiple %129, 8 : i32
    %131 = arith.index_cast %130 : i32 to index
    %c0_49 = arith.constant 0 : index
    %132 = vector.load %arg18[%131, %c0_49] : memref<64x128xf32, #tpu.memory_space<vmem>>, vector<8x128xf32>
    %cst_50 = arith.constant dense<0.000000e+00> : vector<8x128xf32>
    %133 = tpu.matmul %126, %28, %cst_50 {dimension_numbers = #tpu.dot_dimension_numbers<[1], [0], [0], [1], [0, 0, 1, 1], [], []>} : vector<8x32xf32>, vector<32x128xf32>, vector<8x128xf32> -> vector<8x128xf32>
    %134 = arith.addf %132, %133 : vector<8x128xf32>
    %135 = vector.extract_strided_slice %134 {offsets = [0, 0], sizes = [8, 32], strides = [1, 1]} : vector<8x128xf32> to vector<8x32xf32>
    %136 = arith.negf %135 : vector<8x32xf32>
    %137 = math.exp %136 : vector<8x32xf32>
    %cst_51 = arith.constant 1.000000e+00 : f32
    %138 = vector.broadcast %cst_51 : f32 to vector<8x32xf32>
    %139 = arith.addf %138, %137 : vector<8x32xf32>
    %140 = arith.divf %138, %139 : vector<8x32xf32>
    %141 = vector.extract_strided_slice %134 {offsets = [0, 32], sizes = [8, 32], strides = [1, 1]} : vector<8x128xf32> to vector<8x32xf32>
    %142 = arith.negf %141 : vector<8x32xf32>
    %143 = math.exp %142 : vector<8x32xf32>
    %cst_52 = arith.constant 1.000000e+00 : f32
    %144 = vector.broadcast %cst_52 : f32 to vector<8x32xf32>
    %145 = arith.addf %144, %143 : vector<8x32xf32>
    %146 = arith.divf %144, %145 : vector<8x32xf32>
    %147 = vector.extract_strided_slice %134 {offsets = [0, 64], sizes = [8, 32], strides = [1, 1]} : vector<8x128xf32> to vector<8x32xf32>
    %148 = math.tanh %147 : vector<8x32xf32>
    %149 = vector.extract_strided_slice %134 {offsets = [0, 96], sizes = [8, 32], strides = [1, 1]} : vector<8x128xf32> to vector<8x32xf32>
    %150 = arith.negf %149 : vector<8x32xf32>
    %151 = math.exp %150 : vector<8x32xf32>
    %cst_53 = arith.constant 1.000000e+00 : f32
    %152 = vector.broadcast %cst_53 : f32 to vector<8x32xf32>
    %153 = arith.addf %152, %151 : vector<8x32xf32>
    %154 = arith.divf %152, %153 : vector<8x32xf32>
    %155 = arith.mulf %146, %124 : vector<8x32xf32>
    %156 = arith.mulf %140, %148 : vector<8x32xf32>
    %157 = arith.addf %155, %156 : vector<8x32xf32>
    %158 = math.tanh %157 : vector<8x32xf32>
    %159 = arith.mulf %154, %158 : vector<8x32xf32>
    %160 = arith.index_cast %130 : i32 to index
    %c0_54 = arith.constant 0 : index
    %161 = vector.load %arg19[%160, %c0_54] : memref<64x32xf32, #tpu.memory_space<vmem>>, vector<8x32xf32>
    tpu.vector_store %arg19[%160, %c0_54], %159 {strides = array<i32>} : memref<64x32xf32, #tpu.memory_space<vmem>>, vector<8x32xf32>,
    %c4_i32 = arith.constant 4 : i32
    %c8_i32_55 = arith.constant 8 : i32
    %162 = arith.muli %c4_i32, %c8_i32_55 : i32
    %163 = tpu.assume_multiple %162, 8 : i32
    %164 = arith.index_cast %163 : i32 to index
    %c0_56 = arith.constant 0 : index
    %165 = vector.load %arg18[%164, %c0_56] : memref<64x128xf32, #tpu.memory_space<vmem>>, vector<8x128xf32>
    %cst_57 = arith.constant dense<0.000000e+00> : vector<8x128xf32>
    %166 = tpu.matmul %159, %28, %cst_57 {dimension_numbers = #tpu.dot_dimension_numbers<[1], [0], [0], [1], [0, 0, 1, 1], [], []>} : vector<8x32xf32>, vector<32x128xf32>, vector<8x128xf32> -> vector<8x128xf32>
    %167 = arith.addf %165, %166 : vector<8x128xf32>
    %168 = vector.extract_strided_slice %167 {offsets = [0, 0], sizes = [8, 32], strides = [1, 1]} : vector<8x128xf32> to vector<8x32xf32>
    %169 = arith.negf %168 : vector<8x32xf32>
    %170 = math.exp %169 : vector<8x32xf32>
    %cst_58 = arith.constant 1.000000e+00 : f32
    %171 = vector.broadcast %cst_58 : f32 to vector<8x32xf32>
    %172 = arith.addf %171, %170 : vector<8x32xf32>
    %173 = arith.divf %171, %172 : vector<8x32xf32>
    %174 = vector.extract_strided_slice %167 {offsets = [0, 32], sizes = [8, 32], strides = [1, 1]} : vector<8x128xf32> to vector<8x32xf32>
    %175 = arith.negf %174 : vector<8x32xf32>
    %176 = math.exp %175 : vector<8x32xf32>
    %cst_59 = arith.constant 1.000000e+00 : f32
    %177 = vector.broadcast %cst_59 : f32 to vector<8x32xf32>
    %178 = arith.addf %177, %176 : vector<8x32xf32>
    %179 = arith.divf %177, %178 : vector<8x32xf32>
    %180 = vector.extract_strided_slice %167 {offsets = [0, 64], sizes = [8, 32], strides = [1, 1]} : vector<8x128xf32> to vector<8x32xf32>
    %181 = math.tanh %180 : vector<8x32xf32>
    %182 = vector.extract_strided_slice %167 {offsets = [0, 96], sizes = [8, 32], strides = [1, 1]} : vector<8x128xf32> to vector<8x32xf32>
    %183 = arith.negf %182 : vector<8x32xf32>
    %184 = math.exp %183 : vector<8x32xf32>
    %cst_60 = arith.constant 1.000000e+00 : f32
    %185 = vector.broadcast %cst_60 : f32 to vector<8x32xf32>
    %186 = arith.addf %185, %184 : vector<8x32xf32>
    %187 = arith.divf %185, %186 : vector<8x32xf32>
    %188 = arith.mulf %179, %157 : vector<8x32xf32>
    %189 = arith.mulf %173, %181 : vector<8x32xf32>
    %190 = arith.addf %188, %189 : vector<8x32xf32>
    %191 = math.tanh %190 : vector<8x32xf32>
    %192 = arith.mulf %187, %191 : vector<8x32xf32>
    %193 = arith.index_cast %163 : i32 to index
    %c0_61 = arith.constant 0 : index
    %194 = vector.load %arg19[%193, %c0_61] : memref<64x32xf32, #tpu.memory_space<vmem>>, vector<8x32xf32>
    tpu.vector_store %arg19[%193, %c0_61], %192 {strides = array<i32>} : memref<64x32xf32, #tpu.memory_space<vmem>>, vector<8x32xf32>,
    %c5_i32 = arith.constant 5 : i32
    %c8_i32_62 = arith.constant 8 : i32
    %195 = arith.muli %c5_i32, %c8_i32_62 : i32
    %196 = tpu.assume_multiple %195, 8 : i32
    %197 = arith.index_cast %196 : i32 to index
    %c0_63 = arith.constant 0 : index
    %198 = vector.load %arg18[%197, %c0_63] : memref<64x128xf32, #tpu.memory_space<vmem>>, vector<8x128xf32>
    %cst_64 = arith.constant dense<0.000000e+00> : vector<8x128xf32>
    %199 = tpu.matmul %192, %28, %cst_64 {dimension_numbers = #tpu.dot_dimension_numbers<[1], [0], [0], [1], [0, 0, 1, 1], [], []>} : vector<8x32xf32>, vector<32x128xf32>, vector<8x128xf32> -> vector<8x128xf32>
    %200 = arith.addf %198, %199 : vector<8x128xf32>
    %201 = vector.extract_strided_slice %200 {offsets = [0, 0], sizes = [8, 32], strides = [1, 1]} : vector<8x128xf32> to vector<8x32xf32>
    %202 = arith.negf %201 : vector<8x32xf32>
    %203 = math.exp %202 : vector<8x32xf32>
    %cst_65 = arith.constant 1.000000e+00 : f32
    %204 = vector.broadcast %cst_65 : f32 to vector<8x32xf32>
    %205 = arith.addf %204, %203 : vector<8x32xf32>
    %206 = arith.divf %204, %205 : vector<8x32xf32>
    %207 = vector.extract_strided_slice %200 {offsets = [0, 32], sizes = [8, 32], strides = [1, 1]} : vector<8x128xf32> to vector<8x32xf32>
    %208 = arith.negf %207 : vector<8x32xf32>
    %209 = math.exp %208 : vector<8x32xf32>
    %cst_66 = arith.constant 1.000000e+00 : f32
    %210 = vector.broadcast %cst_66 : f32 to vector<8x32xf32>
    %211 = arith.addf %210, %209 : vector<8x32xf32>
    %212 = arith.divf %210, %211 : vector<8x32xf32>
    %213 = vector.extract_strided_slice %200 {offsets = [0, 64], sizes = [8, 32], strides = [1, 1]} : vector<8x128xf32> to vector<8x32xf32>
    %214 = math.tanh %213 : vector<8x32xf32>
    %215 = vector.extract_strided_slice %200 {offsets = [0, 96], sizes = [8, 32], strides = [1, 1]} : vector<8x128xf32> to vector<8x32xf32>
    %216 = arith.negf %215 : vector<8x32xf32>
    %217 = math.exp %216 : vector<8x32xf32>
    %cst_67 = arith.constant 1.000000e+00 : f32
    %218 = vector.broadcast %cst_67 : f32 to vector<8x32xf32>
    %219 = arith.addf %218, %217 : vector<8x32xf32>
    %220 = arith.divf %218, %219 : vector<8x32xf32>
    %221 = arith.mulf %212, %190 : vector<8x32xf32>
    %222 = arith.mulf %206, %214 : vector<8x32xf32>
    %223 = arith.addf %221, %222 : vector<8x32xf32>
    %224 = math.tanh %223 : vector<8x32xf32>
    %225 = arith.mulf %220, %224 : vector<8x32xf32>
    %226 = arith.index_cast %196 : i32 to index
    %c0_68 = arith.constant 0 : index
    %227 = vector.load %arg19[%226, %c0_68] : memref<64x32xf32, #tpu.memory_space<vmem>>, vector<8x32xf32>
    tpu.vector_store %arg19[%226, %c0_68], %225 {strides = array<i32>} : memref<64x32xf32, #tpu.memory_space<vmem>>, vector<8x32xf32>,
    %c6_i32 = arith.constant 6 : i32
    %c8_i32_69 = arith.constant 8 : i32
    %228 = arith.muli %c6_i32, %c8_i32_69 : i32
    %229 = tpu.assume_multiple %228, 8 : i32
    %230 = arith.index_cast %229 : i32 to index
    %c0_70 = arith.constant 0 : index
    %231 = vector.load %arg18[%230, %c0_70] : memref<64x128xf32, #tpu.memory_space<vmem>>, vector<8x128xf32>
    %cst_71 = arith.constant dense<0.000000e+00> : vector<8x128xf32>
    %232 = tpu.matmul %225, %28, %cst_71 {dimension_numbers = #tpu.dot_dimension_numbers<[1], [0], [0], [1], [0, 0, 1, 1], [], []>} : vector<8x32xf32>, vector<32x128xf32>, vector<8x128xf32> -> vector<8x128xf32>
    %233 = arith.addf %231, %232 : vector<8x128xf32>
    %234 = vector.extract_strided_slice %233 {offsets = [0, 0], sizes = [8, 32], strides = [1, 1]} : vector<8x128xf32> to vector<8x32xf32>
    %235 = arith.negf %234 : vector<8x32xf32>
    %236 = math.exp %235 : vector<8x32xf32>
    %cst_72 = arith.constant 1.000000e+00 : f32
    %237 = vector.broadcast %cst_72 : f32 to vector<8x32xf32>
    %238 = arith.addf %237, %236 : vector<8x32xf32>
    %239 = arith.divf %237, %238 : vector<8x32xf32>
    %240 = vector.extract_strided_slice %233 {offsets = [0, 32], sizes = [8, 32], strides = [1, 1]} : vector<8x128xf32> to vector<8x32xf32>
    %241 = arith.negf %240 : vector<8x32xf32>
    %242 = math.exp %241 : vector<8x32xf32>
    %cst_73 = arith.constant 1.000000e+00 : f32
    %243 = vector.broadcast %cst_73 : f32 to vector<8x32xf32>
    %244 = arith.addf %243, %242 : vector<8x32xf32>
    %245 = arith.divf %243, %244 : vector<8x32xf32>
    %246 = vector.extract_strided_slice %233 {offsets = [0, 64], sizes = [8, 32], strides = [1, 1]} : vector<8x128xf32> to vector<8x32xf32>
    %247 = math.tanh %246 : vector<8x32xf32>
    %248 = vector.extract_strided_slice %233 {offsets = [0, 96], sizes = [8, 32], strides = [1, 1]} : vector<8x128xf32> to vector<8x32xf32>
    %249 = arith.negf %248 : vector<8x32xf32>
    %250 = math.exp %249 : vector<8x32xf32>
    %cst_74 = arith.constant 1.000000e+00 : f32
    %251 = vector.broadcast %cst_74 : f32 to vector<8x32xf32>
    %252 = arith.addf %251, %250 : vector<8x32xf32>
    %253 = arith.divf %251, %252 : vector<8x32xf32>
    %254 = arith.mulf %245, %223 : vector<8x32xf32>
    %255 = arith.mulf %239, %247 : vector<8x32xf32>
    %256 = arith.addf %254, %255 : vector<8x32xf32>
    %257 = math.tanh %256 : vector<8x32xf32>
    %258 = arith.mulf %253, %257 : vector<8x32xf32>
    %259 = arith.index_cast %229 : i32 to index
    %c0_75 = arith.constant 0 : index
    %260 = vector.load %arg19[%259, %c0_75] : memref<64x32xf32, #tpu.memory_space<vmem>>, vector<8x32xf32>
    tpu.vector_store %arg19[%259, %c0_75], %258 {strides = array<i32>} : memref<64x32xf32, #tpu.memory_space<vmem>>, vector<8x32xf32>,
    %c7_i32 = arith.constant 7 : i32
    %c8_i32_76 = arith.constant 8 : i32
    %261 = arith.muli %c7_i32, %c8_i32_76 : i32
    %262 = tpu.assume_multiple %261, 8 : i32
    %263 = arith.index_cast %262 : i32 to index
    %c0_77 = arith.constant 0 : index
    %264 = vector.load %arg18[%263, %c0_77] : memref<64x128xf32, #tpu.memory_space<vmem>>, vector<8x128xf32>
    %cst_78 = arith.constant dense<0.000000e+00> : vector<8x128xf32>
    %265 = tpu.matmul %258, %28, %cst_78 {dimension_numbers = #tpu.dot_dimension_numbers<[1], [0], [0], [1], [0, 0, 1, 1], [], []>} : vector<8x32xf32>, vector<32x128xf32>, vector<8x128xf32> -> vector<8x128xf32>
    %266 = arith.addf %264, %265 : vector<8x128xf32>
    %267 = vector.extract_strided_slice %266 {offsets = [0, 0], sizes = [8, 32], strides = [1, 1]} : vector<8x128xf32> to vector<8x32xf32>
    %268 = arith.negf %267 : vector<8x32xf32>
    %269 = math.exp %268 : vector<8x32xf32>
    %cst_79 = arith.constant 1.000000e+00 : f32
    %270 = vector.broadcast %cst_79 : f32 to vector<8x32xf32>
    %271 = arith.addf %270, %269 : vector<8x32xf32>
    %272 = arith.divf %270, %271 : vector<8x32xf32>
    %273 = vector.extract_strided_slice %266 {offsets = [0, 32], sizes = [8, 32], strides = [1, 1]} : vector<8x128xf32> to vector<8x32xf32>
    %274 = arith.negf %273 : vector<8x32xf32>
    %275 = math.exp %274 : vector<8x32xf32>
    %cst_80 = arith.constant 1.000000e+00 : f32
    %276 = vector.broadcast %cst_80 : f32 to vector<8x32xf32>
    %277 = arith.addf %276, %275 : vector<8x32xf32>
    %278 = arith.divf %276, %277 : vector<8x32xf32>
    %279 = vector.extract_strided_slice %266 {offsets = [0, 64], sizes = [8, 32], strides = [1, 1]} : vector<8x128xf32> to vector<8x32xf32>
    %280 = math.tanh %279 : vector<8x32xf32>
    %281 = vector.extract_strided_slice %266 {offsets = [0, 96], sizes = [8, 32], strides = [1, 1]} : vector<8x128xf32> to vector<8x32xf32>
    %282 = arith.negf %281 : vector<8x32xf32>
    %283 = math.exp %282 : vector<8x32xf32>
    %cst_81 = arith.constant 1.000000e+00 : f32
    %284 = vector.broadcast %cst_81 : f32 to vector<8x32xf32>
    %285 = arith.addf %284, %283 : vector<8x32xf32>
    %286 = arith.divf %284, %285 : vector<8x32xf32>
    %287 = arith.mulf %278, %256 : vector<8x32xf32>
    %288 = arith.mulf %272, %280 : vector<8x32xf32>
    %289 = arith.addf %287, %288 : vector<8x32xf32>
    %290 = math.tanh %289 : vector<8x32xf32>
    %291 = arith.mulf %286, %290 : vector<8x32xf32>
    %292 = arith.index_cast %262 : i32 to index
    %c0_82 = arith.constant 0 : index
    %293 = vector.load %arg19[%292, %c0_82] : memref<64x32xf32, #tpu.memory_space<vmem>>, vector<8x32xf32>
    tpu.vector_store %arg19[%292, %c0_82], %291 {strides = array<i32>} : memref<64x32xf32, #tpu.memory_space<vmem>>, vector<8x32xf32>,
    %c8_i32_83 = arith.constant 8 : i32
    %c0_84 = arith.constant 0 : index
    %c0_85 = arith.constant 0 : index
    %294 = vector.load %arg19[%c0_84, %c0_85] : memref<64x32xf32, #tpu.memory_space<vmem>>, vector<64x32xf32>
    %c0_86 = arith.constant 0 : index
    %c0_87 = arith.constant 0 : index
    %295 = vector.load %arg13[%c0_86, %c0_87] : memref<32x128xf32, #tpu.memory_space<vmem>>, vector<32x128xf32>
    %cst_88 = arith.constant dense<0.000000e+00> : vector<64x128xf32>
    %296 = tpu.matmul %294, %295, %cst_88 {dimension_numbers = #tpu.dot_dimension_numbers<[1], [0], [0], [1], [0, 0, 1, 1], [], []>} : vector<64x32xf32>, vector<32x128xf32>, vector<64x128xf32> -> vector<64x128xf32>
    %c0_89 = arith.constant 0 : index
    %c0_90 = arith.constant 0 : index
    %297 = vector.load %arg14[%c0_89, %c0_90] : memref<1x128xf32, #tpu.memory_space<vmem>>, vector<1x128xf32>
    %298 = vector.broadcast %297 : vector<1x128xf32> to vector<64x128xf32>
    %299 = arith.addf %296, %298 : vector<64x128xf32>
    %cst_91 = arith.constant 0.000000e+00 : f32
    %300 = vector.broadcast %cst_91 : f32 to vector<64x128xf32>
    %301 = arith.maximumf %299, %300 : vector<64x128xf32>
    %c0_92 = arith.constant 0 : index
    %c0_93 = arith.constant 0 : index
    %302 = vector.load %arg15[%c0_92, %c0_93] : memref<128x4xf32, #tpu.memory_space<vmem>>, vector<128x4xf32>
    %cst_94 = arith.constant dense<0.000000e+00> : vector<64x4xf32>
    %303 = tpu.matmul %301, %302, %cst_94 {dimension_numbers = #tpu.dot_dimension_numbers<[1], [0], [0], [1], [0, 0, 1, 1], [], []>} : vector<64x128xf32>, vector<128x4xf32>, vector<64x4xf32> -> vector<64x4xf32>
    %c0_95 = arith.constant 0 : index
    %c0_96 = arith.constant 0 : index
    %304 = vector.load %arg16[%c0_95, %c0_96] : memref<1x4xf32, #tpu.memory_space<vmem>>, vector<1x4xf32>
    %305 = vector.broadcast %304 : vector<1x4xf32> to vector<64x4xf32>
    %306 = arith.addf %303, %305 : vector<64x4xf32>
    %307 = arith.mulf %306, %306 : vector<64x4xf32>
    %cst_97 = arith.constant dense<0.000000e+00> : vector<64xf32>
    %308 = vector.multi_reduction <add>, %307, %cst_97 [1] : vector<64x4xf32> to vector<64xf32>
    %309 = vector.shape_cast %308 : vector<64xf32> to vector<64x1xf32>
    %310 = math.rsqrt %309 : vector<64x1xf32>
    %311 = vector.broadcast %310 : vector<64x1xf32> to vector<64x4xf32>
    %312 = arith.mulf %306, %311 : vector<64x4xf32>
    %c0_98 = arith.constant 0 : index
    %c0_99 = arith.constant 0 : index
    %313 = vector.load %arg17[%c0_98, %c0_99] : memref<64x16xf32, #tpu.memory_space<vmem>>, vector<64x4xf32>
    tpu.vector_store %arg17[%c0_98, %c0_99], %312 {strides = array<i32>} : memref<64x16xf32, #tpu.memory_space<vmem>>, vector<64x4xf32>,
    %314 = vector.extract_strided_slice %312 {offsets = [0, 0], sizes = [64, 1], strides = [1, 1]} : vector<64x4xf32> to vector<64x1xf32>
    %315 = vector.extract_strided_slice %312 {offsets = [0, 1], sizes = [64, 1], strides = [1, 1]} : vector<64x4xf32> to vector<64x1xf32>
    %316 = vector.extract_strided_slice %312 {offsets = [0, 2], sizes = [64, 1], strides = [1, 1]} : vector<64x4xf32> to vector<64x1xf32>
    %317 = vector.extract_strided_slice %312 {offsets = [0, 3], sizes = [64, 1], strides = [1, 1]} : vector<64x4xf32> to vector<64x1xf32>
    %c0_100 = arith.constant 0 : index
    %c0_101 = arith.constant 0 : index
    %318 = vector.load %arg1[%c0_100, %c0_101] : memref<64x4xf32, #tpu.memory_space<vmem>>, vector<64x4xf32>
    %c0_102 = arith.constant 0 : index
    %c0_103 = arith.constant 0 : index
    %319 = vector.load %arg2[%c0_102, %c0_103] : memref<64x4xf32, #tpu.memory_space<vmem>>, vector<64x4xf32>
    %c0_104 = arith.constant 0 : index
    %c0_105 = arith.constant 0 : index
    %320 = vector.load %arg3[%c0_104, %c0_105] : memref<64x4xf32, #tpu.memory_space<vmem>>, vector<64x4xf32>
    %321 = vector.broadcast %316 : vector<64x1xf32> to vector<64x4xf32>
    %322 = arith.mulf %321, %320 : vector<64x4xf32>
    %323 = vector.broadcast %317 : vector<64x1xf32> to vector<64x4xf32>
    %324 = arith.mulf %323, %319 : vector<64x4xf32>
    %325 = arith.subf %322, %324 : vector<64x4xf32>
    %326 = vector.broadcast %317 : vector<64x1xf32> to vector<64x4xf32>
    %327 = arith.mulf %326, %318 : vector<64x4xf32>
    %328 = vector.broadcast %315 : vector<64x1xf32> to vector<64x4xf32>
    %329 = arith.mulf %328, %320 : vector<64x4xf32>
    %330 = arith.subf %327, %329 : vector<64x4xf32>
    %331 = vector.broadcast %315 : vector<64x1xf32> to vector<64x4xf32>
    %332 = arith.mulf %331, %319 : vector<64x4xf32>
    %333 = vector.broadcast %316 : vector<64x1xf32> to vector<64x4xf32>
    %334 = arith.mulf %333, %318 : vector<64x4xf32>
    %335 = arith.subf %332, %334 : vector<64x4xf32>
    %336 = vector.broadcast %316 : vector<64x1xf32> to vector<64x4xf32>
    %337 = arith.mulf %336, %335 : vector<64x4xf32>
    %338 = vector.broadcast %317 : vector<64x1xf32> to vector<64x4xf32>
    %339 = arith.mulf %338, %330 : vector<64x4xf32>
    %340 = arith.subf %337, %339 : vector<64x4xf32>
    %341 = vector.broadcast %317 : vector<64x1xf32> to vector<64x4xf32>
    %342 = arith.mulf %341, %325 : vector<64x4xf32>
    %343 = vector.broadcast %315 : vector<64x1xf32> to vector<64x4xf32>
    %344 = arith.mulf %343, %335 : vector<64x4xf32>
    %345 = arith.subf %342, %344 : vector<64x4xf32>
    %346 = vector.broadcast %315 : vector<64x1xf32> to vector<64x4xf32>
    %347 = arith.mulf %346, %330 : vector<64x4xf32>
    %348 = vector.broadcast %316 : vector<64x1xf32> to vector<64x4xf32>
    %349 = arith.mulf %348, %325 : vector<64x4xf32>
    %350 = arith.subf %347, %349 : vector<64x4xf32>
    %351 = vector.broadcast %314 : vector<64x1xf32> to vector<64x4xf32>
    %352 = arith.mulf %351, %325 : vector<64x4xf32>
    %353 = arith.addf %352, %340 : vector<64x4xf32>
    %cst_106 = arith.constant 2.000000e+00 : f32
    %354 = vector.broadcast %cst_106 : f32 to vector<64x4xf32>
    %355 = arith.mulf %354, %353 : vector<64x4xf32>
    %356 = arith.addf %318, %355 : vector<64x4xf32>
    %c0_107 = arith.constant 0 : index
    %c4 = arith.constant 4 : index
    %357 = vector.load %arg17[%c0_107, %c4] : memref<64x16xf32, #tpu.memory_space<vmem>>, vector<64x4xf32>
    tpu.vector_store %arg17[%c0_107, %c4], %356 {strides = array<i32>} : memref<64x16xf32, #tpu.memory_space<vmem>>, vector<64x4xf32>,
    %358 = vector.broadcast %314 : vector<64x1xf32> to vector<64x4xf32>
    %359 = arith.mulf %358, %330 : vector<64x4xf32>
    %360 = arith.addf %359, %345 : vector<64x4xf32>
    %cst_108 = arith.constant 2.000000e+00 : f32
    %361 = vector.broadcast %cst_108 : f32 to vector<64x4xf32>
    %362 = arith.mulf %361, %360 : vector<64x4xf32>
    %363 = arith.addf %319, %362 : vector<64x4xf32>
    %c0_109 = arith.constant 0 : index
    %c8 = arith.constant 8 : index
    %364 = vector.load %arg17[%c0_109, %c8] : memref<64x16xf32, #tpu.memory_space<vmem>>, vector<64x4xf32>
    tpu.vector_store %arg17[%c0_109, %c8], %363 {strides = array<i32>} : memref<64x16xf32, #tpu.memory_space<vmem>>, vector<64x4xf32>,
    %365 = vector.broadcast %314 : vector<64x1xf32> to vector<64x4xf32>
    %366 = arith.mulf %365, %335 : vector<64x4xf32>
    %367 = arith.addf %366, %350 : vector<64x4xf32>
    %cst_110 = arith.constant 2.000000e+00 : f32
    %368 = vector.broadcast %cst_110 : f32 to vector<64x4xf32>
    %369 = arith.mulf %368, %367 : vector<64x4xf32>
    %370 = arith.addf %320, %369 : vector<64x4xf32>
    %c0_111 = arith.constant 0 : index
    %c12 = arith.constant 12 : index
    %371 = vector.load %arg17[%c0_111, %c12] : memref<64x16xf32, #tpu.memory_space<vmem>>, vector<64x4xf32>
    tpu.vector_store %arg17[%c0_111, %c12], %370 {strides = array<i32>} : memref<64x16xf32, #tpu.memory_space<vmem>>, vector<64x4xf32>,
    return
  }
}

</mosaic_0001>

<llo_original>
// kernel: tpu_custom_call.1
$region0: #{tpu_custom_call.1}
  #allocation0 [shape = 'u32[]', space=smem, size = 0x4, offset = 0x4, fixed_abs, tag = 'smem constant byte address 0x4 - core index']
  #allocation1 [shape = 'u32[144,128]{1,0:T(1,128)}', space=vmem, size = 0x12000, scoped, tag = 'internal scratch']
  #allocation2 [shape = 'f32[64,128]{1,0:T(8,128)}', space=vmem, size = 0x8000, scoped, tag = 'scratch operand']
  #allocation3 [shape = 'f32[64,32]{1,0:T(8,128)}', space=vmem, size = 0x8000, scoped, tag = 'scratch operand']
  %s0 = inlined_call_operand.vmem [shape: f32[64,12], index: 0, kind: input, shape index: {}]
  %s1 = inlined_call_operand.vmem [shape: f32[64,4], index: 1, kind: input, shape index: {}]
  %s2 = inlined_call_operand.vmem [shape: f32[64,4], index: 2, kind: input, shape index: {}]
  %s3 = inlined_call_operand.vmem [shape: f32[64,4], index: 3, kind: input, shape index: {}]
  %s4 = inlined_call_operand.vmem [shape: f32[12,256], index: 4, kind: input, shape index: {}]
  %s5 = inlined_call_operand.vmem [shape: f32[1,256], index: 5, kind: input, shape index: {}]
  %s6 = inlined_call_operand.hbm [shape: f32[256,256], index: 6, kind: input, shape index: {}]
  %s7 = inlined_call_operand.vmem [shape: f32[1,256], index: 7, kind: input, shape index: {}]
  %s8 = inlined_call_operand.vmem [shape: f32[256,128], index: 8, kind: input, shape index: {}]
  %s9 = inlined_call_operand.vmem [shape: f32[1,128], index: 9, kind: input, shape index: {}]
  %s10 = inlined_call_operand.vmem [shape: f32[128,128], index: 10, kind: input, shape index: {}]
  %s11 = inlined_call_operand.hbm [shape: f32[32,128], index: 11, kind: input, shape index: {}]
  %s12 = inlined_call_operand.vmem [shape: f32[1,128], index: 12, kind: input, shape index: {}]
  %s13 = inlined_call_operand.hbm [shape: f32[32,128], index: 13, kind: input, shape index: {}]
  %s14 = inlined_call_operand.vmem [shape: f32[1,128], index: 14, kind: input, shape index: {}]
  %s15 = inlined_call_operand.vmem [shape: f32[128,4], index: 15, kind: input, shape index: {}]
  %s16 = inlined_call_operand.vmem [shape: f32[1,4], index: 16, kind: input, shape index: {}]
  %s17 = inlined_call_operand.vmem [shape: f32[64,16], index: 17, kind: output, shape index: {}]
  %s18 = sld [smem:[#allocation0]]
  $region90: #{tpu_custom_call.1} parent=0
    _
  %s20 = ssub.s32 1, %s18
  %s21 = scalar_select 0, %s20, %s18
  $region1: #{tpu_custom_call.1} parent=0
    #allocation4 [shape = 'u8[262144]{0}', space=vmem, size = 0x40000, scoped, tag = 'input window, operand 6, single buffered']
    #allocation5 [shape = 's32[1]{0}', space=sflag, size = 0x4, scoped, tag = 'scoped memory for tpu_custom_call.1']
    #allocation6 [shape = 'u8[16384]{0}', space=vmem, size = 0x4000, scoped, tag = 'input window, operand 11, single buffered']
    #allocation7 [shape = 's32[1]{0}', space=sflag, size = 0x4, scoped, tag = 'scoped memory for tpu_custom_call.1']
    #allocation8 [shape = 'u8[16384]{0}', space=vmem, size = 0x4000, scoped, tag = 'input window, operand 13, single buffered']
    %22 = vsyncpa [#allocation5], 0
    %23 = vsyncpa [#allocation7], 0
    // Predicated region
    $region2: #{tpu_custom_call.1} parent=1 // pred_check
      _
    $region3: #{tpu_custom_call.1} parent=1 // pred_check_branch
      %25 = sbr.rel (0) target = $region5
    $region4: #{tpu_custom_call.1} parent=1 // pred_region
      _
    $region5: #{tpu_custom_call.1} parent=1 // pred_fallthru
      _
    // Predicated region
    $region6: #{tpu_custom_call.1} parent=1 // pred_check
      _
    $region7: #{tpu_custom_call.1} parent=1 // pred_check_branch
      %27 = sbr.rel (0) target = $region9
    $region8: #{tpu_custom_call.1} parent=1 // pred_region
      _
    $region9: #{tpu_custom_call.1} parent=1 // pred_fallthru
      _
    // Predicated region
    $region10: #{tpu_custom_call.1} parent=1 // pred_check
      _
    $region11: #{tpu_custom_call.1} parent=1 // pred_check_branch
      %29 = sbr.rel (0) target = $region13
    $region12: #{tpu_custom_call.1} parent=1 // pred_region
      _
    $region13: #{tpu_custom_call.1} parent=1 // pred_fallthru
      _
    // Predicated region
    $region14: #{tpu_custom_call.1} parent=1 // pred_check
      _
    $region15: #{tpu_custom_call.1} parent=1 // pred_check_branch
      %31 = sbr.rel (0) target = $region17
    $region16: #{tpu_custom_call.1} parent=1 // pred_region
      _
    $region17: #{tpu_custom_call.1} parent=1 // pred_fallthru
      _
    // Predicated region
    $region18: #{tpu_custom_call.1} parent=1 // pred_check
      _
    $region19: #{tpu_custom_call.1} parent=1 // pred_check_branch
      %33 = sbr.rel (0) target = $region21
    $region20: #{tpu_custom_call.1} parent=1 // pred_region
      _
    $region21: #{tpu_custom_call.1} parent=1 // pred_fallthru
      _
    // Predicated region
    $region22: #{tpu_custom_call.1} parent=1 // pred_check
      _
    $region23: #{tpu_custom_call.1} parent=1 // pred_check_branch
      %35 = sbr.rel (0) target = $region25
    $region24: #{tpu_custom_call.1} parent=1 // pred_region
      _
    $region25: #{tpu_custom_call.1} parent=1 // pred_fallthru
      _
    // Predicated region
    $region26: #{tpu_custom_call.1} parent=1 // pred_check
      _
    $region27: #{tpu_custom_call.1} parent=1 // pred_check_branch
      %37 = sbr.rel (0) target = $region29
    $region28: #{tpu_custom_call.1} parent=1 // pred_region
      %s39 = ssub.s32 8192, 8192
      %40 = vsyncadd [#allocation5], %s39
      %s41 = sshll.u32 [#allocation4], 4
      %s42 = int_to_ptr.vmem [resolvable:$true] %s41
      %47 = dma.hbm_to_vmem [thread:$0]  %s6, 8192, %s42, [#allocation5], 256, 256, 16
    $region29: #{tpu_custom_call.1} parent=1 // pred_fallthru
      _
    // Predicated region
    $region30: #{tpu_custom_call.1} parent=1 // pred_check
      _
    $region31: #{tpu_custom_call.1} parent=1 // pred_check_branch
      %49 = sbr.rel (0) target = $region33
    $region32: #{tpu_custom_call.1} parent=1 // pred_region
      _
    $region33: #{tpu_custom_call.1} parent=1 // pred_fallthru
      _
    // Predicated region
    $region34: #{tpu_custom_call.1} parent=1 // pred_check
      _
    $region35: #{tpu_custom_call.1} parent=1 // pred_check_branch
      %51 = sbr.rel (0) target = $region37
    $region36: #{tpu_custom_call.1} parent=1 // pred_region
      _
    $region37: #{tpu_custom_call.1} parent=1 // pred_fallthru
      _
    // Predicated region
    $region38: #{tpu_custom_call.1} parent=1 // pred_check
      _
    $region39: #{tpu_custom_call.1} parent=1 // pred_check_branch
      %53 = sbr.rel (0) target = $region41
    $region40: #{tpu_custom_call.1} parent=1 // pred_region
      _
    $region41: #{tpu_custom_call.1} parent=1 // pred_fallthru
      _
    // Predicated region
    $region42: #{tpu_custom_call.1} parent=1 // pred_check
      _
    $region43: #{tpu_custom_call.1} parent=1 // pred_check_branch
      %55 = sbr.rel (0) target = $region45
    $region44: #{tpu_custom_call.1} parent=1 // pred_region
      _
    $region45: #{tpu_custom_call.1} parent=1 // pred_fallthru
      _
    // Predicated region
    $region46: #{tpu_custom_call.1} parent=1 // pred_check
      _
    $region47: #{tpu_custom_call.1} parent=1 // pred_check_branch
      %57 = sbr.rel (0) target = $region49
    $region48: #{tpu_custom_call.1} parent=1 // pred_region
      %s59 = ssub.s32 512, 512
      %60 = vsyncadd [#allocation7], %s59
      %s61 = sshll.u32 [#allocation6], 4
      %s62 = int_to_ptr.vmem [resolvable:$true] %s61
      %67 = dma.hbm_to_vmem [thread:$0]  %s11, 512, %s62, [#allocation7], 128, 128, 8
    $region49: #{tpu_custom_call.1} parent=1 // pred_fallthru
      _
    // Predicated region
    $region50: #{tpu_custom_call.1} parent=1 // pred_check
      _
    $region51: #{tpu_custom_call.1} parent=1 // pred_check_branch
      %69 = sbr.rel (0) target = $region53
    $region52: #{tpu_custom_call.1} parent=1 // pred_region
      _
    $region53: #{tpu_custom_call.1} parent=1 // pred_fallthru
      _
    // Predicated region
    $region54: #{tpu_custom_call.1} parent=1 // pred_check
      _
    $region55: #{tpu_custom_call.1} parent=1 // pred_check_branch
      %71 = sbr.rel (0) target = $region57
    $region56: #{tpu_custom_call.1} parent=1 // pred_region
      %s73 = ssub.s32 512, 512
      %74 = vsyncadd [#allocation7], %s73
      %s75 = sshll.u32 [#allocation8], 4
      %s76 = int_to_ptr.vmem [resolvable:$true] %s75
      %81 = dma.hbm_to_vmem [thread:$0]  %s13, 512, %s76, [#allocation7], 128, 128, 8
    $region57: #{tpu_custom_call.1} parent=1 // pred_fallthru
      _
    // Predicated region
    $region58: #{tpu_custom_call.1} parent=1 // pred_check
      _
    $region59: #{tpu_custom_call.1} parent=1 // pred_check_branch
      %83 = sbr.rel (0) target = $region61
    $region60: #{tpu_custom_call.1} parent=1 // pred_region
      _
    $region61: #{tpu_custom_call.1} parent=1 // pred_fallthru
      _
    // Predicated region
    $region62: #{tpu_custom_call.1} parent=1 // pred_check
      _
    $region63: #{tpu_custom_call.1} parent=1 // pred_check_branch
      %85 = sbr.rel (0) target = $region65
    $region64: #{tpu_custom_call.1} parent=1 // pred_region
      _
    $region65: #{tpu_custom_call.1} parent=1 // pred_fallthru
      _
    // Predicated region
    $region66: #{tpu_custom_call.1} parent=1 // pred_check
      _
    $region67: #{tpu_custom_call.1} parent=1 // pred_check_branch
      %87 = sbr.rel (0) target = $region69
    $region68: #{tpu_custom_call.1} parent=1 // pred_region
      _
    $region69: #{tpu_custom_call.1} parent=1 // pred_fallthru
      _
    // Predicated region
    $region70: #{tpu_custom_call.1} parent=1 // pred_check
      _
    $region71: #{tpu_custom_call.1} parent=1 // pred_check_branch
      %89 = sbr.rel (0) target = $region73
    $region72: #{tpu_custom_call.1} parent=1 // pred_region
      %90 = dma.done [#allocation5], 8192
    $region73: #{tpu_custom_call.1} parent=1 // pred_fallthru
      _
    // Predicated region
    $region74: #{tpu_custom_call.1} parent=1 // pred_check
      _
    $region75: #{tpu_custom_call.1} parent=1 // pred_check_branch
      %92 = sbr.rel (0) target = $region77
    $region76: #{tpu_custom_call.1} parent=1 // pred_region
      %93 = dma.done [#allocation7], 512
    $region77: #{tpu_custom_call.1} parent=1 // pred_fallthru
      _
    // Predicated region
    $region78: #{tpu_custom_call.1} parent=1 // pred_check
      _
    $region79: #{tpu_custom_call.1} parent=1 // pred_check_branch
      %95 = sbr.rel (0) target = $region81
    $region80: #{tpu_custom_call.1} parent=1 // pred_region
      %96 = dma.done [#allocation7], 512
    $region81: #{tpu_custom_call.1} parent=1 // pred_fallthru
      _
    %v97 = vld [vmem:[%s0] sm:$0xff]
    %v98 = vld [vmem:[%s0 + $0x8] sm:$0xff]
    %v99 = vld [vmem:[%s0 + $0x10] sm:$0xff]
    %v100 = vld [vmem:[%s0 + $0x18] sm:$0xff]
    %v101 = vld [vmem:[%s0 + $0x20] sm:$0xff]
    %v102 = vld [vmem:[%s0 + $0x28] sm:$0xff]
    %v103 = vld [vmem:[%s0 + $0x30] sm:$0xff]
    %v104 = vld [vmem:[%s0 + $0x38] sm:$0xff]
    %v105 = vld [vmem:[%s4] sm:$0xff]
    %v106 = vld [vmem:[%s4 + $0x8] sm:$0xff]
    %v107 = vld [vmem:[%s4 + $0x10] sm:$0xf]
    %v108 = vld [vmem:[%s4 + $0x18] sm:$0xf]
    %v109 = vld [vmem:[%s5] sm:$0x3]
    %v111 = vlaneseq
    %v112 = vshrl.u32 %v111, 7
    %v113 = vsub.s32 0, %v112
    %v114 = vrot.slane %v109, %v113
    %v115 = vlaneseq
    %v116 = vshrl.u32 %v115, 7
    %v117 = vsub.s32 1, %v116
    %v118 = vrot.slane %v109, %v117
    %vm121 = vcmask 97280
    %v123 = vsel %vm121, %v97, 0
    %v126 = vsel %vm121, %v98, 0
    %v129 = vsel %vm121, %v99, 0
    %v132 = vsel %vm121, %v100, 0
    %v135 = vsel %vm121, %v101, 0
    %v138 = vsel %vm121, %v102, 0
    %v141 = vsel %vm121, %v103, 0
    %v144 = vsel %vm121, %v104, 0
    %vm146 = vcmask 1043456
    %v148 = vsel %vm146, %v107, 0
    %v151 = vsel %vm146, %v108, 0
    %153 = vmatprep.subr.mxu0 0.0
    %154 = vmatpush1.msra.mxu0 0.0
    %155 = vmatprep.subr.mxu0 0.0
    %156 = vmatpush1.msra.mxu0 0.0
    %157 = vmatprep.subr.mxu0 0.0
    %158 = vmatpush1.msra.mxu0 0.0
    %159 = vmatprep.subr.mxu0 0.0
    %160 = vmatpush1.msra.mxu0 0.0
    %161 = vmatprep.subr.mxu0 0.0
    %162 = vmatpush1.msra.mxu0 0.0
    %163 = vmatprep.subr.mxu0 0.0
    %164 = vmatpush1.msra.mxu0 0.0
    %165 = vmatprep.subr.mxu0 0.0
    %166 = vmatpush1.msra.mxu0 0.0
    %167 = vmatprep.subr.mxu0 0.0
    %168 = vmatpush1.msra.mxu0 0.0
    %169 = vmatprep.subr.mxu0 0.0
    %170 = vmatpush1.msra.mxu0 0.0
    %171 = vmatprep.subr.mxu0 0.0
    %172 = vmatpush1.msra.mxu0 0.0
    %173 = vmatprep.subr.mxu0 0.0
    %174 = vmatpush1.msra.mxu0 0.0
    %175 = vmatprep.subr.mxu0 0.0
    %176 = vmatpush1.msra.mxu0 0.0
    %177 = vmatprep.subr.mxu0 0.0
    %178 = vmatpush1.msra.mxu0 0.0
    %179 = vmatprep.subr.mxu0 0.0
    %180 = vmatpush1.msra.mxu0 0.0
    %181 = vmatprep.subr.mxu0 %v151
    %182 = vmatpush1.msra.mxu0 %v148
    %183 = vmatprep.subr.mxu0 %v106
    %184 = vmatpush1.msra.mxu0 %v105
    %185 = vmatprep.subr.mxu0 0.0
    %186 = vmatpush2.msra.mxu0 0.0
    %187 = vmatprep.subr.mxu0 0.0
    %188 = vmatpush2.msra.mxu0 0.0
    %189 = vmatprep.subr.mxu0 0.0
    %190 = vmatpush2.msra.mxu0 0.0
    %191 = vmatprep.subr.mxu0 0.0
    %192 = vmatpush2.msra.mxu0 0.0
    %193 = vmatprep.subr.mxu0 0.0
    %194 = vmatpush2.msra.mxu0 0.0
    %195 = vmatprep.subr.mxu0 0.0
    %196 = vmatpush2.msra.mxu0 0.0
    %197 = vmatprep.subr.mxu0 0.0
    %198 = vmatpush2.msra.mxu0 0.0
    %199 = vmatprep.subr.mxu0 0.0
    %200 = vmatpush2.msra.mxu0 0.0
    %201 = vmatprep.subr.mxu0 0.0
    %202 = vmatpush2.msra.mxu0 0.0
    %203 = vmatprep.subr.mxu0 0.0
    %204 = vmatpush2.msra.mxu0 0.0
    %205 = vmatprep.subr.mxu0 0.0
    %206 = vmatpush2.msra.mxu0 0.0
    %207 = vmatprep.subr.mxu0 0.0
    %208 = vmatpush2.msra.mxu0 0.0
    %209 = vmatprep.subr.mxu0 0.0
    %210 = vmatpush2.msra.mxu0 0.0
    %211 = vmatprep.subr.mxu0 0.0
    %212 = vmatpush2.msra.mxu0 0.0
    %213 = vmatprep.subr.mxu0 0.0
    %214 = vmatpush2.msra.mxu0 0.0
    %215 = vmatprep.subr.mxu0 0.0
    %216 = vmatpush2.msra.mxu0 0.0
    %217 = vmatprep.mubr.f32.mxu0 0.0
    %218 = vmatmul.mubr.f32.gmra.mxu0 %v123
    %v219 = vpop.f32.mrf.mxu0
    %v220 = vadd.f32 %v114, %v219
    %v221 = vpop.f32.mrf.mxu0
    %v222 = vadd.f32 %v118, %v221
    %223 = vmatprep.mubr.f32.mxu0 0.0
    %224 = vmatmul.mubr.f32.gmra.mxu0 %v126
    %v225 = vpop.f32.mrf.mxu0
    %v226 = vadd.f32 %v114, %v225
    %v227 = vpop.f32.mrf.mxu0
    %v228 = vadd.f32 %v118, %v227
    %229 = vmatprep.mubr.f32.mxu0 0.0
    %230 = vmatmul.mubr.f32.gmra.mxu0 %v129
    %v231 = vpop.f32.mrf.mxu0
    %v232 = vadd.f32 %v114, %v231
    %v233 = vpop.f32.mrf.mxu0
    %v234 = vadd.f32 %v118, %v233
    %235 = vmatprep.mubr.f32.mxu0 0.0
    %236 = vmatmul.mubr.f32.gmra.mxu0 %v132
    %v237 = vpop.f32.mrf.mxu0
    %v238 = vadd.f32 %v114, %v237
    %v239 = vpop.f32.mrf.mxu0
    %v240 = vadd.f32 %v118, %v239
    %241 = vmatprep.mubr.f32.mxu0 0.0
    %242 = vmatmul.mubr.f32.gmra.mxu0 %v135
    %v243 = vpop.f32.mrf.mxu0
    %v244 = vadd.f32 %v114, %v243
    %v245 = vpop.f32.mrf.mxu0
    %v246 = vadd.f32 %v118, %v245
    %247 = vmatprep.mubr.f32.mxu0 0.0
    %248 = vmatmul.mubr.f32.gmra.mxu0 %v138
    %v249 = vpop.f32.mrf.mxu0
    %v250 = vadd.f32 %v114, %v249
    %v251 = vpop.f32.mrf.mxu0
    %v252 = vadd.f32 %v118, %v251
    %253 = vmatprep.mubr.f32.mxu0 0.0
    %254 = vmatmul.mubr.f32.gmra.mxu0 %v141
    %v255 = vpop.f32.mrf.mxu0
    %v256 = vadd.f32 %v114, %v255
    %v257 = vpop.f32.mrf.mxu0
    %v258 = vadd.f32 %v118, %v257
    %259 = vmatprep.mubr.f32.mxu0 0.0
    %260 = vmatmul.mubr.f32.gmra.mxu0 %v144
    %v261 = vpop.f32.mrf.mxu0
    %v262 = vadd.f32 %v114, %v261
    %v263 = vpop.f32.mrf.mxu0
    %v264 = vadd.f32 %v118, %v263
    %265 = vdwg.mxu0
    %v266 = vmax.f32 %v220, 0.0
    %v267 = vmax.f32 %v222, 0.0
    %v268 = vmax.f32 %v226, 0.0
    %v269 = vmax.f32 %v228, 0.0
    %v270 = vmax.f32 %v232, 0.0
    %v271 = vmax.f32 %v234, 0.0
    %v272 = vmax.f32 %v238, 0.0
    %v273 = vmax.f32 %v240, 0.0
    %v274 = vmax.f32 %v244, 0.0
    %v275 = vmax.f32 %v246, 0.0
    %v276 = vmax.f32 %v250, 0.0
    %v277 = vmax.f32 %v252, 0.0
    %v278 = vmax.f32 %v256, 0.0
    %v279 = vmax.f32 %v258, 0.0
    %v280 = vmax.f32 %v262, 0.0
    %v281 = vmax.f32 %v264, 0.0
    %v282 = vld [vmem:[#allocation4] sm:$0xff]
    %v283 = vld [vmem:[#allocation4 + $0x8] sm:$0xff]
    %v284 = vld [vmem:[#allocation4 + $0x10] sm:$0xff]
    %v285 = vld [vmem:[#allocation4 + $0x18] sm:$0xff]
    %v286 = vld [vmem:[#allocation4 + $0x20] sm:$0xff]
    %v287 = vld [vmem:[#allocation4 + $0x28] sm:$0xff]
    %v288 = vld [vmem:[#allocation4 + $0x30] sm:$0xff]
    %v289 = vld [vmem:[#allocation4 + $0x38] sm:$0xff]
    %v290 = vld [vmem:[#allocation4 + $0x40] sm:$0xff]
    %v291 = vld [vmem:[#allocation4 + $0x48] sm:$0xff]
    %v292 = vld [vmem:[#allocation4 + $0x50] sm:$0xff]
    %v293 = vld [vmem:[#allocation4 + $0x58] sm:$0xff]
    %v294 = vld [vmem:[#allocation4 + $0x60] sm:$0xff]
    %v295 = vld [vmem:[#allocation4 + $0x68] sm:$0xff]
    %v296 = vld [vmem:[#allocation4 + $0x70] sm:$0xff]
    %v297 = vld [vmem:[#allocation4 + $0x78] sm:$0xff]
    %v298 = vld [vmem:[#allocation4 + $0x80] sm:$0xff]
    %v299 = vld [vmem:[#allocation4 + $0x88] sm:$0xff]
    %v300 = vld [vmem:[#allocation4 + $0x90] sm:$0xff]
    %v301 = vld [vmem:[#allocation4 + $0x98] sm:$0xff]
    %v302 = vld [vmem:[#allocation4 + $0xa0] sm:$0xff]
    %v303 = vld [vmem:[#allocation4 + $0xa8] sm:$0xff]
    %v304 = vld [vmem:[#allocation4 + $0xb0] sm:$0xff]
    %v305 = vld [vmem:[#allocation4 + $0xb8] sm:$0xff]
    %v306 = vld [vmem:[#allocation4 + $0xc0] sm:$0xff]
    %v307 = vld [vmem:[#allocation4 + $0xc8] sm:$0xff]
    %v308 = vld [vmem:[#allocation4 + $0xd0] sm:$0xff]
    %v309 = vld [vmem:[#allocation4 + $0xd8] sm:$0xff]
    %v310 = vld [vmem:[#allocation4 + $0xe0] sm:$0xff]
    %v311 = vld [vmem:[#allocation4 + $0xe8] sm:$0xff]
    %v312 = vld [vmem:[#allocation4 + $0xf0] sm:$0xff]
    %v313 = vld [vmem:[#allocation4 + $0xf8] sm:$0xff]
    %v314 = vld [vmem:[#allocation4 + $0x100] sm:$0xff]
    %v315 = vld [vmem:[#allocation4 + $0x108] sm:$0xff]
    %v316 = vld [vmem:[#allocation4 + $0x110] sm:$0xff]
    %v317 = vld [vmem:[#allocation4 + $0x118] sm:$0xff]
    %v318 = vld [vmem:[#allocation4 + $0x120] sm:$0xff]
    %v319 = vld [vmem:[#allocation4 + $0x128] sm:$0xff]
    %v320 = vld [vmem:[#allocation4 + $0x130] sm:$0xff]
    %v321 = vld [vmem:[#allocation4 + $0x138] sm:$0xff]
    %v322 = vld [vmem:[#allocation4 + $0x140] sm:$0xff]
    %v323 = vld [vmem:[#allocation4 + $0x148] sm:$0xff]
    %v324 = vld [vmem:[#allocation4 + $0x150] sm:$0xff]
    %v325 = vld [vmem:[#allocation4 + $0x158] sm:$0xff]
    %v326 = vld [vmem:[#allocation4 + $0x160] sm:$0xff]
    %v327 = vld [vmem:[#allocation4 + $0x168] sm:$0xff]
    %v328 = vld [vmem:[#allocation4 + $0x170] sm:$0xff]
    %v329 = vld [vmem:[#allocation4 + $0x178] sm:$0xff]
    %v330 = vld [vmem:[#allocation4 + $0x180] sm:$0xff]
    %v331 = vld [vmem:[#allocation4 + $0x188] sm:$0xff]
    %v332 = vld [vmem:[#allocation4 + $0x190] sm:$0xff]
    %v333 = vld [vmem:[#allocation4 + $0x198] sm:$0xff]
    %v334 = vld [vmem:[#allocation4 + $0x1a0] sm:$0xff]
    %v335 = vld [vmem:[#allocation4 + $0x1a8] sm:$0xff]
    %v336 = vld [vmem:[#allocation4 + $0x1b0] sm:$0xff]
    %v337 = vld [vmem:[#allocation4 + $0x1b8] sm:$0xff]
    %v338 = vld [vmem:[#allocation4 + $0x1c0] sm:$0xff]
    %v339 = vld [vmem:[#allocation4 + $0x1c8] sm:$0xff]
    %v340 = vld [vmem:[#allocation4 + $0x1d0] sm:$0xff]
    %v341 = vld [vmem:[#allocation4 + $0x1d8] sm:$0xff]
    %v342 = vld [vmem:[#allocation4 + $0x1e0] sm:$0xff]
    %v343 = vld [vmem:[#allocation4 + $0x1e8] sm:$0xff]
    %v344 = vld [vmem:[#allocation4 + $0x1f0] sm:$0xff]
    %v345 = vld [vmem:[#allocation4 + $0x1f8] sm:$0xff]
    %v346 = vld [vmem:[%s7] sm:$0x3]
    %v348 = vlaneseq
    %v349 = vshrl.u32 %v348, 7
    %v350 = vsub.s32 0, %v349
    %v351 = vrot.slane %v346, %v350
    %v352 = vlaneseq
    %v353 = vshrl.u32 %v352, 7
    %v354 = vsub.s32 1, %v353
    %v355 = vrot.slane %v346, %v354
    %358 = vmatprep.subr.mxu0 %v313
    %359 = vmatpush1.msra.mxu0 %v312
    %360 = vmatprep.subr.mxu0 %v311
    %361 = vmatpush1.msra.mxu0 %v310
    %362 = vmatprep.subr.mxu0 %v309
    %363 = vmatpush1.msra.mxu0 %v308
    %364 = vmatprep.subr.mxu0 %v307
    %365 = vmatpush1.msra.mxu0 %v306
    %366 = vmatprep.subr.mxu0 %v305
    %367 = vmatpush1.msra.mxu0 %v304
    %368 = vmatprep.subr.mxu0 %v303
    %369 = vmatpush1.msra.mxu0 %v302
    %370 = vmatprep.subr.mxu0 %v301
    %371 = vmatpush1.msra.mxu0 %v300
    %372 = vmatprep.subr.mxu0 %v299
    %373 = vmatpush1.msra.mxu0 %v298
    %374 = vmatprep.subr.mxu0 %v297
    %375 = vmatpush1.msra.mxu0 %v296
    %376 = vmatprep.subr.mxu0 %v295
    %377 = vmatpush1.msra.mxu0 %v294
    %378 = vmatprep.subr.mxu0 %v293
    %379 = vmatpush1.msra.mxu0 %v292
    %380 = vmatprep.subr.mxu0 %v291
    %381 = vmatpush1.msra.mxu0 %v290
    %382 = vmatprep.subr.mxu0 %v289
    %383 = vmatpush1.msra.mxu0 %v288
    %384 = vmatprep.subr.mxu0 %v287
    %385 = vmatpush1.msra.mxu0 %v286
    %386 = vmatprep.subr.mxu0 %v285
    %387 = vmatpush1.msra.mxu0 %v284
    %388 = vmatprep.subr.mxu0 %v283
    %389 = vmatpush1.msra.mxu0 %v282
    %390 = vmatprep.subr.mxu0 %v345
    %391 = vmatpush2.msra.mxu0 %v344
    %392 = vmatprep.subr.mxu0 %v343
    %393 = vmatpush2.msra.mxu0 %v342
    %394 = vmatprep.subr.mxu0 %v341
    %395 = vmatpush2.msra.mxu0 %v340
    %396 = vmatprep.subr.mxu0 %v339
    %397 = vmatpush2.msra.mxu0 %v338
    %398 = vmatprep.subr.mxu0 %v337
    %399 = vmatpush2.msra.mxu0 %v336
    %400 = vmatprep.subr.mxu0 %v335
    %401 = vmatpush2.msra.mxu0 %v334
    %402 = vmatprep.subr.mxu0 %v333
    %403 = vmatpush2.msra.mxu0 %v332
    %404 = vmatprep.subr.mxu0 %v331
    %405 = vmatpush2.msra.mxu0 %v330
    %406 = vmatprep.subr.mxu0 %v329
    %407 = vmatpush2.msra.mxu0 %v328
    %408 = vmatprep.subr.mxu0 %v327
    %409 = vmatpush2.msra.mxu0 %v326
    %410 = vmatprep.subr.mxu0 %v325
    %411 = vmatpush2.msra.mxu0 %v324
    %412 = vmatprep.subr.mxu0 %v323
    %413 = vmatpush2.msra.mxu0 %v322
    %414 = vmatprep.subr.mxu0 %v321
    %415 = vmatpush2.msra.mxu0 %v320
    %416 = vmatprep.subr.mxu0 %v319
    %417 = vmatpush2.msra.mxu0 %v318
    %418 = vmatprep.subr.mxu0 %v317
    %419 = vmatpush2.msra.mxu0 %v316
    %420 = vmatprep.subr.mxu0 %v315
    %421 = vmatpush2.msra.mxu0 %v314
    %422 = vmatprep.mubr.f32.mxu0 %v267
    %423 = vmatmul.mubr.f32.gmra.mxu0 %v266
    %v424 = vpop.f32.mrf.mxu0
    %v425 = vadd.f32 %v351, %v424
    %v426 = vpop.f32.mrf.mxu0
    %v427 = vadd.f32 %v355, %v426
    %428 = vmatprep.mubr.f32.mxu0 %v269
    %429 = vmatmul.mubr.f32.gmra.mxu0 %v268
    %v430 = vpop.f32.mrf.mxu0
    %v431 = vadd.f32 %v351, %v430
    %v432 = vpop.f32.mrf.mxu0
    %v433 = vadd.f32 %v355, %v432
    %434 = vmatprep.mubr.f32.mxu0 %v271
    %435 = vmatmul.mubr.f32.gmra.mxu0 %v270
    %v436 = vpop.f32.mrf.mxu0
    %v437 = vadd.f32 %v351, %v436
    %v438 = vpop.f32.mrf.mxu0
    %v439 = vadd.f32 %v355, %v438
    %440 = vmatprep.mubr.f32.mxu0 %v273
    %441 = vmatmul.mubr.f32.gmra.mxu0 %v272
    %v442 = vpop.f32.mrf.mxu0
    %v443 = vadd.f32 %v351, %v442
    %v444 = vpop.f32.mrf.mxu0
    %v445 = vadd.f32 %v355, %v444
    %446 = vmatprep.mubr.f32.mxu0 %v275
    %447 = vmatmul.mubr.f32.gmra.mxu0 %v274
    %v448 = vpop.f32.mrf.mxu0
    %v449 = vadd.f32 %v351, %v448
    %v450 = vpop.f32.mrf.mxu0
    %v451 = vadd.f32 %v355, %v450
    %452 = vmatprep.mubr.f32.mxu0 %v277
    %453 = vmatmul.mubr.f32.gmra.mxu0 %v276
    %v454 = vpop.f32.mrf.mxu0
    %v455 = vadd.f32 %v351, %v454
    %v456 = vpop.f32.mrf.mxu0
    %v457 = vadd.f32 %v355, %v456
    %458 = vmatprep.mubr.f32.mxu0 %v279
    %459 = vmatmul.mubr.f32.gmra.mxu0 %v278
    %v460 = vpop.f32.mrf.mxu0
    %v461 = vadd.f32 %v351, %v460
    %v462 = vpop.f32.mrf.mxu0
    %v463 = vadd.f32 %v355, %v462
    %464 = vmatprep.mubr.f32.mxu0 %v281
    %465 = vmatmul.mubr.f32.gmra.mxu0 %v280
    %v466 = vpop.f32.mrf.mxu0
    %v467 = vadd.f32 %v351, %v466
    %v468 = vpop.f32.mrf.mxu0
    %v469 = vadd.f32 %v355, %v468
    %470 = vdwg.mxu0
    %v471 = vmax.f32 %v425, 0.0
    %v472 = vmax.f32 %v427, 0.0
    %v473 = vmax.f32 %v431, 0.0
    %v474 = vmax.f32 %v433, 0.0
    %v475 = vmax.f32 %v437, 0.0
    %v476 = vmax.f32 %v439, 0.0
    %v477 = vmax.f32 %v443, 0.0
    %v478 = vmax.f32 %v445, 0.0
    %v479 = vmax.f32 %v449, 0.0
    %v480 = vmax.f32 %v451, 0.0
    %v481 = vmax.f32 %v455, 0.0
    %v482 = vmax.f32 %v457, 0.0
    %v483 = vmax.f32 %v461, 0.0
    %v484 = vmax.f32 %v463, 0.0
    %v485 = vmax.f32 %v467, 0.0
    %v486 = vmax.f32 %v469, 0.0
    %v487 = vld [vmem:[%s8] sm:$0xff]
    %v488 = vld [vmem:[%s8 + $0x8] sm:$0xff]
    %v489 = vld [vmem:[%s8 + $0x10] sm:$0xff]
    %v490 = vld [vmem:[%s8 + $0x18] sm:$0xff]
    %v491 = vld [vmem:[%s8 + $0x20] sm:$0xff]
    %v492 = vld [vmem:[%s8 + $0x28] sm:$0xff]
    %v493 = vld [vmem:[%s8 + $0x30] sm:$0xff]
    %v494 = vld [vmem:[%s8 + $0x38] sm:$0xff]
    %v495 = vld [vmem:[%s8 + $0x40] sm:$0xff]
    %v496 = vld [vmem:[%s8 + $0x48] sm:$0xff]
    %v497 = vld [vmem:[%s8 + $0x50] sm:$0xff]
    %v498 = vld [vmem:[%s8 + $0x58] sm:$0xff]
    %v499 = vld [vmem:[%s8 + $0x60] sm:$0xff]
    %v500 = vld [vmem:[%s8 + $0x68] sm:$0xff]
    %v501 = vld [vmem:[%s8 + $0x70] sm:$0xff]
    %v502 = vld [vmem:[%s8 + $0x78] sm:$0xff]
    %v503 = vld [vmem:[%s8 + $0x80] sm:$0xff]
    %v504 = vld [vmem:[%s8 + $0x88] sm:$0xff]
    %v505 = vld [vmem:[%s8 + $0x90] sm:$0xff]
    %v506 = vld [vmem:[%s8 + $0x98] sm:$0xff]
    %v507 = vld [vmem:[%s8 + $0xa0] sm:$0xff]
    %v508 = vld [vmem:[%s8 + $0xa8] sm:$0xff]
    %v509 = vld [vmem:[%s8 + $0xb0] sm:$0xff]
    %v510 = vld [vmem:[%s8 + $0xb8] sm:$0xff]
    %v511 = vld [vmem:[%s8 + $0xc0] sm:$0xff]
    %v512 = vld [vmem:[%s8 + $0xc8] sm:$0xff]
    %v513 = vld [vmem:[%s8 + $0xd0] sm:$0xff]
    %v514 = vld [vmem:[%s8 + $0xd8] sm:$0xff]
    %v515 = vld [vmem:[%s8 + $0xe0] sm:$0xff]
    %v516 = vld [vmem:[%s8 + $0xe8] sm:$0xff]
    %v517 = vld [vmem:[%s8 + $0xf0] sm:$0xff]
    %v518 = vld [vmem:[%s8 + $0xf8] sm:$0xff]
    %v519 = vld [vmem:[%s9] sm:$0x1]
    %v521 = vlaneseq
    %v522 = vshrl.u32 %v521, 7
    %v523 = vsub.s32 0, %v522
    %v524 = vrot.slane %v519, %v523
    %526 = vmatprep.subr.mxu0 0.0
    %527 = vmatpush1.msra.mxu0 %v502
    %528 = vmatprep.subr.mxu0 0.0
    %529 = vmatpush1.msra.mxu0 %v501
    %530 = vmatprep.subr.mxu0 0.0
    %531 = vmatpush1.msra.mxu0 %v500
    %532 = vmatprep.subr.mxu0 0.0
    %533 = vmatpush1.msra.mxu0 %v499
    %534 = vmatprep.subr.mxu0 0.0
    %535 = vmatpush1.msra.mxu0 %v498
    %536 = vmatprep.subr.mxu0 0.0
    %537 = vmatpush1.msra.mxu0 %v497
    %538 = vmatprep.subr.mxu0 0.0
    %539 = vmatpush1.msra.mxu0 %v496
    %540 = vmatprep.subr.mxu0 0.0
    %541 = vmatpush1.msra.mxu0 %v495
    %542 = vmatprep.subr.mxu0 0.0
    %543 = vmatpush1.msra.mxu0 %v494
    %544 = vmatprep.subr.mxu0 0.0
    %545 = vmatpush1.msra.mxu0 %v493
    %546 = vmatprep.subr.mxu0 0.0
    %547 = vmatpush1.msra.mxu0 %v492
    %548 = vmatprep.subr.mxu0 0.0
    %549 = vmatpush1.msra.mxu0 %v491
    %550 = vmatprep.subr.mxu0 0.0
    %551 = vmatpush1.msra.mxu0 %v490
    %552 = vmatprep.subr.mxu0 0.0
    %553 = vmatpush1.msra.mxu0 %v489
    %554 = vmatprep.subr.mxu0 0.0
    %555 = vmatpush1.msra.mxu0 %v488
    %556 = vmatprep.subr.mxu0 0.0
    %557 = vmatpush1.msra.mxu0 %v487
    %558 = vmatprep.subr.mxu0 0.0
    %559 = vmatpush2.msra.mxu0 %v518
    %560 = vmatprep.subr.mxu0 0.0
    %561 = vmatpush2.msra.mxu0 %v517
    %562 = vmatprep.subr.mxu0 0.0
    %563 = vmatpush2.msra.mxu0 %v516
    %564 = vmatprep.subr.mxu0 0.0
    %565 = vmatpush2.msra.mxu0 %v515
    %566 = vmatprep.subr.mxu0 0.0
    %567 = vmatpush2.msra.mxu0 %v514
    %568 = vmatprep.subr.mxu0 0.0
    %569 = vmatpush2.msra.mxu0 %v513
    %570 = vmatprep.subr.mxu0 0.0
    %571 = vmatpush2.msra.mxu0 %v512
    %572 = vmatprep.subr.mxu0 0.0
    %573 = vmatpush2.msra.mxu0 %v511
    %574 = vmatprep.subr.mxu0 0.0
    %575 = vmatpush2.msra.mxu0 %v510
    %576 = vmatprep.subr.mxu0 0.0
    %577 = vmatpush2.msra.mxu0 %v509
    %578 = vmatprep.subr.mxu0 0.0
    %579 = vmatpush2.msra.mxu0 %v508
    %580 = vmatprep.subr.mxu0 0.0
    %581 = vmatpush2.msra.mxu0 %v507
    %582 = vmatprep.subr.mxu0 0.0
    %583 = vmatpush2.msra.mxu0 %v506
    %584 = vmatprep.subr.mxu0 0.0
    %585 = vmatpush2.msra.mxu0 %v505
    %586 = vmatprep.subr.mxu0 0.0
    %587 = vmatpush2.msra.mxu0 %v504
    %588 = vmatprep.subr.mxu0 0.0
    %589 = vmatpush2.msra.mxu0 %v503
    %590 = vmatprep.mubr.f32.mxu0 %v472
    %591 = vmatmul.mubr.f32.gmra.mxu0 %v471
    %v592 = vpop.f32.mrf.mxu0
    %v593 = vadd.f32 %v524, %v592
    %v594 = vpop.f32.mrf.mxu0
    %595 = vmatprep.mubr.f32.mxu0 %v474
    %596 = vmatmul.mubr.f32.gmra.mxu0 %v473
    %v597 = vpop.f32.mrf.mxu0
    %v598 = vadd.f32 %v524, %v597
    %v599 = vpop.f32.mrf.mxu0
    %600 = vmatprep.mubr.f32.mxu0 %v476
    %601 = vmatmul.mubr.f32.gmra.mxu0 %v475
    %v602 = vpop.f32.mrf.mxu0
    %v603 = vadd.f32 %v524, %v602
    %v604 = vpop.f32.mrf.mxu0
    %605 = vmatprep.mubr.f32.mxu0 %v478
    %606 = vmatmul.mubr.f32.gmra.mxu0 %v477
    %v607 = vpop.f32.mrf.mxu0
    %v608 = vadd.f32 %v524, %v607
    %v609 = vpop.f32.mrf.mxu0
    %610 = vmatprep.mubr.f32.mxu0 %v480
    %611 = vmatmul.mubr.f32.gmra.mxu0 %v479
    %v612 = vpop.f32.mrf.mxu0
    %v613 = vadd.f32 %v524, %v612
    %v614 = vpop.f32.mrf.mxu0
    %615 = vmatprep.mubr.f32.mxu0 %v482
    %616 = vmatmul.mubr.f32.gmra.mxu0 %v481
    %v617 = vpop.f32.mrf.mxu0
    %v618 = vadd.f32 %v524, %v617
    %v619 = vpop.f32.mrf.mxu0
    %620 = vmatprep.mubr.f32.mxu0 %v484
    %621 = vmatmul.mubr.f32.gmra.mxu0 %v483
    %v622 = vpop.f32.mrf.mxu0
    %v623 = vadd.f32 %v524, %v622
    %v624 = vpop.f32.mrf.mxu0
    %625 = vmatprep.mubr.f32.mxu0 %v486
    %626 = vmatmul.mubr.f32.gmra.mxu0 %v485
    %v627 = vpop.f32.mrf.mxu0
    %v628 = vadd.f32 %v524, %v627
    %v629 = vpop.f32.mrf.mxu0
    %630 = vdwg.mxu0
    %v631 = vmax.f32 %v593, 0.0
    %v632 = vmax.f32 %v598, 0.0
    %v633 = vmax.f32 %v603, 0.0
    %v634 = vmax.f32 %v608, 0.0
    %v635 = vmax.f32 %v613, 0.0
    %v636 = vmax.f32 %v618, 0.0
    %v637 = vmax.f32 %v623, 0.0
    %v638 = vmax.f32 %v628, 0.0
    %v639 = vld [vmem:[%s10] sm:$0xff]
    %v640 = vld [vmem:[%s10 + $0x8] sm:$0xff]
    %v641 = vld [vmem:[%s10 + $0x10] sm:$0xff]
    %v642 = vld [vmem:[%s10 + $0x18] sm:$0xff]
    %v643 = vld [vmem:[%s10 + $0x20] sm:$0xff]
    %v644 = vld [vmem:[%s10 + $0x28] sm:$0xff]
    %v645 = vld [vmem:[%s10 + $0x30] sm:$0xff]
    %v646 = vld [vmem:[%s10 + $0x38] sm:$0xff]
    %v647 = vld [vmem:[%s10 + $0x40] sm:$0xff]
    %v648 = vld [vmem:[%s10 + $0x48] sm:$0xff]
    %v649 = vld [vmem:[%s10 + $0x50] sm:$0xff]
    %v650 = vld [vmem:[%s10 + $0x58] sm:$0xff]
    %v651 = vld [vmem:[%s10 + $0x60] sm:$0xff]
    %v652 = vld [vmem:[%s10 + $0x68] sm:$0xff]
    %v653 = vld [vmem:[%s10 + $0x70] sm:$0xff]
    %v654 = vld [vmem:[%s10 + $0x78] sm:$0xff]
    %v655 = vld [vmem:[%s12] sm:$0x1]
    %v657 = vlaneseq
    %v658 = vshrl.u32 %v657, 7
    %v659 = vsub.s32 0, %v658
    %v660 = vrot.slane %v655, %v659
    %662 = vmatprep.subr.mxu0 0.0
    %663 = vmatpush1.msra.mxu0 %v654
    %664 = vmatprep.subr.mxu0 0.0
    %665 = vmatpush1.msra.mxu0 %v653
    %666 = vmatprep.subr.mxu0 0.0
    %667 = vmatpush1.msra.mxu0 %v652
    %668 = vmatprep.subr.mxu0 0.0
    %669 = vmatpush1.msra.mxu0 %v651
    %670 = vmatprep.subr.mxu0 0.0
    %671 = vmatpush1.msra.mxu0 %v650
    %672 = vmatprep.subr.mxu0 0.0
    %673 = vmatpush1.msra.mxu0 %v649
    %674 = vmatprep.subr.mxu0 0.0
    %675 = vmatpush1.msra.mxu0 %v648
    %676 = vmatprep.subr.mxu0 0.0
    %677 = vmatpush1.msra.mxu0 %v647
    %678 = vmatprep.subr.mxu0 0.0
    %679 = vmatpush1.msra.mxu0 %v646
    %680 = vmatprep.subr.mxu0 0.0
    %681 = vmatpush1.msra.mxu0 %v645
    %682 = vmatprep.subr.mxu0 0.0
    %683 = vmatpush1.msra.mxu0 %v644
    %684 = vmatprep.subr.mxu0 0.0
    %685 = vmatpush1.msra.mxu0 %v643
    %686 = vmatprep.subr.mxu0 0.0
    %687 = vmatpush1.msra.mxu0 %v642
    %688 = vmatprep.subr.mxu0 0.0
    %689 = vmatpush1.msra.mxu0 %v641
    %690 = vmatprep.subr.mxu0 0.0
    %691 = vmatpush1.msra.mxu0 %v640
    %692 = vmatprep.subr.mxu0 0.0
    %693 = vmatpush1.msra.mxu0 %v639
    %694 = vmatprep.subr.mxu0 0.0
    %695 = vmatpush2.msra.mxu0 0.0
    %696 = vmatprep.subr.mxu0 0.0
    %697 = vmatpush2.msra.mxu0 0.0
    %698 = vmatprep.subr.mxu0 0.0
    %699 = vmatpush2.msra.mxu0 0.0
    %700 = vmatprep.subr.mxu0 0.0
    %701 = vmatpush2.msra.mxu0 0.0
    %702 = vmatprep.subr.mxu0 0.0
    %703 = vmatpush2.msra.mxu0 0.0
    %704 = vmatprep.subr.mxu0 0.0
    %705 = vmatpush2.msra.mxu0 0.0
    %706 = vmatprep.subr.mxu0 0.0
    %707 = vmatpush2.msra.mxu0 0.0
    %708 = vmatprep.subr.mxu0 0.0
    %709 = vmatpush2.msra.mxu0 0.0
    %710 = vmatprep.subr.mxu0 0.0
    %711 = vmatpush2.msra.mxu0 0.0
    %712 = vmatprep.subr.mxu0 0.0
    %713 = vmatpush2.msra.mxu0 0.0
    %714 = vmatprep.subr.mxu0 0.0
    %715 = vmatpush2.msra.mxu0 0.0
    %716 = vmatprep.subr.mxu0 0.0
    %717 = vmatpush2.msra.mxu0 0.0
    %718 = vmatprep.subr.mxu0 0.0
    %719 = vmatpush2.msra.mxu0 0.0
    %720 = vmatprep.subr.mxu0 0.0
    %721 = vmatpush2.msra.mxu0 0.0
    %722 = vmatprep.subr.mxu0 0.0
    %723 = vmatpush2.msra.mxu0 0.0
    %724 = vmatprep.subr.mxu0 0.0
    %725 = vmatpush2.msra.mxu0 0.0
    %726 = vmatprep.mubr.f32.mxu0 0.0
    %727 = vmatmul.mubr.f32.gmra.mxu0 %v631
    %v728 = vpop.f32.mrf.mxu0
    %v729 = vadd.f32 %v660, %v728
    %v730 = vpop.f32.mrf.mxu0
    %731 = vmatprep.mubr.f32.mxu0 0.0
    %732 = vmatmul.mubr.f32.gmra.mxu0 %v632
    %v733 = vpop.f32.mrf.mxu0
    %v734 = vadd.f32 %v660, %v733
    %v735 = vpop.f32.mrf.mxu0
    %736 = vmatprep.mubr.f32.mxu0 0.0
    %737 = vmatmul.mubr.f32.gmra.mxu0 %v633
    %v738 = vpop.f32.mrf.mxu0
    %v739 = vadd.f32 %v660, %v738
    %v740 = vpop.f32.mrf.mxu0
    %741 = vmatprep.mubr.f32.mxu0 0.0
    %742 = vmatmul.mubr.f32.gmra.mxu0 %v634
    %v743 = vpop.f32.mrf.mxu0
    %v744 = vadd.f32 %v660, %v743
    %v745 = vpop.f32.mrf.mxu0
    %746 = vmatprep.mubr.f32.mxu0 0.0
    %747 = vmatmul.mubr.f32.gmra.mxu0 %v635
    %v748 = vpop.f32.mrf.mxu0
    %v749 = vadd.f32 %v660, %v748
    %v750 = vpop.f32.mrf.mxu0
    %751 = vmatprep.mubr.f32.mxu0 0.0
    %752 = vmatmul.mubr.f32.gmra.mxu0 %v636
    %v753 = vpop.f32.mrf.mxu0
    %v754 = vadd.f32 %v660, %v753
    %v755 = vpop.f32.mrf.mxu0
    %756 = vmatprep.mubr.f32.mxu0 0.0
    %757 = vmatmul.mubr.f32.gmra.mxu0 %v637
    %v758 = vpop.f32.mrf.mxu0
    %v759 = vadd.f32 %v660, %v758
    %v760 = vpop.f32.mrf.mxu0
    %761 = vmatprep.mubr.f32.mxu0 0.0
    %762 = vmatmul.mubr.f32.gmra.mxu0 %v638
    %v763 = vpop.f32.mrf.mxu0
    %v764 = vadd.f32 %v660, %v763
    %v765 = vpop.f32.mrf.mxu0
    %766 = vdwg.mxu0
    %767 = vst [vmem:[#allocation2] sm:$0xff] %v729
    %768 = vst [vmem:[#allocation2 + $0x8] sm:$0xff] %v734
    %769 = vst [vmem:[#allocation2 + $0x10] sm:$0xff] %v739
    %770 = vst [vmem:[#allocation2 + $0x18] sm:$0xff] %v744
    %771 = vst [vmem:[#allocation2 + $0x20] sm:$0xff] %v749
    %772 = vst [vmem:[#allocation2 + $0x28] sm:$0xff] %v754
    %773 = vst [vmem:[#allocation2 + $0x30] sm:$0xff] %v759
    %774 = vst [vmem:[#allocation2 + $0x38] sm:$0xff] %v764
    %v775 = vld [vmem:[#allocation6] sm:$0xff]
    %v776 = vld [vmem:[#allocation6 + $0x8] sm:$0xff]
    %v777 = vld [vmem:[#allocation6 + $0x10] sm:$0xff]
    %v778 = vld [vmem:[#allocation6 + $0x18] sm:$0xff]
    %v779 = vld [vmem:[#allocation2] sm:$0xff]
    %vm780 = vcmask 261120
    %v782 = vsel %vm780, 0.0, 0
    %784 = vmatprep.subr.mxu0 0.0
    %785 = vmatpush1.msra.mxu0 0.0
    %786 = vmatprep.subr.mxu0 0.0
    %787 = vmatpush1.msra.mxu0 0.0
    %788 = vmatprep.subr.mxu0 0.0
    %789 = vmatpush1.msra.mxu0 0.0
    %790 = vmatprep.subr.mxu0 0.0
    %791 = vmatpush1.msra.mxu0 0.0
    %792 = vmatprep.subr.mxu0 0.0
    %793 = vmatpush1.msra.mxu0 0.0
    %794 = vmatprep.subr.mxu0 0.0
    %795 = vmatpush1.msra.mxu0 0.0
    %796 = vmatprep.subr.mxu0 0.0
    %797 = vmatpush1.msra.mxu0 0.0
    %798 = vmatprep.subr.mxu0 0.0
    %799 = vmatpush1.msra.mxu0 0.0
    %800 = vmatprep.subr.mxu0 0.0
    %801 = vmatpush1.msra.mxu0 0.0
    %802 = vmatprep.subr.mxu0 0.0
    %803 = vmatpush1.msra.mxu0 0.0
    %804 = vmatprep.subr.mxu0 0.0
    %805 = vmatpush1.msra.mxu0 0.0
    %806 = vmatprep.subr.mxu0 0.0
    %807 = vmatpush1.msra.mxu0 0.0
    %808 = vmatprep.subr.mxu0 0.0
    %809 = vmatpush1.msra.mxu0 %v778
    %810 = vmatprep.subr.mxu0 0.0
    %811 = vmatpush1.msra.mxu0 %v777
    %812 = vmatprep.subr.mxu0 0.0
    %813 = vmatpush1.msra.mxu0 %v776
    %814 = vmatprep.subr.mxu0 0.0
    %815 = vmatpush1.msra.mxu0 %v775
    %816 = vmatprep.subr.mxu0 0.0
    %817 = vmatpush2.msra.mxu0 0.0
    %818 = vmatprep.subr.mxu0 0.0
    %819 = vmatpush2.msra.mxu0 0.0
    %820 = vmatprep.subr.mxu0 0.0
    %821 = vmatpush2.msra.mxu0 0.0
    %822 = vmatprep.subr.mxu0 0.0
    %823 = vmatpush2.msra.mxu0 0.0
    %824 = vmatprep.subr.mxu0 0.0
    %825 = vmatpush2.msra.mxu0 0.0
    %826 = vmatprep.subr.mxu0 0.0
    %827 = vmatpush2.msra.mxu0 0.0
    %828 = vmatprep.subr.mxu0 0.0
    %829 = vmatpush2.msra.mxu0 0.0
    %830 = vmatprep.subr.mxu0 0.0
    %831 = vmatpush2.msra.mxu0 0.0
    %832 = vmatprep.subr.mxu0 0.0
    %833 = vmatpush2.msra.mxu0 0.0
    %834 = vmatprep.subr.mxu0 0.0
    %835 = vmatpush2.msra.mxu0 0.0
    %836 = vmatprep.subr.mxu0 0.0
    %837 = vmatpush2.msra.mxu0 0.0
    %838 = vmatprep.subr.mxu0 0.0
    %839 = vmatpush2.msra.mxu0 0.0
    %840 = vmatprep.subr.mxu0 0.0
    %841 = vmatpush2.msra.mxu0 0.0
    %842 = vmatprep.subr.mxu0 0.0
    %843 = vmatpush2.msra.mxu0 0.0
    %844 = vmatprep.subr.mxu0 0.0
    %845 = vmatpush2.msra.mxu0 0.0
    %846 = vmatprep.subr.mxu0 0.0
    %847 = vmatpush2.msra.mxu0 0.0
    %848 = vmatprep.mubr.f32.mxu0 0.0
    %849 = vmatmul.mubr.f32.gmra.mxu0 %v782
    %v850 = vpop.f32.mrf.mxu0
    %v851 = vadd.f32 0.0, %v850
    %v852 = vpop.f32.mrf.mxu0
    %853 = vdwg.mxu0
    %v854 = vadd.f32 %v779, %v851
    %v855 = vxor.u32 %v854, 2147483648
    %v856 = vmul.f32 %v855, 1.442695
    %v857 = vpow.pop %v856
    %v858 = vadd.f32 %v857, 1.0
    %v859 = vrcp.pop %v858
    %v860 = vmul.f32 1.0, %v859
    %v861 = vtanh.pop %v854
    %v862 = vmul.f32 %v860, 0.0
    %864 = vrot.lane.b32.xlu0 %v861, 64
    %v865 = vpop.permute.xlu0 %864
    %v867 = vmul.f32 %v860, %v865
    %869 = vrot.lane.b32.xlu0 %v867, 32
    %v870 = vpop.permute.xlu0 %869
    %v872 = vadd.f32 %v862, %v870
    %v873 = vtanh.pop %v872
    %875 = vrot.lane.b32.xlu0 %v873, 64
    %v876 = vpop.permute.xlu0 %875
    %v878 = vmul.f32 %v860, %v876
    %880 = vrot.lane.b32.xlu0 %v878, 32
    %v881 = vpop.permute.xlu0 %880
    %883 = vst.msk [vmem:[#allocation3] sm:$0xff] %vm780, %v881
    %s884 = scalar_lea.vmem [#allocation2], 8
    %v885 = vld [vmem:[%s884] sm:$0xff]
    %v886 = vsel %vm780, %v881, 0
    %888 = vmatprep.subr.mxu0 0.0
    %889 = vmatpush1.msra.mxu0 0.0
    %890 = vmatprep.subr.mxu0 0.0
    %891 = vmatpush1.msra.mxu0 0.0
    %892 = vmatprep.subr.mxu0 0.0
    %893 = vmatpush1.msra.mxu0 0.0
    %894 = vmatprep.subr.mxu0 0.0
    %895 = vmatpush1.msra.mxu0 0.0
    %896 = vmatprep.subr.mxu0 0.0
    %897 = vmatpush1.msra.mxu0 0.0
    %898 = vmatprep.subr.mxu0 0.0
    %899 = vmatpush1.msra.mxu0 0.0
    %900 = vmatprep.subr.mxu0 0.0
    %901 = vmatpush1.msra.mxu0 0.0
    %902 = vmatprep.subr.mxu0 0.0
    %903 = vmatpush1.msra.mxu0 0.0
    %904 = vmatprep.subr.mxu0 0.0
    %905 = vmatpush1.msra.mxu0 0.0
    %906 = vmatprep.subr.mxu0 0.0
    %907 = vmatpush1.msra.mxu0 0.0
    %908 = vmatprep.subr.mxu0 0.0
    %909 = vmatpush1.msra.mxu0 0.0
    %910 = vmatprep.subr.mxu0 0.0
    %911 = vmatpush1.msra.mxu0 0.0
    %912 = vmatprep.subr.mxu0 0.0
    %913 = vmatpush1.msra.mxu0 %v778
    %914 = vmatprep.subr.mxu0 0.0
    %915 = vmatpush1.msra.mxu0 %v777
    %916 = vmatprep.subr.mxu0 0.0
    %917 = vmatpush1.msra.mxu0 %v776
    %918 = vmatprep.subr.mxu0 0.0
    %919 = vmatpush1.msra.mxu0 %v775
    %920 = vmatprep.subr.mxu0 0.0
    %921 = vmatpush2.msra.mxu0 0.0
    %922 = vmatprep.subr.mxu0 0.0
    %923 = vmatpush2.msra.mxu0 0.0
    %924 = vmatprep.subr.mxu0 0.0
    %925 = vmatpush2.msra.mxu0 0.0
    %926 = vmatprep.subr.mxu0 0.0
    %927 = vmatpush2.msra.mxu0 0.0
    %928 = vmatprep.subr.mxu0 0.0
    %929 = vmatpush2.msra.mxu0 0.0
    %930 = vmatprep.subr.mxu0 0.0
    %931 = vmatpush2.msra.mxu0 0.0
    %932 = vmatprep.subr.mxu0 0.0
    %933 = vmatpush2.msra.mxu0 0.0
    %934 = vmatprep.subr.mxu0 0.0
    %935 = vmatpush2.msra.mxu0 0.0
    %936 = vmatprep.subr.mxu0 0.0
    %937 = vmatpush2.msra.mxu0 0.0
    %938 = vmatprep.subr.mxu0 0.0
    %939 = vmatpush2.msra.mxu0 0.0
    %940 = vmatprep.subr.mxu0 0.0
    %941 = vmatpush2.msra.mxu0 0.0
    %942 = vmatprep.subr.mxu0 0.0
    %943 = vmatpush2.msra.mxu0 0.0
    %944 = vmatprep.subr.mxu0 0.0
    %945 = vmatpush2.msra.mxu0 0.0
    %946 = vmatprep.subr.mxu0 0.0
    %947 = vmatpush2.msra.mxu0 0.0
    %948 = vmatprep.subr.mxu0 0.0
    %949 = vmatpush2.msra.mxu0 0.0
    %950 = vmatprep.subr.mxu0 0.0
    %951 = vmatpush2.msra.mxu0 0.0
    %952 = vmatprep.mubr.f32.mxu0 0.0
    %953 = vmatmul.mubr.f32.gmra.mxu0 %v886
    %v954 = vpop.f32.mrf.mxu0
    %v955 = vadd.f32 0.0, %v954
    %v956 = vpop.f32.mrf.mxu0
    %957 = vdwg.mxu0
    %v958 = vadd.f32 %v885, %v955
    %v959 = vxor.u32 %v958, 2147483648
    %v960 = vmul.f32 %v959, 1.442695
    %v961 = vpow.pop %v960
    %v962 = vadd.f32 %v961, 1.0
    %v963 = vrcp.pop %v962
    %v964 = vmul.f32 1.0, %v963
    %v965 = vtanh.pop %v958
    %v966 = vmul.f32 %v964, %v872
    %968 = vrot.lane.b32.xlu0 %v965, 64
    %v969 = vpop.permute.xlu0 %968
    %v971 = vmul.f32 %v964, %v969
    %973 = vrot.lane.b32.xlu0 %v971, 32
    %v974 = vpop.permute.xlu0 %973
    %v976 = vadd.f32 %v966, %v974
    %v977 = vtanh.pop %v976
    %979 = vrot.lane.b32.xlu0 %v977, 64
    %v980 = vpop.permute.xlu0 %979
    %v982 = vmul.f32 %v964, %v980
    %984 = vrot.lane.b32.xlu0 %v982, 32
    %v985 = vpop.permute.xlu0 %984
    %s987 = scalar_lea.vmem [#allocation3], 8
    %988 = vst.msk [vmem:[%s987] sm:$0xff] %vm780, %v985
    %s989 = scalar_lea.vmem [#allocation2], 16
    %v990 = vld [vmem:[%s989] sm:$0xff]
    %v991 = vsel %vm780, %v985, 0
    %993 = vmatprep.subr.mxu0 0.0
    %994 = vmatpush1.msra.mxu0 0.0
    %995 = vmatprep.subr.mxu0 0.0
    %996 = vmatpush1.msra.mxu0 0.0
    %997 = vmatprep.subr.mxu0 0.0
    %998 = vmatpush1.msra.mxu0 0.0
    %999 = vmatprep.subr.mxu0 0.0
    %1000 = vmatpush1.msra.mxu0 0.0
    %1001 = vmatprep.subr.mxu0 0.0
    %1002 = vmatpush1.msra.mxu0 0.0
    %1003 = vmatprep.subr.mxu0 0.0
    %1004 = vmatpush1.msra.mxu0 0.0
    %1005 = vmatprep.subr.mxu0 0.0
    %1006 = vmatpush1.msra.mxu0 0.0
    %1007 = vmatprep.subr.mxu0 0.0
    %1008 = vmatpush1.msra.mxu0 0.0
    %1009 = vmatprep.subr.mxu0 0.0
    %1010 = vmatpush1.msra.mxu0 0.0
    %1011 = vmatprep.subr.mxu0 0.0
    %1012 = vmatpush1.msra.mxu0 0.0
    %1013 = vmatprep.subr.mxu0 0.0
    %1014 = vmatpush1.msra.mxu0 0.0
    %1015 = vmatprep.subr.mxu0 0.0
    %1016 = vmatpush1.msra.mxu0 0.0
    %1017 = vmatprep.subr.mxu0 0.0
    %1018 = vmatpush1.msra.mxu0 %v778
    %1019 = vmatprep.subr.mxu0 0.0
    %1020 = vmatpush1.msra.mxu0 %v777
    %1021 = vmatprep.subr.mxu0 0.0
    %1022 = vmatpush1.msra.mxu0 %v776
    %1023 = vmatprep.subr.mxu0 0.0
    %1024 = vmatpush1.msra.mxu0 %v775
    %1025 = vmatprep.subr.mxu0 0.0
    %1026 = vmatpush2.msra.mxu0 0.0
    %1027 = vmatprep.subr.mxu0 0.0
    %1028 = vmatpush2.msra.mxu0 0.0
    %1029 = vmatprep.subr.mxu0 0.0
    %1030 = vmatpush2.msra.mxu0 0.0
    %1031 = vmatprep.subr.mxu0 0.0
    %1032 = vmatpush2.msra.mxu0 0.0
    %1033 = vmatprep.subr.mxu0 0.0
    %1034 = vmatpush2.msra.mxu0 0.0
    %1035 = vmatprep.subr.mxu0 0.0
    %1036 = vmatpush2.msra.mxu0 0.0
    %1037 = vmatprep.subr.mxu0 0.0
    %1038 = vmatpush2.msra.mxu0 0.0
    %1039 = vmatprep.subr.mxu0 0.0
    %1040 = vmatpush2.msra.mxu0 0.0
    %1041 = vmatprep.subr.mxu0 0.0
    %1042 = vmatpush2.msra.mxu0 0.0
    %1043 = vmatprep.subr.mxu0 0.0
    %1044 = vmatpush2.msra.mxu0 0.0
    %1045 = vmatprep.subr.mxu0 0.0
    %1046 = vmatpush2.msra.mxu0 0.0
    %1047 = vmatprep.subr.mxu0 0.0
    %1048 = vmatpush2.msra.mxu0 0.0
    %1049 = vmatprep.subr.mxu0 0.0
    %1050 = vmatpush2.msra.mxu0 0.0
    %1051 = vmatprep.subr.mxu0 0.0
    %1052 = vmatpush2.msra.mxu0 0.0
    %1053 = vmatprep.subr.mxu0 0.0
    %1054 = vmatpush2.msra.mxu0 0.0
    %1055 = vmatprep.subr.mxu0 0.0
    %1056 = vmatpush2.msra.mxu0 0.0
    %1057 = vmatprep.mubr.f32.mxu0 0.0
    %1058 = vmatmul.mubr.f32.gmra.mxu0 %v991
    %v1059 = vpop.f32.mrf.mxu0
    %v1060 = vadd.f32 0.0, %v1059
    %v1061 = vpop.f32.mrf.mxu0
    %1062 = vdwg.mxu0
    %v1063 = vadd.f32 %v990, %v1060
    %v1064 = vxor.u32 %v1063, 2147483648
    %v1065 = vmul.f32 %v1064, 1.442695
    %v1066 = vpow.pop %v1065
    %v1067 = vadd.f32 %v1066, 1.0
    %v1068 = vrcp.pop %v1067
    %v1069 = vmul.f32 1.0, %v1068
    %v1070 = vtanh.pop %v1063
    %v1071 = vmul.f32 %v1069, %v976
    %1073 = vrot.lane.b32.xlu0 %v1070, 64
    %v1074 = vpop.permute.xlu0 %1073
    %v1076 = vmul.f32 %v1069, %v1074
    %1078 = vrot.lane.b32.xlu0 %v1076, 32
    %v1079 = vpop.permute.xlu0 %1078
    %v1081 = vadd.f32 %v1071, %v1079
    %v1082 = vtanh.pop %v1081
    %1084 = vrot.lane.b32.xlu0 %v1082, 64
    %v1085 = vpop.permute.xlu0 %1084
    %v1087 = vmul.f32 %v1069, %v1085
    %1089 = vrot.lane.b32.xlu0 %v1087, 32
    %v1090 = vpop.permute.xlu0 %1089
    %s1092 = scalar_lea.vmem [#allocation3], 16
    %1093 = vst.msk [vmem:[%s1092] sm:$0xff] %vm780, %v1090
    %s1094 = scalar_lea.vmem [#allocation2], 24
    %v1095 = vld [vmem:[%s1094] sm:$0xff]
    %v1096 = vsel %vm780, %v1090, 0
    %1098 = vmatprep.subr.mxu0 0.0
    %1099 = vmatpush1.msra.mxu0 0.0
    %1100 = vmatprep.subr.mxu0 0.0
    %1101 = vmatpush1.msra.mxu0 0.0
    %1102 = vmatprep.subr.mxu0 0.0
    %1103 = vmatpush1.msra.mxu0 0.0
    %1104 = vmatprep.subr.mxu0 0.0
    %1105 = vmatpush1.msra.mxu0 0.0
    %1106 = vmatprep.subr.mxu0 0.0
    %1107 = vmatpush1.msra.mxu0 0.0
    %1108 = vmatprep.subr.mxu0 0.0
    %1109 = vmatpush1.msra.mxu0 0.0
    %1110 = vmatprep.subr.mxu0 0.0
    %1111 = vmatpush1.msra.mxu0 0.0
    %1112 = vmatprep.subr.mxu0 0.0
    %1113 = vmatpush1.msra.mxu0 0.0
    %1114 = vmatprep.subr.mxu0 0.0
    %1115 = vmatpush1.msra.mxu0 0.0
    %1116 = vmatprep.subr.mxu0 0.0
    %1117 = vmatpush1.msra.mxu0 0.0
    %1118 = vmatprep.subr.mxu0 0.0
    %1119 = vmatpush1.msra.mxu0 0.0
    %1120 = vmatprep.subr.mxu0 0.0
    %1121 = vmatpush1.msra.mxu0 0.0
    %1122 = vmatprep.subr.mxu0 0.0
    %1123 = vmatpush1.msra.mxu0 %v778
    %1124 = vmatprep.subr.mxu0 0.0
    %1125 = vmatpush1.msra.mxu0 %v777
    %1126 = vmatprep.subr.mxu0 0.0
    %1127 = vmatpush1.msra.mxu0 %v776
    %1128 = vmatprep.subr.mxu0 0.0
    %1129 = vmatpush1.msra.mxu0 %v775
    %1130 = vmatprep.subr.mxu0 0.0
    %1131 = vmatpush2.msra.mxu0 0.0
    %1132 = vmatprep.subr.mxu0 0.0
    %1133 = vmatpush2.msra.mxu0 0.0
    %1134 = vmatprep.subr.mxu0 0.0
    %1135 = vmatpush2.msra.mxu0 0.0
    %1136 = vmatprep.subr.mxu0 0.0
    %1137 = vmatpush2.msra.mxu0 0.0
    %1138 = vmatprep.subr.mxu0 0.0
    %1139 = vmatpush2.msra.mxu0 0.0
    %1140 = vmatprep.subr.mxu0 0.0
    %1141 = vmatpush2.msra.mxu0 0.0
    %1142 = vmatprep.subr.mxu0 0.0
    %1143 = vmatpush2.msra.mxu0 0.0
    %1144 = vmatprep.subr.mxu0 0.0
    %1145 = vmatpush2.msra.mxu0 0.0
    %1146 = vmatprep.subr.mxu0 0.0
    %1147 = vmatpush2.msra.mxu0 0.0
    %1148 = vmatprep.subr.mxu0 0.0
    %1149 = vmatpush2.msra.mxu0 0.0
    %1150 = vmatprep.subr.mxu0 0.0
    %1151 = vmatpush2.msra.mxu0 0.0
    %1152 = vmatprep.subr.mxu0 0.0
    %1153 = vmatpush2.msra.mxu0 0.0
    %1154 = vmatprep.subr.mxu0 0.0
    %1155 = vmatpush2.msra.mxu0 0.0
    %1156 = vmatprep.subr.mxu0 0.0
    %1157 = vmatpush2.msra.mxu0 0.0
    %1158 = vmatprep.subr.mxu0 0.0
    %1159 = vmatpush2.msra.mxu0 0.0
    %1160 = vmatprep.subr.mxu0 0.0
    %1161 = vmatpush2.msra.mxu0 0.0
    %1162 = vmatprep.mubr.f32.mxu0 0.0
    %1163 = vmatmul.mubr.f32.gmra.mxu0 %v1096
    %v1164 = vpop.f32.mrf.mxu0
    %v1165 = vadd.f32 0.0, %v1164
    %v1166 = vpop.f32.mrf.mxu0
    %1167 = vdwg.mxu0
    %v1168 = vadd.f32 %v1095, %v1165
    %v1169 = vxor.u32 %v1168, 2147483648
    %v1170 = vmul.f32 %v1169, 1.442695
    %v1171 = vpow.pop %v1170
    %v1172 = vadd.f32 %v1171, 1.0
    %v1173 = vrcp.pop %v1172
    %v1174 = vmul.f32 1.0, %v1173
    %v1175 = vtanh.pop %v1168
    %v1176 = vmul.f32 %v1174, %v1081
    %1178 = vrot.lane.b32.xlu0 %v1175, 64
    %v1179 = vpop.permute.xlu0 %1178
    %v1181 = vmul.f32 %v1174, %v1179
    %1183 = vrot.lane.b32.xlu0 %v1181, 32
    %v1184 = vpop.permute.xlu0 %1183
    %v1186 = vadd.f32 %v1176, %v1184
    %v1187 = vtanh.pop %v1186
    %1189 = vrot.lane.b32.xlu0 %v1187, 64
    %v1190 = vpop.permute.xlu0 %1189
    %v1192 = vmul.f32 %v1174, %v1190
    %1194 = vrot.lane.b32.xlu0 %v1192, 32
    %v1195 = vpop.permute.xlu0 %1194
    %s1197 = scalar_lea.vmem [#allocation3], 24
    %1198 = vst.msk [vmem:[%s1197] sm:$0xff] %vm780, %v1195
    %s1199 = scalar_lea.vmem [#allocation2], 32
    %v1200 = vld [vmem:[%s1199] sm:$0xff]
    %v1201 = vsel %vm780, %v1195, 0
    %1203 = vmatprep.subr.mxu0 0.0
    %1204 = vmatpush1.msra.mxu0 0.0
    %1205 = vmatprep.subr.mxu0 0.0
    %1206 = vmatpush1.msra.mxu0 0.0
    %1207 = vmatprep.subr.mxu0 0.0
    %1208 = vmatpush1.msra.mxu0 0.0
    %1209 = vmatprep.subr.mxu0 0.0
    %1210 = vmatpush1.msra.mxu0 0.0
    %1211 = vmatprep.subr.mxu0 0.0
    %1212 = vmatpush1.msra.mxu0 0.0
    %1213 = vmatprep.subr.mxu0 0.0
    %1214 = vmatpush1.msra.mxu0 0.0
    %1215 = vmatprep.subr.mxu0 0.0
    %1216 = vmatpush1.msra.mxu0 0.0
    %1217 = vmatprep.subr.mxu0 0.0
    %1218 = vmatpush1.msra.mxu0 0.0
    %1219 = vmatprep.subr.mxu0 0.0
    %1220 = vmatpush1.msra.mxu0 0.0
    %1221 = vmatprep.subr.mxu0 0.0
    %1222 = vmatpush1.msra.mxu0 0.0
    %1223 = vmatprep.subr.mxu0 0.0
    %1224 = vmatpush1.msra.mxu0 0.0
    %1225 = vmatprep.subr.mxu0 0.0
    %1226 = vmatpush1.msra.mxu0 0.0
    %1227 = vmatprep.subr.mxu0 0.0
    %1228 = vmatpush1.msra.mxu0 %v778
    %1229 = vmatprep.subr.mxu0 0.0
    %1230 = vmatpush1.msra.mxu0 %v777
    %1231 = vmatprep.subr.mxu0 0.0
    %1232 = vmatpush1.msra.mxu0 %v776
    %1233 = vmatprep.subr.mxu0 0.0
    %1234 = vmatpush1.msra.mxu0 %v775
    %1235 = vmatprep.subr.mxu0 0.0
    %1236 = vmatpush2.msra.mxu0 0.0
    %1237 = vmatprep.subr.mxu0 0.0
    %1238 = vmatpush2.msra.mxu0 0.0
    %1239 = vmatprep.subr.mxu0 0.0
    %1240 = vmatpush2.msra.mxu0 0.0
    %1241 = vmatprep.subr.mxu0 0.0
    %1242 = vmatpush2.msra.mxu0 0.0
    %1243 = vmatprep.subr.mxu0 0.0
    %1244 = vmatpush2.msra.mxu0 0.0
    %1245 = vmatprep.subr.mxu0 0.0
    %1246 = vmatpush2.msra.mxu0 0.0
    %1247 = vmatprep.subr.mxu0 0.0
    %1248 = vmatpush2.msra.mxu0 0.0
    %1249 = vmatprep.subr.mxu0 0.0
    %1250 = vmatpush2.msra.mxu0 0.0
    %1251 = vmatprep.subr.mxu0 0.0
    %1252 = vmatpush2.msra.mxu0 0.0
    %1253 = vmatprep.subr.mxu0 0.0
    %1254 = vmatpush2.msra.mxu0 0.0
    %1255 = vmatprep.subr.mxu0 0.0
    %1256 = vmatpush2.msra.mxu0 0.0
    %1257 = vmatprep.subr.mxu0 0.0
    %1258 = vmatpush2.msra.mxu0 0.0
    %1259 = vmatprep.subr.mxu0 0.0
    %1260 = vmatpush2.msra.mxu0 0.0
    %1261 = vmatprep.subr.mxu0 0.0
    %1262 = vmatpush2.msra.mxu0 0.0
    %1263 = vmatprep.subr.mxu0 0.0
    %1264 = vmatpush2.msra.mxu0 0.0
    %1265 = vmatprep.subr.mxu0 0.0
    %1266 = vmatpush2.msra.mxu0 0.0
    %1267 = vmatprep.mubr.f32.mxu0 0.0
    %1268 = vmatmul.mubr.f32.gmra.mxu0 %v1201
    %v1269 = vpop.f32.mrf.mxu0
    %v1270 = vadd.f32 0.0, %v1269
    %v1271 = vpop.f32.mrf.mxu0
    %1272 = vdwg.mxu0
    %v1273 = vadd.f32 %v1200, %v1270
    %v1274 = vxor.u32 %v1273, 2147483648
    %v1275 = vmul.f32 %v1274, 1.442695
    %v1276 = vpow.pop %v1275
    %v1277 = vadd.f32 %v1276, 1.0
    %v1278 = vrcp.pop %v1277
    %v1279 = vmul.f32 1.0, %v1278
    %v1280 = vtanh.pop %v1273
    %v1281 = vmul.f32 %v1279, %v1186
    %1283 = vrot.lane.b32.xlu0 %v1280, 64
    %v1284 = vpop.permute.xlu0 %1283
    %v1286 = vmul.f32 %v1279, %v1284
    %1288 = vrot.lane.b32.xlu0 %v1286, 32
    %v1289 = vpop.permute.xlu0 %1288
    %v1291 = vadd.f32 %v1281, %v1289
    %v1292 = vtanh.pop %v1291
    %1294 = vrot.lane.b32.xlu0 %v1292, 64
    %v1295 = vpop.permute.xlu0 %1294
    %v1297 = vmul.f32 %v1279, %v1295
    %1299 = vrot.lane.b32.xlu0 %v1297, 32
    %v1300 = vpop.permute.xlu0 %1299
    %s1302 = scalar_lea.vmem [#allocation3], 32
    %1303 = vst.msk [vmem:[%s1302] sm:$0xff] %vm780, %v1300
    %s1304 = scalar_lea.vmem [#allocation2], 40
    %v1305 = vld [vmem:[%s1304] sm:$0xff]
    %v1306 = vsel %vm780, %v1300, 0
    %1308 = vmatprep.subr.mxu0 0.0
    %1309 = vmatpush1.msra.mxu0 0.0
    %1310 = vmatprep.subr.mxu0 0.0
    %1311 = vmatpush1.msra.mxu0 0.0
    %1312 = vmatprep.subr.mxu0 0.0
    %1313 = vmatpush1.msra.mxu0 0.0
    %1314 = vmatprep.subr.mxu0 0.0
    %1315 = vmatpush1.msra.mxu0 0.0
    %1316 = vmatprep.subr.mxu0 0.0
    %1317 = vmatpush1.msra.mxu0 0.0
    %1318 = vmatprep.subr.mxu0 0.0
    %1319 = vmatpush1.msra.mxu0 0.0
    %1320 = vmatprep.subr.mxu0 0.0
    %1321 = vmatpush1.msra.mxu0 0.0
    %1322 = vmatprep.subr.mxu0 0.0
    %1323 = vmatpush1.msra.mxu0 0.0
    %1324 = vmatprep.subr.mxu0 0.0
    %1325 = vmatpush1.msra.mxu0 0.0
    %1326 = vmatprep.subr.mxu0 0.0
    %1327 = vmatpush1.msra.mxu0 0.0
    %1328 = vmatprep.subr.mxu0 0.0
    %1329 = vmatpush1.msra.mxu0 0.0
    %1330 = vmatprep.subr.mxu0 0.0
    %1331 = vmatpush1.msra.mxu0 0.0
    %1332 = vmatprep.subr.mxu0 0.0
    %1333 = vmatpush1.msra.mxu0 %v778
    %1334 = vmatprep.subr.mxu0 0.0
    %1335 = vmatpush1.msra.mxu0 %v777
    %1336 = vmatprep.subr.mxu0 0.0
    %1337 = vmatpush1.msra.mxu0 %v776
    %1338 = vmatprep.subr.mxu0 0.0
    %1339 = vmatpush1.msra.mxu0 %v775
    %1340 = vmatprep.subr.mxu0 0.0
    %1341 = vmatpush2.msra.mxu0 0.0
    %1342 = vmatprep.subr.mxu0 0.0
    %1343 = vmatpush2.msra.mxu0 0.0
    %1344 = vmatprep.subr.mxu0 0.0
    %1345 = vmatpush2.msra.mxu0 0.0
    %1346 = vmatprep.subr.mxu0 0.0
    %1347 = vmatpush2.msra.mxu0 0.0
    %1348 = vmatprep.subr.mxu0 0.0
    %1349 = vmatpush2.msra.mxu0 0.0
    %1350 = vmatprep.subr.mxu0 0.0
    %1351 = vmatpush2.msra.mxu0 0.0
    %1352 = vmatprep.subr.mxu0 0.0
    %1353 = vmatpush2.msra.mxu0 0.0
    %1354 = vmatprep.subr.mxu0 0.0
    %1355 = vmatpush2.msra.mxu0 0.0
    %1356 = vmatprep.subr.mxu0 0.0
    %1357 = vmatpush2.msra.mxu0 0.0
    %1358 = vmatprep.subr.mxu0 0.0
    %1359 = vmatpush2.msra.mxu0 0.0
    %1360 = vmatprep.subr.mxu0 0.0
    %1361 = vmatpush2.msra.mxu0 0.0
    %1362 = vmatprep.subr.mxu0 0.0
    %1363 = vmatpush2.msra.mxu0 0.0
    %1364 = vmatprep.subr.mxu0 0.0
    %1365 = vmatpush2.msra.mxu0 0.0
    %1366 = vmatprep.subr.mxu0 0.0
    %1367 = vmatpush2.msra.mxu0 0.0
    %1368 = vmatprep.subr.mxu0 0.0
    %1369 = vmatpush2.msra.mxu0 0.0
    %1370 = vmatprep.subr.mxu0 0.0
    %1371 = vmatpush2.msra.mxu0 0.0
    %1372 = vmatprep.mubr.f32.mxu0 0.0
    %1373 = vmatmul.mubr.f32.gmra.mxu0 %v1306
    %v1374 = vpop.f32.mrf.mxu0
    %v1375 = vadd.f32 0.0, %v1374
    %v1376 = vpop.f32.mrf.mxu0
    %1377 = vdwg.mxu0
    %v1378 = vadd.f32 %v1305, %v1375
    %v1379 = vxor.u32 %v1378, 2147483648
    %v1380 = vmul.f32 %v1379, 1.442695
    %v1381 = vpow.pop %v1380
    %v1382 = vadd.f32 %v1381, 1.0
    %v1383 = vrcp.pop %v1382
    %v1384 = vmul.f32 1.0, %v1383
    %v1385 = vtanh.pop %v1378
    %v1386 = vmul.f32 %v1384, %v1291
    %1388 = vrot.lane.b32.xlu0 %v1385, 64
    %v1389 = vpop.permute.xlu0 %1388
    %v1391 = vmul.f32 %v1384, %v1389
    %1393 = vrot.lane.b32.xlu0 %v1391, 32
    %v1394 = vpop.permute.xlu0 %1393
    %v1396 = vadd.f32 %v1386, %v1394
    %v1397 = vtanh.pop %v1396
    %1399 = vrot.lane.b32.xlu0 %v1397, 64
    %v1400 = vpop.permute.xlu0 %1399
    %v1402 = vmul.f32 %v1384, %v1400
    %1404 = vrot.lane.b32.xlu0 %v1402, 32
    %v1405 = vpop.permute.xlu0 %1404
    %s1407 = scalar_lea.vmem [#allocation3], 40
    %1408 = vst.msk [vmem:[%s1407] sm:$0xff] %vm780, %v1405
    %s1409 = scalar_lea.vmem [#allocation2], 48
    %v1410 = vld [vmem:[%s1409] sm:$0xff]
    %v1411 = vsel %vm780, %v1405, 0
    %1413 = vmatprep.subr.mxu0 0.0
    %1414 = vmatpush1.msra.mxu0 0.0
    %1415 = vmatprep.subr.mxu0 0.0
    %1416 = vmatpush1.msra.mxu0 0.0
    %1417 = vmatprep.subr.mxu0 0.0
    %1418 = vmatpush1.msra.mxu0 0.0
    %1419 = vmatprep.subr.mxu0 0.0
    %1420 = vmatpush1.msra.mxu0 0.0
    %1421 = vmatprep.subr.mxu0 0.0
    %1422 = vmatpush1.msra.mxu0 0.0
    %1423 = vmatprep.subr.mxu0 0.0
    %1424 = vmatpush1.msra.mxu0 0.0
    %1425 = vmatprep.subr.mxu0 0.0
    %1426 = vmatpush1.msra.mxu0 0.0
    %1427 = vmatprep.subr.mxu0 0.0
    %1428 = vmatpush1.msra.mxu0 0.0
    %1429 = vmatprep.subr.mxu0 0.0
    %1430 = vmatpush1.msra.mxu0 0.0
    %1431 = vmatprep.subr.mxu0 0.0
    %1432 = vmatpush1.msra.mxu0 0.0
    %1433 = vmatprep.subr.mxu0 0.0
    %1434 = vmatpush1.msra.mxu0 0.0
    %1435 = vmatprep.subr.mxu0 0.0
    %1436 = vmatpush1.msra.mxu0 0.0
    %1437 = vmatprep.subr.mxu0 0.0
    %1438 = vmatpush1.msra.mxu0 %v778
    %1439 = vmatprep.subr.mxu0 0.0
    %1440 = vmatpush1.msra.mxu0 %v777
    %1441 = vmatprep.subr.mxu0 0.0
    %1442 = vmatpush1.msra.mxu0 %v776
    %1443 = vmatprep.subr.mxu0 0.0
    %1444 = vmatpush1.msra.mxu0 %v775
    %1445 = vmatprep.subr.mxu0 0.0
    %1446 = vmatpush2.msra.mxu0 0.0
    %1447 = vmatprep.subr.mxu0 0.0
    %1448 = vmatpush2.msra.mxu0 0.0
    %1449 = vmatprep.subr.mxu0 0.0
    %1450 = vmatpush2.msra.mxu0 0.0
    %1451 = vmatprep.subr.mxu0 0.0
    %1452 = vmatpush2.msra.mxu0 0.0
    %1453 = vmatprep.subr.mxu0 0.0
    %1454 = vmatpush2.msra.mxu0 0.0
    %1455 = vmatprep.subr.mxu0 0.0
    %1456 = vmatpush2.msra.mxu0 0.0
    %1457 = vmatprep.subr.mxu0 0.0
    %1458 = vmatpush2.msra.mxu0 0.0
    %1459 = vmatprep.subr.mxu0 0.0
    %1460 = vmatpush2.msra.mxu0 0.0
    %1461 = vmatprep.subr.mxu0 0.0
    %1462 = vmatpush2.msra.mxu0 0.0
    %1463 = vmatprep.subr.mxu0 0.0
    %1464 = vmatpush2.msra.mxu0 0.0
    %1465 = vmatprep.subr.mxu0 0.0
    %1466 = vmatpush2.msra.mxu0 0.0
    %1467 = vmatprep.subr.mxu0 0.0
    %1468 = vmatpush2.msra.mxu0 0.0
    %1469 = vmatprep.subr.mxu0 0.0
    %1470 = vmatpush2.msra.mxu0 0.0
    %1471 = vmatprep.subr.mxu0 0.0
    %1472 = vmatpush2.msra.mxu0 0.0
    %1473 = vmatprep.subr.mxu0 0.0
    %1474 = vmatpush2.msra.mxu0 0.0
    %1475 = vmatprep.subr.mxu0 0.0
    %1476 = vmatpush2.msra.mxu0 0.0
    %1477 = vmatprep.mubr.f32.mxu0 0.0
    %1478 = vmatmul.mubr.f32.gmra.mxu0 %v1411
    %v1479 = vpop.f32.mrf.mxu0
    %v1480 = vadd.f32 0.0, %v1479
    %v1481 = vpop.f32.mrf.mxu0
    %1482 = vdwg.mxu0
    %v1483 = vadd.f32 %v1410, %v1480
    %v1484 = vxor.u32 %v1483, 2147483648
    %v1485 = vmul.f32 %v1484, 1.442695
    %v1486 = vpow.pop %v1485
    %v1487 = vadd.f32 %v1486, 1.0
    %v1488 = vrcp.pop %v1487
    %v1489 = vmul.f32 1.0, %v1488
    %v1490 = vtanh.pop %v1483
    %v1491 = vmul.f32 %v1489, %v1396
    %1493 = vrot.lane.b32.xlu0 %v1490, 64
    %v1494 = vpop.permute.xlu0 %1493
    %v1496 = vmul.f32 %v1489, %v1494
    %1498 = vrot.lane.b32.xlu0 %v1496, 32
    %v1499 = vpop.permute.xlu0 %1498
    %v1501 = vadd.f32 %v1491, %v1499
    %v1502 = vtanh.pop %v1501
    %1504 = vrot.lane.b32.xlu0 %v1502, 64
    %v1505 = vpop.permute.xlu0 %1504
    %v1507 = vmul.f32 %v1489, %v1505
    %1509 = vrot.lane.b32.xlu0 %v1507, 32
    %v1510 = vpop.permute.xlu0 %1509
    %s1512 = scalar_lea.vmem [#allocation3], 48
    %1513 = vst.msk [vmem:[%s1512] sm:$0xff] %vm780, %v1510
    %s1514 = scalar_lea.vmem [#allocation2], 56
    %v1515 = vld [vmem:[%s1514] sm:$0xff]
    %v1516 = vsel %vm780, %v1510, 0
    %1518 = vmatprep.subr.mxu0 0.0
    %1519 = vmatpush1.msra.mxu0 0.0
    %1520 = vmatprep.subr.mxu0 0.0
    %1521 = vmatpush1.msra.mxu0 0.0
    %1522 = vmatprep.subr.mxu0 0.0
    %1523 = vmatpush1.msra.mxu0 0.0
    %1524 = vmatprep.subr.mxu0 0.0
    %1525 = vmatpush1.msra.mxu0 0.0
    %1526 = vmatprep.subr.mxu0 0.0
    %1527 = vmatpush1.msra.mxu0 0.0
    %1528 = vmatprep.subr.mxu0 0.0
    %1529 = vmatpush1.msra.mxu0 0.0
    %1530 = vmatprep.subr.mxu0 0.0
    %1531 = vmatpush1.msra.mxu0 0.0
    %1532 = vmatprep.subr.mxu0 0.0
    %1533 = vmatpush1.msra.mxu0 0.0
    %1534 = vmatprep.subr.mxu0 0.0
    %1535 = vmatpush1.msra.mxu0 0.0
    %1536 = vmatprep.subr.mxu0 0.0
    %1537 = vmatpush1.msra.mxu0 0.0
    %1538 = vmatprep.subr.mxu0 0.0
    %1539 = vmatpush1.msra.mxu0 0.0
    %1540 = vmatprep.subr.mxu0 0.0
    %1541 = vmatpush1.msra.mxu0 0.0
    %1542 = vmatprep.subr.mxu0 0.0
    %1543 = vmatpush1.msra.mxu0 %v778
    %1544 = vmatprep.subr.mxu0 0.0
    %1545 = vmatpush1.msra.mxu0 %v777
    %1546 = vmatprep.subr.mxu0 0.0
    %1547 = vmatpush1.msra.mxu0 %v776
    %1548 = vmatprep.subr.mxu0 0.0
    %1549 = vmatpush1.msra.mxu0 %v775
    %1550 = vmatprep.subr.mxu0 0.0
    %1551 = vmatpush2.msra.mxu0 0.0
    %1552 = vmatprep.subr.mxu0 0.0
    %1553 = vmatpush2.msra.mxu0 0.0
    %1554 = vmatprep.subr.mxu0 0.0
    %1555 = vmatpush2.msra.mxu0 0.0
    %1556 = vmatprep.subr.mxu0 0.0
    %1557 = vmatpush2.msra.mxu0 0.0
    %1558 = vmatprep.subr.mxu0 0.0
    %1559 = vmatpush2.msra.mxu0 0.0
    %1560 = vmatprep.subr.mxu0 0.0
    %1561 = vmatpush2.msra.mxu0 0.0
    %1562 = vmatprep.subr.mxu0 0.0
    %1563 = vmatpush2.msra.mxu0 0.0
    %1564 = vmatprep.subr.mxu0 0.0
    %1565 = vmatpush2.msra.mxu0 0.0
    %1566 = vmatprep.subr.mxu0 0.0
    %1567 = vmatpush2.msra.mxu0 0.0
    %1568 = vmatprep.subr.mxu0 0.0
    %1569 = vmatpush2.msra.mxu0 0.0
    %1570 = vmatprep.subr.mxu0 0.0
    %1571 = vmatpush2.msra.mxu0 0.0
    %1572 = vmatprep.subr.mxu0 0.0
    %1573 = vmatpush2.msra.mxu0 0.0
    %1574 = vmatprep.subr.mxu0 0.0
    %1575 = vmatpush2.msra.mxu0 0.0
    %1576 = vmatprep.subr.mxu0 0.0
    %1577 = vmatpush2.msra.mxu0 0.0
    %1578 = vmatprep.subr.mxu0 0.0
    %1579 = vmatpush2.msra.mxu0 0.0
    %1580 = vmatprep.subr.mxu0 0.0
    %1581 = vmatpush2.msra.mxu0 0.0
    %1582 = vmatprep.mubr.f32.mxu0 0.0
    %1583 = vmatmul.mubr.f32.gmra.mxu0 %v1516
    %v1584 = vpop.f32.mrf.mxu0
    %v1585 = vadd.f32 0.0, %v1584
    %v1586 = vpop.f32.mrf.mxu0
    %1587 = vdwg.mxu0
    %v1588 = vadd.f32 %v1515, %v1585
    %v1589 = vxor.u32 %v1588, 2147483648
    %v1590 = vmul.f32 %v1589, 1.442695
    %v1591 = vpow.pop %v1590
    %v1592 = vadd.f32 %v1591, 1.0
    %v1593 = vrcp.pop %v1592
    %v1594 = vmul.f32 1.0, %v1593
    %v1595 = vtanh.pop %v1588
    %v1596 = vmul.f32 %v1594, %v1501
    %1598 = vrot.lane.b32.xlu0 %v1595, 64
    %v1599 = vpop.permute.xlu0 %1598
    %v1601 = vmul.f32 %v1594, %v1599
    %1603 = vrot.lane.b32.xlu0 %v1601, 32
    %v1604 = vpop.permute.xlu0 %1603
    %v1606 = vadd.f32 %v1596, %v1604
    %v1607 = vtanh.pop %v1606
    %1609 = vrot.lane.b32.xlu0 %v1607, 64
    %v1610 = vpop.permute.xlu0 %1609
    %v1612 = vmul.f32 %v1594, %v1610
    %1614 = vrot.lane.b32.xlu0 %v1612, 32
    %v1615 = vpop.permute.xlu0 %1614
    %s1617 = scalar_lea.vmem [#allocation3], 56
    %1618 = vst.msk [vmem:[%s1617] sm:$0xff] %vm780, %v1615
    %v1619 = vld [vmem:[#allocation3] sm:$0xff]
    %v1620 = vld [vmem:[#allocation3 + $0x8] sm:$0xff]
    %v1621 = vld [vmem:[#allocation3 + $0x10] sm:$0xff]
    %v1622 = vld [vmem:[#allocation3 + $0x18] sm:$0xff]
    %v1623 = vld [vmem:[#allocation3 + $0x20] sm:$0xff]
    %v1624 = vld [vmem:[#allocation3 + $0x28] sm:$0xff]
    %v1625 = vld [vmem:[#allocation3 + $0x30] sm:$0xff]
    %v1626 = vld [vmem:[#allocation3 + $0x38] sm:$0xff]
    %v1627 = vld [vmem:[#allocation8] sm:$0xff]
    %v1628 = vld [vmem:[#allocation8 + $0x8] sm:$0xff]
    %v1629 = vld [vmem:[#allocation8 + $0x10] sm:$0xff]
    %v1630 = vld [vmem:[#allocation8 + $0x18] sm:$0xff]
    %v1631 = vld [vmem:[%s14] sm:$0x1]
    %v1633 = vlaneseq
    %v1634 = vshrl.u32 %v1633, 7
    %v1635 = vsub.s32 0, %v1634
    %v1636 = vrot.slane %v1631, %v1635
    %v1639 = vsel %vm780, %v1619, 0
    %v1642 = vsel %vm780, %v1620, 0
    %v1645 = vsel %vm780, %v1621, 0
    %v1648 = vsel %vm780, %v1622, 0
    %v1651 = vsel %vm780, %v1623, 0
    %v1654 = vsel %vm780, %v1624, 0
    %v1657 = vsel %vm780, %v1625, 0
    %v1660 = vsel %vm780, %v1626, 0
    %1662 = vmatprep.subr.mxu0 0.0
    %1663 = vmatpush1.msra.mxu0 0.0
    %1664 = vmatprep.subr.mxu0 0.0
    %1665 = vmatpush1.msra.mxu0 0.0
    %1666 = vmatprep.subr.mxu0 0.0
    %1667 = vmatpush1.msra.mxu0 0.0
    %1668 = vmatprep.subr.mxu0 0.0
    %1669 = vmatpush1.msra.mxu0 0.0
    %1670 = vmatprep.subr.mxu0 0.0
    %1671 = vmatpush1.msra.mxu0 0.0
    %1672 = vmatprep.subr.mxu0 0.0
    %1673 = vmatpush1.msra.mxu0 0.0
    %1674 = vmatprep.subr.mxu0 0.0
    %1675 = vmatpush1.msra.mxu0 0.0
    %1676 = vmatprep.subr.mxu0 0.0
    %1677 = vmatpush1.msra.mxu0 0.0
    %1678 = vmatprep.subr.mxu0 0.0
    %1679 = vmatpush1.msra.mxu0 0.0
    %1680 = vmatprep.subr.mxu0 0.0
    %1681 = vmatpush1.msra.mxu0 0.0
    %1682 = vmatprep.subr.mxu0 0.0
    %1683 = vmatpush1.msra.mxu0 0.0
    %1684 = vmatprep.subr.mxu0 0.0
    %1685 = vmatpush1.msra.mxu0 0.0
    %1686 = vmatprep.subr.mxu0 0.0
    %1687 = vmatpush1.msra.mxu0 %v1630
    %1688 = vmatprep.subr.mxu0 0.0
    %1689 = vmatpush1.msra.mxu0 %v1629
    %1690 = vmatprep.subr.mxu0 0.0
    %1691 = vmatpush1.msra.mxu0 %v1628
    %1692 = vmatprep.subr.mxu0 0.0
    %1693 = vmatpush1.msra.mxu0 %v1627
    %1694 = vmatprep.subr.mxu0 0.0
    %1695 = vmatpush2.msra.mxu0 0.0
    %1696 = vmatprep.subr.mxu0 0.0
    %1697 = vmatpush2.msra.mxu0 0.0
    %1698 = vmatprep.subr.mxu0 0.0
    %1699 = vmatpush2.msra.mxu0 0.0
    %1700 = vmatprep.subr.mxu0 0.0
    %1701 = vmatpush2.msra.mxu0 0.0
    %1702 = vmatprep.subr.mxu0 0.0
    %1703 = vmatpush2.msra.mxu0 0.0
    %1704 = vmatprep.subr.mxu0 0.0
    %1705 = vmatpush2.msra.mxu0 0.0
    %1706 = vmatprep.subr.mxu0 0.0
    %1707 = vmatpush2.msra.mxu0 0.0
    %1708 = vmatprep.subr.mxu0 0.0
    %1709 = vmatpush2.msra.mxu0 0.0
    %1710 = vmatprep.subr.mxu0 0.0
    %1711 = vmatpush2.msra.mxu0 0.0
    %1712 = vmatprep.subr.mxu0 0.0
    %1713 = vmatpush2.msra.mxu0 0.0
    %1714 = vmatprep.subr.mxu0 0.0
    %1715 = vmatpush2.msra.mxu0 0.0
    %1716 = vmatprep.subr.mxu0 0.0
    %1717 = vmatpush2.msra.mxu0 0.0
    %1718 = vmatprep.subr.mxu0 0.0
    %1719 = vmatpush2.msra.mxu0 0.0
    %1720 = vmatprep.subr.mxu0 0.0
    %1721 = vmatpush2.msra.mxu0 0.0
    %1722 = vmatprep.subr.mxu0 0.0
    %1723 = vmatpush2.msra.mxu0 0.0
    %1724 = vmatprep.subr.mxu0 0.0
    %1725 = vmatpush2.msra.mxu0 0.0
    %1726 = vmatprep.mubr.f32.mxu0 0.0
    %1727 = vmatmul.mubr.f32.gmra.mxu0 %v1639
    %v1728 = vpop.f32.mrf.mxu0
    %v1729 = vadd.f32 %v1636, %v1728
    %v1730 = vpop.f32.mrf.mxu0
    %1731 = vmatprep.mubr.f32.mxu0 0.0
    %1732 = vmatmul.mubr.f32.gmra.mxu0 %v1642
    %v1733 = vpop.f32.mrf.mxu0
    %v1734 = vadd.f32 %v1636, %v1733
    %v1735 = vpop.f32.mrf.mxu0
    %1736 = vmatprep.mubr.f32.mxu0 0.0
    %1737 = vmatmul.mubr.f32.gmra.mxu0 %v1645
    %v1738 = vpop.f32.mrf.mxu0
    %v1739 = vadd.f32 %v1636, %v1738
    %v1740 = vpop.f32.mrf.mxu0
    %1741 = vmatprep.mubr.f32.mxu0 0.0
    %1742 = vmatmul.mubr.f32.gmra.mxu0 %v1648
    %v1743 = vpop.f32.mrf.mxu0
    %v1744 = vadd.f32 %v1636, %v1743
    %v1745 = vpop.f32.mrf.mxu0
    %1746 = vmatprep.mubr.f32.mxu0 0.0
    %1747 = vmatmul.mubr.f32.gmra.mxu0 %v1651
    %v1748 = vpop.f32.mrf.mxu0
    %v1749 = vadd.f32 %v1636, %v1748
    %v1750 = vpop.f32.mrf.mxu0
    %1751 = vmatprep.mubr.f32.mxu0 0.0
    %1752 = vmatmul.mubr.f32.gmra.mxu0 %v1654
    %v1753 = vpop.f32.mrf.mxu0
    %v1754 = vadd.f32 %v1636, %v1753
    %v1755 = vpop.f32.mrf.mxu0
    %1756 = vmatprep.mubr.f32.mxu0 0.0
    %1757 = vmatmul.mubr.f32.gmra.mxu0 %v1657
    %v1758 = vpop.f32.mrf.mxu0
    %v1759 = vadd.f32 %v1636, %v1758
    %v1760 = vpop.f32.mrf.mxu0
    %1761 = vmatprep.mubr.f32.mxu0 0.0
    %1762 = vmatmul.mubr.f32.gmra.mxu0 %v1660
    %v1763 = vpop.f32.mrf.mxu0
    %v1764 = vadd.f32 %v1636, %v1763
    %v1765 = vpop.f32.mrf.mxu0
    %1766 = vdwg.mxu0
    %v1767 = vmax.f32 %v1729, 0.0
    %v1768 = vmax.f32 %v1734, 0.0
    %v1769 = vmax.f32 %v1739, 0.0
    %v1770 = vmax.f32 %v1744, 0.0
    %v1771 = vmax.f32 %v1749, 0.0
    %v1772 = vmax.f32 %v1754, 0.0
    %v1773 = vmax.f32 %v1759, 0.0
    %v1774 = vmax.f32 %v1764, 0.0
    %v1775 = vld [vmem:[%s15] sm:$0xff]
    %v1776 = vld [vmem:[%s15 + $0x8] sm:$0xff]
    %v1777 = vld [vmem:[%s15 + $0x10] sm:$0xff]
    %v1778 = vld [vmem:[%s15 + $0x18] sm:$0xff]
    %v1779 = vld [vmem:[%s15 + $0x20] sm:$0xff]
    %v1780 = vld [vmem:[%s15 + $0x28] sm:$0xff]
    %v1781 = vld [vmem:[%s15 + $0x30] sm:$0xff]
    %v1782 = vld [vmem:[%s15 + $0x38] sm:$0xff]
    %v1783 = vld [vmem:[%s15 + $0x40] sm:$0xff]
    %v1784 = vld [vmem:[%s15 + $0x48] sm:$0xff]
    %v1785 = vld [vmem:[%s15 + $0x50] sm:$0xff]
    %v1786 = vld [vmem:[%s15 + $0x58] sm:$0xff]
    %v1787 = vld [vmem:[%s15 + $0x60] sm:$0xff]
    %v1788 = vld [vmem:[%s15 + $0x68] sm:$0xff]
    %v1789 = vld [vmem:[%s15 + $0x70] sm:$0xff]
    %v1790 = vld [vmem:[%s15 + $0x78] sm:$0xff]
    %v1791 = vld [vmem:[%s16] sm:$0x1]
    %v1793 = vlaneseq
    %v1794 = vshrl.u32 %v1793, 7
    %v1795 = vsub.s32 0, %v1794
    %v1796 = vrot.slane %v1791, %v1795
    %1798 = vmatprep.subr.mxu0 0.0
    %1799 = vmatpush1.msra.mxu0 %v1790
    %1800 = vmatprep.subr.mxu0 0.0
    %1801 = vmatpush1.msra.mxu0 %v1789
    %1802 = vmatprep.subr.mxu0 0.0
    %1803 = vmatpush1.msra.mxu0 %v1788
    %1804 = vmatprep.subr.mxu0 0.0
    %1805 = vmatpush1.msra.mxu0 %v1787
    %1806 = vmatprep.subr.mxu0 0.0
    %1807 = vmatpush1.msra.mxu0 %v1786
    %1808 = vmatprep.subr.mxu0 0.0
    %1809 = vmatpush1.msra.mxu0 %v1785
    %1810 = vmatprep.subr.mxu0 0.0
    %1811 = vmatpush1.msra.mxu0 %v1784
    %1812 = vmatprep.subr.mxu0 0.0
    %1813 = vmatpush1.msra.mxu0 %v1783
    %1814 = vmatprep.subr.mxu0 0.0
    %1815 = vmatpush1.msra.mxu0 %v1782
    %1816 = vmatprep.subr.mxu0 0.0
    %1817 = vmatpush1.msra.mxu0 %v1781
    %1818 = vmatprep.subr.mxu0 0.0
    %1819 = vmatpush1.msra.mxu0 %v1780
    %1820 = vmatprep.subr.mxu0 0.0
    %1821 = vmatpush1.msra.mxu0 %v1779
    %1822 = vmatprep.subr.mxu0 0.0
    %1823 = vmatpush1.msra.mxu0 %v1778
    %1824 = vmatprep.subr.mxu0 0.0
    %1825 = vmatpush1.msra.mxu0 %v1777
    %1826 = vmatprep.subr.mxu0 0.0
    %1827 = vmatpush1.msra.mxu0 %v1776
    %1828 = vmatprep.subr.mxu0 0.0
    %1829 = vmatpush1.msra.mxu0 %v1775
    %1830 = vmatprep.subr.mxu0 0.0
    %1831 = vmatpush2.msra.mxu0 0.0
    %1832 = vmatprep.subr.mxu0 0.0
    %1833 = vmatpush2.msra.mxu0 0.0
    %1834 = vmatprep.subr.mxu0 0.0
    %1835 = vmatpush2.msra.mxu0 0.0
    %1836 = vmatprep.subr.mxu0 0.0
    %1837 = vmatpush2.msra.mxu0 0.0
    %1838 = vmatprep.subr.mxu0 0.0
    %1839 = vmatpush2.msra.mxu0 0.0
    %1840 = vmatprep.subr.mxu0 0.0
    %1841 = vmatpush2.msra.mxu0 0.0
    %1842 = vmatprep.subr.mxu0 0.0
    %1843 = vmatpush2.msra.mxu0 0.0
    %1844 = vmatprep.subr.mxu0 0.0
    %1845 = vmatpush2.msra.mxu0 0.0
    %1846 = vmatprep.subr.mxu0 0.0
    %1847 = vmatpush2.msra.mxu0 0.0
    %1848 = vmatprep.subr.mxu0 0.0
    %1849 = vmatpush2.msra.mxu0 0.0
    %1850 = vmatprep.subr.mxu0 0.0
    %1851 = vmatpush2.msra.mxu0 0.0
    %1852 = vmatprep.subr.mxu0 0.0
    %1853 = vmatpush2.msra.mxu0 0.0
    %1854 = vmatprep.subr.mxu0 0.0
    %1855 = vmatpush2.msra.mxu0 0.0
    %1856 = vmatprep.subr.mxu0 0.0
    %1857 = vmatpush2.msra.mxu0 0.0
    %1858 = vmatprep.subr.mxu0 0.0
    %1859 = vmatpush2.msra.mxu0 0.0
    %1860 = vmatprep.subr.mxu0 0.0
    %1861 = vmatpush2.msra.mxu0 0.0
    %1862 = vmatprep.mubr.f32.mxu0 0.0
    %1863 = vmatmul.mubr.f32.gmra.mxu0 %v1767
    %v1864 = vpop.f32.mrf.mxu0
    %v1865 = vadd.f32 %v1796, %v1864
    %v1866 = vpop.f32.mrf.mxu0
    %1867 = vmatprep.mubr.f32.mxu0 0.0
    %1868 = vmatmul.mubr.f32.gmra.mxu0 %v1768
    %v1869 = vpop.f32.mrf.mxu0
    %v1870 = vadd.f32 %v1796, %v1869
    %v1871 = vpop.f32.mrf.mxu0
    %1872 = vmatprep.mubr.f32.mxu0 0.0
    %1873 = vmatmul.mubr.f32.gmra.mxu0 %v1769
    %v1874 = vpop.f32.mrf.mxu0
    %v1875 = vadd.f32 %v1796, %v1874
    %v1876 = vpop.f32.mrf.mxu0
    %1877 = vmatprep.mubr.f32.mxu0 0.0
    %1878 = vmatmul.mubr.f32.gmra.mxu0 %v1770
    %v1879 = vpop.f32.mrf.mxu0
    %v1880 = vadd.f32 %v1796, %v1879
    %v1881 = vpop.f32.mrf.mxu0
    %1882 = vmatprep.mubr.f32.mxu0 0.0
    %1883 = vmatmul.mubr.f32.gmra.mxu0 %v1771
    %v1884 = vpop.f32.mrf.mxu0
    %v1885 = vadd.f32 %v1796, %v1884
    %v1886 = vpop.f32.mrf.mxu0
    %1887 = vmatprep.mubr.f32.mxu0 0.0
    %1888 = vmatmul.mubr.f32.gmra.mxu0 %v1772
    %v1889 = vpop.f32.mrf.mxu0
    %v1890 = vadd.f32 %v1796, %v1889
    %v1891 = vpop.f32.mrf.mxu0
    %1892 = vmatprep.mubr.f32.mxu0 0.0
    %1893 = vmatmul.mubr.f32.gmra.mxu0 %v1773
    %v1894 = vpop.f32.mrf.mxu0
    %v1895 = vadd.f32 %v1796, %v1894
    %v1896 = vpop.f32.mrf.mxu0
    %1897 = vmatprep.mubr.f32.mxu0 0.0
    %1898 = vmatmul.mubr.f32.gmra.mxu0 %v1774
    %v1899 = vpop.f32.mrf.mxu0
    %v1900 = vadd.f32 %v1796, %v1899
    %v1901 = vpop.f32.mrf.mxu0
    %1902 = vdwg.mxu0
    %v1903 = vmul.f32 %v1865, %v1865
    %v1904 = vmul.f32 %v1870, %v1870
    %v1905 = vmul.f32 %v1875, %v1875
    %v1906 = vmul.f32 %v1880, %v1880
    %v1907 = vmul.f32 %v1885, %v1885
    %v1908 = vmul.f32 %v1890, %v1890
    %v1909 = vmul.f32 %v1895, %v1895
    %v1910 = vmul.f32 %v1900, %v1900
    %vm1911 = vcmask 31744
    %v1912 = vsel %vm1911, %v1903, 0.0
    %1913 = vadd.xlane.f32.xlu0 %v1912
    %v1914 = vpop.xlane.xlu0 %1913
    %v1915 = vsel %vm1911, %v1904, 0.0
    %1916 = vadd.xlane.f32.xlu0 %v1915
    %v1917 = vpop.xlane.xlu0 %1916
    %v1918 = vsel %vm1911, %v1905, 0.0
    %1919 = vadd.xlane.f32.xlu0 %v1918
    %v1920 = vpop.xlane.xlu0 %1919
    %v1921 = vsel %vm1911, %v1906, 0.0
    %1922 = vadd.xlane.f32.xlu0 %v1921
    %v1923 = vpop.xlane.xlu0 %1922
    %v1924 = vsel %vm1911, %v1907, 0.0
    %1925 = vadd.xlane.f32.xlu0 %v1924
    %v1926 = vpop.xlane.xlu0 %1925
    %v1927 = vsel %vm1911, %v1908, 0.0
    %1928 = vadd.xlane.f32.xlu0 %v1927
    %v1929 = vpop.xlane.xlu0 %1928
    %v1930 = vsel %vm1911, %v1909, 0.0
    %1931 = vadd.xlane.f32.xlu0 %v1930
    %v1932 = vpop.xlane.xlu0 %1931
    %v1933 = vsel %vm1911, %v1910, 0.0
    %1934 = vadd.xlane.f32.xlu0 %v1933
    %v1935 = vpop.xlane.xlu0 %1934
    %v1936 = vrsqrt.pop %v1914
    %v1937 = vrsqrt.pop %v1917
    %v1938 = vrsqrt.pop %v1920
    %v1939 = vrsqrt.pop %v1923
    %v1940 = vrsqrt.pop %v1926
    %v1941 = vrsqrt.pop %v1929
    %v1942 = vrsqrt.pop %v1932
    %v1943 = vrsqrt.pop %v1935
    %v1944 = vmul.f32 %v1865, %v1936
    %v1945 = vmul.f32 %v1870, %v1937
    %v1946 = vmul.f32 %v1875, %v1938
    %v1947 = vmul.f32 %v1880, %v1939
    %v1948 = vmul.f32 %v1885, %v1940
    %v1949 = vmul.f32 %v1890, %v1941
    %v1950 = vmul.f32 %v1895, %v1942
    %v1951 = vmul.f32 %v1900, %v1943
    %1952 = vst.msk [vmem:[%s17] sm:$0xff] %vm1911, %v1944
    %1953 = vst.msk [vmem:[%s17 + $0x8] sm:$0xff] %vm1911, %v1945
    %1954 = vst.msk [vmem:[%s17 + $0x10] sm:$0xff] %vm1911, %v1946
    %1955 = vst.msk [vmem:[%s17 + $0x18] sm:$0xff] %vm1911, %v1947
    %1956 = vst.msk [vmem:[%s17 + $0x20] sm:$0xff] %vm1911, %v1948
    %1957 = vst.msk [vmem:[%s17 + $0x28] sm:$0xff] %vm1911, %v1949
    %1958 = vst.msk [vmem:[%s17 + $0x30] sm:$0xff] %vm1911, %v1950
    %1959 = vst.msk [vmem:[%s17 + $0x38] sm:$0xff] %vm1911, %v1951
    %v1960 = vld [vmem:[%s1] sm:$0xff]
    %v1961 = vld [vmem:[%s1 + $0x8] sm:$0xff]
    %v1962 = vld [vmem:[%s1 + $0x10] sm:$0xff]
    %v1963 = vld [vmem:[%s1 + $0x18] sm:$0xff]
    %v1964 = vld [vmem:[%s1 + $0x20] sm:$0xff]
    %v1965 = vld [vmem:[%s1 + $0x28] sm:$0xff]
    %v1966 = vld [vmem:[%s1 + $0x30] sm:$0xff]
    %v1967 = vld [vmem:[%s1 + $0x38] sm:$0xff]
    %v1968 = vld [vmem:[%s2] sm:$0xff]
    %v1969 = vld [vmem:[%s2 + $0x8] sm:$0xff]
    %v1970 = vld [vmem:[%s2 + $0x10] sm:$0xff]
    %v1971 = vld [vmem:[%s2 + $0x18] sm:$0xff]
    %v1972 = vld [vmem:[%s2 + $0x20] sm:$0xff]
    %v1973 = vld [vmem:[%s2 + $0x28] sm:$0xff]
    %v1974 = vld [vmem:[%s2 + $0x30] sm:$0xff]
    %v1975 = vld [vmem:[%s2 + $0x38] sm:$0xff]
    %v1976 = vld [vmem:[%s3] sm:$0xff]
    %v1977 = vld [vmem:[%s3 + $0x8] sm:$0xff]
    %v1978 = vld [vmem:[%s3 + $0x10] sm:$0xff]
    %v1979 = vld [vmem:[%s3 + $0x18] sm:$0xff]
    %v1980 = vld [vmem:[%s3 + $0x20] sm:$0xff]
    %v1981 = vld [vmem:[%s3 + $0x28] sm:$0xff]
    %v1982 = vld [vmem:[%s3 + $0x30] sm:$0xff]
    %v1983 = vld [vmem:[%s3 + $0x38] sm:$0xff]
    %1985 = vset.pattern.permute.xlu0 2
    %1986 = vperm.xlu0 %1985, %v1944
    %v1987 = vpop.permute.xlu0 %1986
    %1990 = vset.pattern.permute.xlu0 2
    %1991 = vperm.xlu0 %1990, %v1945
    %v1992 = vpop.permute.xlu0 %1991
    %1995 = vset.pattern.permute.xlu0 2
    %1996 = vperm.xlu0 %1995, %v1946
    %v1997 = vpop.permute.xlu0 %1996
    %2000 = vset.pattern.permute.xlu0 2
    %2001 = vperm.xlu0 %2000, %v1947
    %v2002 = vpop.permute.xlu0 %2001
    %2005 = vset.pattern.permute.xlu0 2
    %2006 = vperm.xlu0 %2005, %v1948
    %v2007 = vpop.permute.xlu0 %2006
    %2010 = vset.pattern.permute.xlu0 2
    %2011 = vperm.xlu0 %2010, %v1949
    %v2012 = vpop.permute.xlu0 %2011
    %2015 = vset.pattern.permute.xlu0 2
    %2016 = vperm.xlu0 %2015, %v1950
    %v2017 = vpop.permute.xlu0 %2016
    %2020 = vset.pattern.permute.xlu0 2
    %2021 = vperm.xlu0 %2020, %v1951
    %v2022 = vpop.permute.xlu0 %2021
    %v2024 = vmul.f32 %v1987, %v1976
    %v2025 = vmul.f32 %v1992, %v1977
    %v2026 = vmul.f32 %v1997, %v1978
    %v2027 = vmul.f32 %v2002, %v1979
    %v2028 = vmul.f32 %v2007, %v1980
    %v2029 = vmul.f32 %v2012, %v1981
    %v2030 = vmul.f32 %v2017, %v1982
    %v2031 = vmul.f32 %v2022, %v1983
    %2032 = vset.pattern.permute.xlu0 3
    %2033 = vperm.xlu0 %2032, %v1944
    %v2034 = vpop.permute.xlu0 %2033
    %2036 = vset.pattern.permute.xlu0 3
    %2037 = vperm.xlu0 %2036, %v1945
    %v2038 = vpop.permute.xlu0 %2037
    %2040 = vset.pattern.permute.xlu0 3
    %2041 = vperm.xlu0 %2040, %v1946
    %v2042 = vpop.permute.xlu0 %2041
    %2044 = vset.pattern.permute.xlu0 3
    %2045 = vperm.xlu0 %2044, %v1947
    %v2046 = vpop.permute.xlu0 %2045
    %2048 = vset.pattern.permute.xlu0 3
    %2049 = vperm.xlu0 %2048, %v1948
    %v2050 = vpop.permute.xlu0 %2049
    %2052 = vset.pattern.permute.xlu0 3
    %2053 = vperm.xlu0 %2052, %v1949
    %v2054 = vpop.permute.xlu0 %2053
    %2056 = vset.pattern.permute.xlu0 3
    %2057 = vperm.xlu0 %2056, %v1950
    %v2058 = vpop.permute.xlu0 %2057
    %2060 = vset.pattern.permute.xlu0 3
    %2061 = vperm.xlu0 %2060, %v1951
    %v2062 = vpop.permute.xlu0 %2061
    %v2064 = vmul.f32 %v2034, %v1968
    %v2065 = vmul.f32 %v2038, %v1969
    %v2066 = vmul.f32 %v2042, %v1970
    %v2067 = vmul.f32 %v2046, %v1971
    %v2068 = vmul.f32 %v2050, %v1972
    %v2069 = vmul.f32 %v2054, %v1973
    %v2070 = vmul.f32 %v2058, %v1974
    %v2071 = vmul.f32 %v2062, %v1975
    %v2072 = vsub.f32 %v2024, %v2064
    %v2073 = vsub.f32 %v2025, %v2065
    %v2074 = vsub.f32 %v2026, %v2066
    %v2075 = vsub.f32 %v2027, %v2067
    %v2076 = vsub.f32 %v2028, %v2068
    %v2077 = vsub.f32 %v2029, %v2069
    %v2078 = vsub.f32 %v2030, %v2070
    %v2079 = vsub.f32 %v2031, %v2071
    %v2080 = vmul.f32 %v2034, %v1960
    %v2081 = vmul.f32 %v2038, %v1961
    %v2082 = vmul.f32 %v2042, %v1962
    %v2083 = vmul.f32 %v2046, %v1963
    %v2084 = vmul.f32 %v2050, %v1964
    %v2085 = vmul.f32 %v2054, %v1965
    %v2086 = vmul.f32 %v2058, %v1966
    %v2087 = vmul.f32 %v2062, %v1967
    %2088 = vset.pattern.permute.xlu0 1
    %2089 = vperm.xlu0 %2088, %v1944
    %v2090 = vpop.permute.xlu0 %2089
    %2092 = vset.pattern.permute.xlu0 1
    %2093 = vperm.xlu0 %2092, %v1945
    %v2094 = vpop.permute.xlu0 %2093
    %2096 = vset.pattern.permute.xlu0 1
    %2097 = vperm.xlu0 %2096, %v1946
    %v2098 = vpop.permute.xlu0 %2097
    %2100 = vset.pattern.permute.xlu0 1
    %2101 = vperm.xlu0 %2100, %v1947
    %v2102 = vpop.permute.xlu0 %2101
    %2104 = vset.pattern.permute.xlu0 1
    %2105 = vperm.xlu0 %2104, %v1948
    %v2106 = vpop.permute.xlu0 %2105
    %2108 = vset.pattern.permute.xlu0 1
    %2109 = vperm.xlu0 %2108, %v1949
    %v2110 = vpop.permute.xlu0 %2109
    %2112 = vset.pattern.permute.xlu0 1
    %2113 = vperm.xlu0 %2112, %v1950
    %v2114 = vpop.permute.xlu0 %2113
    %2116 = vset.pattern.permute.xlu0 1
    %2117 = vperm.xlu0 %2116, %v1951
    %v2118 = vpop.permute.xlu0 %2117
    %v2120 = vmul.f32 %v2090, %v1976
    %v2121 = vmul.f32 %v2094, %v1977
    %v2122 = vmul.f32 %v2098, %v1978
    %v2123 = vmul.f32 %v2102, %v1979
    %v2124 = vmul.f32 %v2106, %v1980
    %v2125 = vmul.f32 %v2110, %v1981
    %v2126 = vmul.f32 %v2114, %v1982
    %v2127 = vmul.f32 %v2118, %v1983
    %v2128 = vsub.f32 %v2080, %v2120
    %v2129 = vsub.f32 %v2081, %v2121
    %v2130 = vsub.f32 %v2082, %v2122
    %v2131 = vsub.f32 %v2083, %v2123
    %v2132 = vsub.f32 %v2084, %v2124
    %v2133 = vsub.f32 %v2085, %v2125
    %v2134 = vsub.f32 %v2086, %v2126
    %v2135 = vsub.f32 %v2087, %v2127
    %v2136 = vmul.f32 %v2090, %v1968
    %v2137 = vmul.f32 %v2094, %v1969
    %v2138 = vmul.f32 %v2098, %v1970
    %v2139 = vmul.f32 %v2102, %v1971
    %v2140 = vmul.f32 %v2106, %v1972
    %v2141 = vmul.f32 %v2110, %v1973
    %v2142 = vmul.f32 %v2114, %v1974
    %v2143 = vmul.f32 %v2118, %v1975
    %v2144 = vmul.f32 %v1987, %v1960
    %v2145 = vmul.f32 %v1992, %v1961
    %v2146 = vmul.f32 %v1997, %v1962
    %v2147 = vmul.f32 %v2002, %v1963
    %v2148 = vmul.f32 %v2007, %v1964
    %v2149 = vmul.f32 %v2012, %v1965
    %v2150 = vmul.f32 %v2017, %v1966
    %v2151 = vmul.f32 %v2022, %v1967
    %v2152 = vsub.f32 %v2136, %v2144
    %v2153 = vsub.f32 %v2137, %v2145
    %v2154 = vsub.f32 %v2138, %v2146
    %v2155 = vsub.f32 %v2139, %v2147
    %v2156 = vsub.f32 %v2140, %v2148
    %v2157 = vsub.f32 %v2141, %v2149
    %v2158 = vsub.f32 %v2142, %v2150
    %v2159 = vsub.f32 %v2143, %v2151
    %v2160 = vmul.f32 %v1987, %v2152
    %v2161 = vmul.f32 %v1992, %v2153
    %v2162 = vmul.f32 %v1997, %v2154
    %v2163 = vmul.f32 %v2002, %v2155
    %v2164 = vmul.f32 %v2007, %v2156
    %v2165 = vmul.f32 %v2012, %v2157
    %v2166 = vmul.f32 %v2017, %v2158
    %v2167 = vmul.f32 %v2022, %v2159
    %v2168 = vmul.f32 %v2034, %v2128
    %v2169 = vmul.f32 %v2038, %v2129
    %v2170 = vmul.f32 %v2042, %v2130
    %v2171 = vmul.f32 %v2046, %v2131
    %v2172 = vmul.f32 %v2050, %v2132
    %v2173 = vmul.f32 %v2054, %v2133
    %v2174 = vmul.f32 %v2058, %v2134
    %v2175 = vmul.f32 %v2062, %v2135
    %v2176 = vsub.f32 %v2160, %v2168
    %v2177 = vsub.f32 %v2161, %v2169
    %v2178 = vsub.f32 %v2162, %v2170
    %v2179 = vsub.f32 %v2163, %v2171
    %v2180 = vsub.f32 %v2164, %v2172
    %v2181 = vsub.f32 %v2165, %v2173
    %v2182 = vsub.f32 %v2166, %v2174
    %v2183 = vsub.f32 %v2167, %v2175
    %v2184 = vmul.f32 %v2034, %v2072
    %v2185 = vmul.f32 %v2038, %v2073
    %v2186 = vmul.f32 %v2042, %v2074
    %v2187 = vmul.f32 %v2046, %v2075
    %v2188 = vmul.f32 %v2050, %v2076
    %v2189 = vmul.f32 %v2054, %v2077
    %v2190 = vmul.f32 %v2058, %v2078
    %v2191 = vmul.f32 %v2062, %v2079
    %v2192 = vmul.f32 %v2090, %v2152
    %v2193 = vmul.f32 %v2094, %v2153
    %v2194 = vmul.f32 %v2098, %v2154
    %v2195 = vmul.f32 %v2102, %v2155
    %v2196 = vmul.f32 %v2106, %v2156
    %v2197 = vmul.f32 %v2110, %v2157
    %v2198 = vmul.f32 %v2114, %v2158
    %v2199 = vmul.f32 %v2118, %v2159
    %v2200 = vsub.f32 %v2184, %v2192
    %v2201 = vsub.f32 %v2185, %v2193
    %v2202 = vsub.f32 %v2186, %v2194
    %v2203 = vsub.f32 %v2187, %v2195
    %v2204 = vsub.f32 %v2188, %v2196
    %v2205 = vsub.f32 %v2189, %v2197
    %v2206 = vsub.f32 %v2190, %v2198
    %v2207 = vsub.f32 %v2191, %v2199
    %v2208 = vmul.f32 %v2090, %v2128
    %v2209 = vmul.f32 %v2094, %v2129
    %v2210 = vmul.f32 %v2098, %v2130
    %v2211 = vmul.f32 %v2102, %v2131
    %v2212 = vmul.f32 %v2106, %v2132
    %v2213 = vmul.f32 %v2110, %v2133
    %v2214 = vmul.f32 %v2114, %v2134
    %v2215 = vmul.f32 %v2118, %v2135
    %v2216 = vmul.f32 %v1987, %v2072
    %v2217 = vmul.f32 %v1992, %v2073
    %v2218 = vmul.f32 %v1997, %v2074
    %v2219 = vmul.f32 %v2002, %v2075
    %v2220 = vmul.f32 %v2007, %v2076
    %v2221 = vmul.f32 %v2012, %v2077
    %v2222 = vmul.f32 %v2017, %v2078
    %v2223 = vmul.f32 %v2022, %v2079
    %v2224 = vsub.f32 %v2208, %v2216
    %v2225 = vsub.f32 %v2209, %v2217
    %v2226 = vsub.f32 %v2210, %v2218
    %v2227 = vsub.f32 %v2211, %v2219
    %v2228 = vsub.f32 %v2212, %v2220
    %v2229 = vsub.f32 %v2213, %v2221
    %v2230 = vsub.f32 %v2214, %v2222
    %v2231 = vsub.f32 %v2215, %v2223
    %2232 = vset.pattern.permute.xlu0 0
    %2233 = vperm.xlu0 %2232, %v1944
    %v2234 = vpop.permute.xlu0 %2233
    %2236 = vset.pattern.permute.xlu0 0
    %2237 = vperm.xlu0 %2236, %v1945
    %v2238 = vpop.permute.xlu0 %2237
    %2240 = vset.pattern.permute.xlu0 0
    %2241 = vperm.xlu0 %2240, %v1946
    %v2242 = vpop.permute.xlu0 %2241
    %2244 = vset.pattern.permute.xlu0 0
    %2245 = vperm.xlu0 %2244, %v1947
    %v2246 = vpop.permute.xlu0 %2245
    %2248 = vset.pattern.permute.xlu0 0
    %2249 = vperm.xlu0 %2248, %v1948
    %v2250 = vpop.permute.xlu0 %2249
    %2252 = vset.pattern.permute.xlu0 0
    %2253 = vperm.xlu0 %2252, %v1949
    %v2254 = vpop.permute.xlu0 %2253
    %2256 = vset.pattern.permute.xlu0 0
    %2257 = vperm.xlu0 %2256, %v1950
    %v2258 = vpop.permute.xlu0 %2257
    %2260 = vset.pattern.permute.xlu0 0
    %2261 = vperm.xlu0 %2260, %v1951
    %v2262 = vpop.permute.xlu0 %2261
    %v2264 = vmul.f32 %v2234, %v2072
    %v2265 = vmul.f32 %v2238, %v2073
    %v2266 = vmul.f32 %v2242, %v2074
    %v2267 = vmul.f32 %v2246, %v2075
    %v2268 = vmul.f32 %v2250, %v2076
    %v2269 = vmul.f32 %v2254, %v2077
    %v2270 = vmul.f32 %v2258, %v2078
    %v2271 = vmul.f32 %v2262, %v2079
    %v2272 = vadd.f32 %v2264, %v2176
    %v2273 = vadd.f32 %v2265, %v2177
    %v2274 = vadd.f32 %v2266, %v2178
    %v2275 = vadd.f32 %v2267, %v2179
    %v2276 = vadd.f32 %v2268, %v2180
    %v2277 = vadd.f32 %v2269, %v2181
    %v2278 = vadd.f32 %v2270, %v2182
    %v2279 = vadd.f32 %v2271, %v2183
    %v2280 = vmul.f32 %v2272, 2.0
    %v2281 = vmul.f32 %v2273, 2.0
    %v2282 = vmul.f32 %v2274, 2.0
    %v2283 = vmul.f32 %v2275, 2.0
    %v2284 = vmul.f32 %v2276, 2.0
    %v2285 = vmul.f32 %v2277, 2.0
    %v2286 = vmul.f32 %v2278, 2.0
    %v2287 = vmul.f32 %v2279, 2.0
    %v2288 = vadd.f32 %v1960, %v2280
    %v2289 = vadd.f32 %v1961, %v2281
    %v2290 = vadd.f32 %v1962, %v2282
    %v2291 = vadd.f32 %v1963, %v2283
    %v2292 = vadd.f32 %v1964, %v2284
    %v2293 = vadd.f32 %v1965, %v2285
    %v2294 = vadd.f32 %v1966, %v2286
    %v2295 = vadd.f32 %v1967, %v2287
    %2304 = vrot.lane.b32.xlu0 %v2288, 4
    %v2305 = vpop.permute.xlu0 %2304
    %2306 = vrot.lane.b32.xlu0 %v2289, 4
    %v2307 = vpop.permute.xlu0 %2306
    %2308 = vrot.lane.b32.xlu0 %v2290, 4
    %v2309 = vpop.permute.xlu0 %2308
    %2310 = vrot.lane.b32.xlu0 %v2291, 4
    %v2311 = vpop.permute.xlu0 %2310
    %2312 = vrot.lane.b32.xlu0 %v2292, 4
    %v2313 = vpop.permute.xlu0 %2312
    %2314 = vrot.lane.b32.xlu0 %v2293, 4
    %v2315 = vpop.permute.xlu0 %2314
    %2316 = vrot.lane.b32.xlu0 %v2294, 4
    %v2317 = vpop.permute.xlu0 %2316
    %2318 = vrot.lane.b32.xlu0 %v2295, 4
    %v2319 = vpop.permute.xlu0 %2318
    %vm2328 = vcmask 64544
    %2329 = vst.msk [vmem:[%s17] sm:$0xff] %vm2328, %v2305
    %2330 = vst.msk [vmem:[%s17 + $0x8] sm:$0xff] %vm2328, %v2307
    %2331 = vst.msk [vmem:[%s17 + $0x10] sm:$0xff] %vm2328, %v2309
    %2332 = vst.msk [vmem:[%s17 + $0x18] sm:$0xff] %vm2328, %v2311
    %2333 = vst.msk [vmem:[%s17 + $0x20] sm:$0xff] %vm2328, %v2313
    %2334 = vst.msk [vmem:[%s17 + $0x28] sm:$0xff] %vm2328, %v2315
    %2335 = vst.msk [vmem:[%s17 + $0x30] sm:$0xff] %vm2328, %v2317
    %2336 = vst.msk [vmem:[%s17 + $0x38] sm:$0xff] %vm2328, %v2319
    %v2337 = vmul.f32 %v2234, %v2128
    %v2338 = vmul.f32 %v2238, %v2129
    %v2339 = vmul.f32 %v2242, %v2130
    %v2340 = vmul.f32 %v2246, %v2131
    %v2341 = vmul.f32 %v2250, %v2132
    %v2342 = vmul.f32 %v2254, %v2133
    %v2343 = vmul.f32 %v2258, %v2134
    %v2344 = vmul.f32 %v2262, %v2135
    %v2345 = vadd.f32 %v2337, %v2200
    %v2346 = vadd.f32 %v2338, %v2201
    %v2347 = vadd.f32 %v2339, %v2202
    %v2348 = vadd.f32 %v2340, %v2203
    %v2349 = vadd.f32 %v2341, %v2204
    %v2350 = vadd.f32 %v2342, %v2205
    %v2351 = vadd.f32 %v2343, %v2206
    %v2352 = vadd.f32 %v2344, %v2207
    %v2353 = vmul.f32 %v2345, 2.0
    %v2354 = vmul.f32 %v2346, 2.0
    %v2355 = vmul.f32 %v2347, 2.0
    %v2356 = vmul.f32 %v2348, 2.0
    %v2357 = vmul.f32 %v2349, 2.0
    %v2358 = vmul.f32 %v2350, 2.0
    %v2359 = vmul.f32 %v2351, 2.0
    %v2360 = vmul.f32 %v2352, 2.0
    %v2361 = vadd.f32 %v1968, %v2353
    %v2362 = vadd.f32 %v1969, %v2354
    %v2363 = vadd.f32 %v1970, %v2355
    %v2364 = vadd.f32 %v1971, %v2356
    %v2365 = vadd.f32 %v1972, %v2357
    %v2366 = vadd.f32 %v1973, %v2358
    %v2367 = vadd.f32 %v1974, %v2359
    %v2368 = vadd.f32 %v1975, %v2360
    %2377 = vrot.lane.b32.xlu0 %v2361, 8
    %v2378 = vpop.permute.xlu0 %2377
    %2379 = vrot.lane.b32.xlu0 %v2362, 8
    %v2380 = vpop.permute.xlu0 %2379
    %2381 = vrot.lane.b32.xlu0 %v2363, 8
    %v2382 = vpop.permute.xlu0 %2381
    %2383 = vrot.lane.b32.xlu0 %v2364, 8
    %v2384 = vpop.permute.xlu0 %2383
    %2385 = vrot.lane.b32.xlu0 %v2365, 8
    %v2386 = vpop.permute.xlu0 %2385
    %2387 = vrot.lane.b32.xlu0 %v2366, 8
    %v2388 = vpop.permute.xlu0 %2387
    %2389 = vrot.lane.b32.xlu0 %v2367, 8
    %v2390 = vpop.permute.xlu0 %2389
    %2391 = vrot.lane.b32.xlu0 %v2368, 8
    %v2392 = vpop.permute.xlu0 %2391
    %vm2401 = vcmask 97344
    %2402 = vst.msk [vmem:[%s17] sm:$0xff] %vm2401, %v2378
    %2403 = vst.msk [vmem:[%s17 + $0x8] sm:$0xff] %vm2401, %v2380
    %2404 = vst.msk [vmem:[%s17 + $0x10] sm:$0xff] %vm2401, %v2382
    %2405 = vst.msk [vmem:[%s17 + $0x18] sm:$0xff] %vm2401, %v2384
    %2406 = vst.msk [vmem:[%s17 + $0x20] sm:$0xff] %vm2401, %v2386
    %2407 = vst.msk [vmem:[%s17 + $0x28] sm:$0xff] %vm2401, %v2388
    %2408 = vst.msk [vmem:[%s17 + $0x30] sm:$0xff] %vm2401, %v2390
    %2409 = vst.msk [vmem:[%s17 + $0x38] sm:$0xff] %vm2401, %v2392
    %v2410 = vmul.f32 %v2234, %v2152
    %v2411 = vmul.f32 %v2238, %v2153
    %v2412 = vmul.f32 %v2242, %v2154
    %v2413 = vmul.f32 %v2246, %v2155
    %v2414 = vmul.f32 %v2250, %v2156
    %v2415 = vmul.f32 %v2254, %v2157
    %v2416 = vmul.f32 %v2258, %v2158
    %v2417 = vmul.f32 %v2262, %v2159
    %v2418 = vadd.f32 %v2410, %v2224
    %v2419 = vadd.f32 %v2411, %v2225
    %v2420 = vadd.f32 %v2412, %v2226
    %v2421 = vadd.f32 %v2413, %v2227
    %v2422 = vadd.f32 %v2414, %v2228
    %v2423 = vadd.f32 %v2415, %v2229
    %v2424 = vadd.f32 %v2416, %v2230
    %v2425 = vadd.f32 %v2417, %v2231
    %v2426 = vmul.f32 %v2418, 2.0
    %v2427 = vmul.f32 %v2419, 2.0
    %v2428 = vmul.f32 %v2420, 2.0
    %v2429 = vmul.f32 %v2421, 2.0
    %v2430 = vmul.f32 %v2422, 2.0
    %v2431 = vmul.f32 %v2423, 2.0
    %v2432 = vmul.f32 %v2424, 2.0
    %v2433 = vmul.f32 %v2425, 2.0
    %v2434 = vadd.f32 %v1976, %v2426
    %v2435 = vadd.f32 %v1977, %v2427
    %v2436 = vadd.f32 %v1978, %v2428
    %v2437 = vadd.f32 %v1979, %v2429
    %v2438 = vadd.f32 %v1980, %v2430
    %v2439 = vadd.f32 %v1981, %v2431
    %v2440 = vadd.f32 %v1982, %v2432
    %v2441 = vadd.f32 %v1983, %v2433
    %2450 = vrot.lane.b32.xlu0 %v2434, 12
    %v2451 = vpop.permute.xlu0 %2450
    %2452 = vrot.lane.b32.xlu0 %v2435, 12
    %v2453 = vpop.permute.xlu0 %2452
    %2454 = vrot.lane.b32.xlu0 %v2436, 12
    %v2455 = vpop.permute.xlu0 %2454
    %2456 = vrot.lane.b32.xlu0 %v2437, 12
    %v2457 = vpop.permute.xlu0 %2456
    %2458 = vrot.lane.b32.xlu0 %v2438, 12
    %v2459 = vpop.permute.xlu0 %2458
    %2460 = vrot.lane.b32.xlu0 %v2439, 12
    %v2461 = vpop.permute.xlu0 %2460
    %2462 = vrot.lane.b32.xlu0 %v2440, 12
    %v2463 = vpop.permute.xlu0 %2462
    %2464 = vrot.lane.b32.xlu0 %v2441, 12
    %v2465 = vpop.permute.xlu0 %2464
    %vm2474 = vcmask 130144
    %2475 = vst.msk [vmem:[%s17] sm:$0xff] %vm2474, %v2451
    %2476 = vst.msk [vmem:[%s17 + $0x8] sm:$0xff] %vm2474, %v2453
    %2477 = vst.msk [vmem:[%s17 + $0x10] sm:$0xff] %vm2474, %v2455
    %2478 = vst.msk [vmem:[%s17 + $0x18] sm:$0xff] %vm2474, %v2457
    %2479 = vst.msk [vmem:[%s17 + $0x20] sm:$0xff] %vm2474, %v2459
    %2480 = vst.msk [vmem:[%s17 + $0x28] sm:$0xff] %vm2474, %v2461
    %2481 = vst.msk [vmem:[%s17 + $0x30] sm:$0xff] %vm2474, %v2463
    %2482 = vst.msk [vmem:[%s17 + $0x38] sm:$0xff] %vm2474, %v2465
    // Predicated region
    $region82: #{tpu_custom_call.1} parent=1 // pred_check
      _
    $region83: #{tpu_custom_call.1} parent=1 // pred_check_branch
      %2484 = sbr.rel (0) target = $region85
    $region84: #{tpu_custom_call.1} parent=1 // pred_region
      _
    $region85: #{tpu_custom_call.1} parent=1 // pred_fallthru
      _
    // Predicated region
    $region86: #{tpu_custom_call.1} parent=1 // pred_check
      _
    $region87: #{tpu_custom_call.1} parent=1 // pred_check_branch
      %2486 = sbr.rel (0) target = $region89
    $region88: #{tpu_custom_call.1} parent=1 // pred_region
      _
    $region89: #{tpu_custom_call.1} parent=1 // pred_fallthru
      _
    %2487 = vsyncpa [#allocation5], 1
    %2488 = vsyncpa [#allocation7], 1

</llo_original>
